<compile_context>
chip_gen: v7x
topology: tpu7x:2x2x1
jax: 0.10.0
libtpu: 0.0.40
codegen_flags: <defaults>
</compile_context>

<pallas_src>
import functools

import jax
import jax.numpy as jnp
from jax.experimental import pallas as pl
from jax.experimental.pallas import tpu as pltpu


# ----------------------------------------------------------------------------
# Packed-weight slab layout (row offsets).  Built once; DMA'd as ONE buffer.
# ----------------------------------------------------------------------------
def _slab_layout(num_layers, v_pad, gs):
    offs = {}
    r = 0
    offs["table0"] = r; r += v_pad            # emb @ W_ih0^T + folded bias (gate-padded)
    offs["whh_0"] = r; r += gs                # W_hh0^T (gate-padded)
    for l in range(1, num_layers):
        offs[f"wih_{l}"] = r; r += gs
        offs[f"whh_{l}"] = r; r += gs
    for l in range(1, num_layers):
        offs[f"bi_{l}"] = r; r += 1           # b_ih_l + [b_hr_l, b_hz_l, 0] (gate-padded)
    for l in range(num_layers):
        offs[f"bhn_{l}"] = r; r += 1          # b_hn_l in lanes [0:H]
    n_rows = -(-r // 8) * 8                   # sublane-align the slab
    return offs, n_rows


def _expand_gate_cols(m, h, gs):
    """(rows, 3h) -> (rows, 3*gs): gate g moves from cols [g*h,(g+1)h) to [g*gs, g*gs+h)."""
    out = jnp.zeros((m.shape[0], 3 * gs), m.dtype)
    for g in range(3):
        out = out.at[:, g * gs:g * gs + h].set(m[:, g * h:(g + 1) * h])
    return out


# ----------------------------------------------------------------------------
# One-time parameter packing (hoisted out of the forward pass).
# ----------------------------------------------------------------------------
def prepare_encoder_params(params, num_layers, gate_stride=128):
    V, H = params["emb"].shape
    GS = gate_stride
    V_pad = -(-V // 128) * 128                       # lane-dense one-hot contraction dim
    offs, n_rows = _slab_layout(num_layers, V_pad, GS)
    slab = jnp.zeros((n_rows, 3 * GS), jnp.float32)

    def fold_bias(l):                                # b_ih + [b_hr, b_hz, 0]
        b_ih, b_hh = params[f"b_ih_{l}"], params[f"b_hh_{l}"]
        return b_ih + jnp.concatenate([b_hh[:2 * H], jnp.zeros((H,), b_hh.dtype)])

    # Layer 0: embedding + input projection + bias fused into one (V, 3H) table.
    table0 = params["emb"] @ params["w_ih_0"].T + fold_bias(0)[None, :]
    slab = slab.at[offs["table0"]:offs["table0"] + V, :].set(_expand_gate_cols(table0, H, GS))
    slab = slab.at[offs["whh_0"]:offs["whh_0"] + H, :].set(
        _expand_gate_cols(params["w_hh_0"].T, H, GS))

    for l in range(1, num_layers):
        slab = slab.at[offs[f"wih_{l}"]:offs[f"wih_{l}"] + H, :].set(
            _expand_gate_cols(params[f"w_ih_{l}"].T, H, GS))
        slab = slab.at[offs[f"whh_{l}"]:offs[f"whh_{l}"] + H, :].set(
            _expand_gate_cols(params[f"w_hh_{l}"].T, H, GS))
        slab = slab.at[offs[f"bi_{l}"], :].set(
            _expand_gate_cols(fold_bias(l)[None, :], H, GS)[0])
    for l in range(num_layers):
        slab = slab.at[offs[f"bhn_{l}"], :H].set(params[f"b_hh_{l}"][2 * H:])

    meta = dict(num_layers=num_layers, hidden=H, gate_stride=GS, vocab_pad=V_pad)
    return slab, meta


# ----------------------------------------------------------------------------
# Fused encoder kernel: embedding lookup + all layers + all time steps.
# PyTorch GRU packed gate order is [r, z, n]; gate slots are GS(=128)-lane wide.
# ----------------------------------------------------------------------------
def _make_encoder_kernel(seq_len, bb, num_layers, gate_stride, vocab_pad):
    S, BB, L, GS, VP = seq_len, bb, num_layers, gate_stride, vocab_pad
    offs, _ = _slab_layout(L, VP, GS)

    def kernel(ids_ref, slab_ref, out_ref):
        # ---- Fused embedding lookup + layer-0 hoisted input projection (one MXU matmul).
        ids = ids_ref[0]                                                  # (S*BB, 1) int32
        iota = jax.lax.broadcasted_iota(jnp.int32, (S * BB, VP), 1)
        onehot = (iota == ids).astype(jnp.float32)                        # (S*BB, VP)
        gi0 = jnp.dot(onehot, slab_ref[offs["table0"]:offs["table0"] + VP, :],
                      preferred_element_type=jnp.float32)                 # (S*BB, 3*GS)

        # Weight ref-views (zero-cost); loaded at their use sites.
        whh_v = [slab_ref.at[offs[f"whh_{l}"]:offs[f"whh_{l}"] + GS, :] for l in range(L)]
        wih_v = [None] + [slab_ref.at[offs[f"wih_{l}"]:offs[f"wih_{l}"] + GS, :]
                          for l in range(1, L)]
        bi = [None] + [slab_ref[offs[f"bi_{l}"]:offs[f"bi_{l}"] + 1, :] for l in range(1, L)]
        bhn = [slab_ref[offs[f"bhn_{l}"]:offs[f"bhn_{l}"] + 1, 0:GS] for l in range(L)]

        def gru_step(gi_t, h_prev, whh_view, bhn_l, first):
            if first:                              # h_prev == 0  =>  gh == 0, skip matmul
                rz = jax.nn.sigmoid(gi_t[:, 0:2 * GS])                    # fused r|z sigmoid
                n = jnp.tanh(gi_t[:, 2 * GS:] + rz[:, 0:GS] * bhn_l)
                return (1.0 - rz[:, GS:2 * GS]) * n
            gh = jnp.dot(h_prev, whh_view[...], preferred_element_type=jnp.float32)
            rz = jax.nn.sigmoid(gi_t[:, 0:2 * GS] + gh[:, 0:2 * GS])      # fused r|z sigmoid
            r, z = rz[:, 0:GS], rz[:, GS:2 * GS]
            n = jnp.tanh(gi_t[:, 2 * GS:] + r * (gh[:, 2 * GS:] + bhn_l))
            return (1.0 - z) * n + z * h_prev

        # Wavefront over time: layer l's step t is issued right after layer l-1's h_t,
        # so the statically-unrolled DAG lets the scheduler overlap the serial chains.
        h = [None] * L
        for t in range(S):
            h[0] = gru_step(gi0[t * BB:(t + 1) * BB, :], h[0], whh_v[0], bhn[0], t == 0)
            for l in range(1, L):
                gi_t = jnp.dot(h[l - 1], wih_v[l][...],
                               preferred_element_type=jnp.float32) + bi[l]
                h[l] = gru_step(gi_t, h[l], whh_v[l], bhn[l], t == 0)

        # Lane-dense (GS = 128) stores; only the final hidden of each layer hits HBM.
        for l in range(L):
            out_ref[0, l * BB:(l + 1) * BB, :] = h[l]

    return kernel


# ----------------------------------------------------------------------------
# Forward wrapper.  `batch_blocks=1` -> single fused invocation (v5e/v6e);
# `batch_blocks=2` -> parallel batch grid for the two v7x TensorCores.
# ----------------------------------------------------------------------------
def encoder_forward(slab, x, *, meta, batch_blocks=1):
    B, S = x.shape
    L, H = meta["num_layers"], meta["hidden"]
    GS, VP = meta["gate_stride"], meta["vocab_pad"]
    assert B % batch_blocks == 0
    BB = B // batch_blocks

    # Tiny int32 glue: ids time-major inside each batch block, shape (blocks, S*BB, 1).
    ids = x.reshape(batch_blocks, BB, S).transpose(0, 2, 1).reshape(batch_blocks, S * BB, 1)

    kernel = _make_encoder_kernel(S, BB, L, GS, VP)
    out = pl.pallas_call(
        kernel,
        out_shape=jax.ShapeDtypeStruct((batch_blocks, L * BB, GS), jnp.float32),
        grid=(batch_blocks,),
        in_specs=[
            pl.BlockSpec((1, S * BB, 1), lambda i: (i, 0, 0)),      # token ids
            pl.BlockSpec(slab.shape, lambda i: (0, 0)),             # packed weights (resident)
        ],
        out_specs=pl.BlockSpec((1, L * BB, GS), lambda i: (i, 0, 0)),
        compiler_params=pltpu.CompilerParams(dimension_semantics=("parallel",)),
    )(ids, slab)

    # (blocks, L*BB, GS) -> (L, B, H): trim lane padding + permute (tiny wrapper glue).
    out = out.reshape(batch_blocks, L, BB, GS)[:, :, :, :H]
    return jnp.transpose(out, (1, 0, 2, 3)).reshape(L, B, H)


# ----------------------------------------------------------------------------
# Pure-JAX reference (lax.scan) to validate kernel semantics.
# ----------------------------------------------------------------------------
def _gru_layer_ref(x_seq, w_ih, w_hh, b_ih, b_hh):
    H = x_seq.shape[-1]

    def step(h, x_t):
        gi = x_t @ w_ih.T + b_ih
        gh = h @ w_hh.T + b_hh
        r = jax.nn.sigmoid(gi[:, :H] + gh[:, :H])
        z = jax.nn.sigmoid(gi[:, H:2 * H] + gh[:, H:2 * H])
        n = jnp.tanh(gi[:, 2 * H:] + r * gh[:, 2 * H:])
        h_new = (1.0 - z) * n + z * h
        return h_new, h_new

    h0 = jnp.zeros((x_seq.shape[1], H), jnp.float32)
    _, outs = jax.lax.scan(step, h0, x_seq)
    return outs


def encoder_forward_ref(params, x, num_layers):
    emb = jnp.take(params["emb"], x, axis=0)
    seq = jnp.transpose(emb, (1, 0, 2))
    hs = []
    for l in range(num_layers):
        seq = _gru_layer_ref(seq,
                             params[f"w_ih_{l}"], params[f"w_hh_{l}"],
                             params[f"b_ih_{l}"], params[f"b_hh_{l}"])
        hs.append(seq[-1])
    return jnp.stack(hs, axis=0)


# ----------------------------------------------------------------------------
# Deterministic parameter init (shapes from nn.Embedding / nn.GRU __init__).
# ----------------------------------------------------------------------------
def init_params(key, num_vocab, hidden, num_layers):
    params = {}
    key, k_emb = jax.random.split(key)
    params["emb"] = jax.random.normal(k_emb, (num_vocab, hidden), jnp.float32)
    bound = 1.0 / jnp.sqrt(hidden)
    for l in range(num_layers):
        key, k1, k2, k3, k4 = jax.random.split(key, 5)
        params[f"w_ih_{l}"] = jax.random.uniform(
            k1, (3 * hidden, hidden), jnp.float32, -bound, bound)
        params[f"w_hh_{l}"] = jax.random.uniform(
            k2, (3 * hidden, hidden), jnp.float32, -bound, bound)
        params[f"b_ih_{l}"] = jax.random.uniform(
            k3, (3 * hidden,), jnp.float32, -bound, bound)
        params[f"b_hh_{l}"] = jax.random.uniform(
            k4, (3 * hidden,), jnp.float32, -bound, bound)
    return params


if __name__ == "__main__":
    NUM_VOCAB, HIDDEN, NUM_LAYERS = 50, 32, 2
    BATCH, SEQ = 2, 8

    key = jax.random.PRNGKey(0)
    key, k_params, k_x = jax.random.split(key, 3)
    params = init_params(k_params, NUM_VOCAB, HIDDEN, NUM_LAYERS)
    x = jax.random.randint(k_x, (BATCH, SEQ), 0, NUM_VOCAB, dtype=jnp.int32)

    # TODO(synk): the PackedSequence branch of forward() has no Pallas equivalent;
    # this implements the dense-tensor branch only.
    slab, meta = prepare_encoder_params(params, NUM_LAYERS)      # one-time weight packing
    slab = jax.block_until_ready(slab)

    ref = encoder_forward_ref(params, x, NUM_LAYERS)

    # Single fused invocation (best for single-TensorCore v5e/v6e).
    fwd1 = jax.jit(functools.partial(encoder_forward, meta=meta, batch_blocks=1))
    out1 = jax.block_until_ready(fwd1(slab, x))
    assert out1.shape == (NUM_LAYERS, BATCH, HIDDEN)
    assert jnp.allclose(out1, ref, atol=1e-5, rtol=1e-5)

    # Batch-parallel grid: shards the independent per-example recurrences across
    # TensorCores on v7x (on 1-TC chips it is just a 2-step serial grid).
    fwd2 = jax.jit(functools.partial(encoder_forward, meta=meta, batch_blocks=2))
    out2 = jax.block_until_ready(fwd2(slab, x))
    assert jnp.allclose(out2, ref, atol=1e-5, rtol=1e-5)

    print("KERNEL_OK")
</pallas_src>

<mosaic_0001>
module attributes {stable_mosaic.version = 11 : i64} {
  func.func @kernel(%arg0: i32, %arg1: memref<1x16x1xi32, #tpu.memory_space<vmem>>, %arg2: memref<520x384xf32, #tpu.memory_space<vmem>>, %arg3: memref<1x4x128xf32, #tpu.memory_space<vmem>>) attributes {dimension_semantics = [#tpu.dimension_semantics<parallel>], iteration_bounds = array<i64: 1>, scalar_prefetch = 0 : i64, scratch_operands = 0 : i64, tpu.core_type = #tpu.core_type<tc>, window_params = [{transform_indices = @transform_0, window_bounds = array<i64: 1, 16, 1>}, {pipeline_mode = #tpu.pipeline_mode<synchronous>, transform_indices = @transform_1, window_bounds = array<i64: 520, 384>}, {transform_indices = @transform_2, window_bounds = array<i64: 1, 4, 128>}]} {
    %c0 = arith.constant 0 : index
    %c0_0 = arith.constant 0 : index
    %c0_1 = arith.constant 0 : index
    %0 = vector.load %arg1[%c0, %c0_0, %c0_1] : memref<1x16x1xi32, #tpu.memory_space<vmem>>, vector<1x16x1xi32>
    %1 = vector.shape_cast %0 : vector<1x16x1xi32> to vector<16x1xi32>
    %2 = tpu.iota {dimensions = array<i32: 1>} : vector<16x128xi32>
    %3 = vector.broadcast %1 : vector<16x1xi32> to vector<16x128xi32>
    %4 = arith.cmpi eq, %2, %3 : vector<16x128xi32>
    %5 = arith.extui %4 : vector<16x128xi1> to vector<16x128xi32>
    %6 = arith.sitofp %5 : vector<16x128xi32> to vector<16x128xf32>
    %c0_2 = arith.constant 0 : index
    %c0_3 = arith.constant 0 : index
    %7 = vector.load %arg2[%c0_2, %c0_3] : memref<520x384xf32, #tpu.memory_space<vmem>>, vector<128x384xf32>
    %cst = arith.constant dense<0.000000e+00> : vector<16x384xf32>
    %8 = tpu.matmul %6, %7, %cst {dimension_numbers = #tpu.dot_dimension_numbers<[1], [0], [0], [1], [0, 0, 1, 1], [], []>} : vector<16x128xf32>, vector<128x384xf32>, vector<16x384xf32> -> vector<16x384xf32>
    %c512 = arith.constant 512 : index
    %c0_4 = arith.constant 0 : index
    %9 = vector.load %arg2[%c512, %c0_4] : memref<520x384xf32, #tpu.memory_space<vmem>>, vector<1x384xf32>
    %c513 = arith.constant 513 : index
    %c0_5 = arith.constant 0 : index
    %10 = vector.load %arg2[%c513, %c0_5] : memref<520x384xf32, #tpu.memory_space<vmem>>, vector<1x128xf32>
    %c514 = arith.constant 514 : index
    %c0_6 = arith.constant 0 : index
    %11 = vector.load %arg2[%c514, %c0_6] : memref<520x384xf32, #tpu.memory_space<vmem>>, vector<1x128xf32>
    %12 = vector.extract_strided_slice %8 {offsets = [0, 0], sizes = [2, 384], strides = [1, 1]} : vector<16x384xf32> to vector<2x384xf32>
    %13 = vector.extract_strided_slice %12 {offsets = [0, 0], sizes = [2, 256], strides = [1, 1]} : vector<2x384xf32> to vector<2x256xf32>
    %14 = arith.negf %13 : vector<2x256xf32>
    %15 = math.exp %14 : vector<2x256xf32>
    %cst_7 = arith.constant 1.000000e+00 : f32
    %16 = vector.broadcast %cst_7 : f32 to vector<2x256xf32>
    %17 = arith.addf %16, %15 : vector<2x256xf32>
    %18 = arith.divf %16, %17 : vector<2x256xf32>
    %19 = vector.extract_strided_slice %12 {offsets = [0, 256], sizes = [2, 128], strides = [1, 1]} : vector<2x384xf32> to vector<2x128xf32>
    %20 = vector.extract_strided_slice %18 {offsets = [0, 0], sizes = [2, 128], strides = [1, 1]} : vector<2x256xf32> to vector<2x128xf32>
    %21 = vector.broadcast %10 : vector<1x128xf32> to vector<2x128xf32>
    %22 = arith.mulf %20, %21 : vector<2x128xf32>
    %23 = arith.addf %19, %22 : vector<2x128xf32>
    %24 = math.tanh %23 : vector<2x128xf32>
    %25 = vector.extract_strided_slice %18 {offsets = [0, 128], sizes = [2, 128], strides = [1, 1]} : vector<2x256xf32> to vector<2x128xf32>
    %cst_8 = arith.constant 1.000000e+00 : f32
    %26 = vector.broadcast %cst_8 : f32 to vector<2x128xf32>
    %27 = arith.subf %26, %25 : vector<2x128xf32>
    %28 = arith.mulf %27, %24 : vector<2x128xf32>
    %c256 = arith.constant 256 : index
    %c0_9 = arith.constant 0 : index
    %29 = vector.load %arg2[%c256, %c0_9] : memref<520x384xf32, #tpu.memory_space<vmem>>, vector<128x384xf32>
    %cst_10 = arith.constant dense<0.000000e+00> : vector<2x384xf32>
    %30 = tpu.matmul %28, %29, %cst_10 {dimension_numbers = #tpu.dot_dimension_numbers<[1], [0], [0], [1], [0, 0, 1, 1], [], []>} : vector<2x128xf32>, vector<128x384xf32>, vector<2x384xf32> -> vector<2x384xf32>
    %31 = vector.broadcast %9 : vector<1x384xf32> to vector<2x384xf32>
    %32 = arith.addf %30, %31 : vector<2x384xf32>
    %33 = vector.extract_strided_slice %32 {offsets = [0, 0], sizes = [2, 256], strides = [1, 1]} : vector<2x384xf32> to vector<2x256xf32>
    %34 = arith.negf %33 : vector<2x256xf32>
    %35 = math.exp %34 : vector<2x256xf32>
    %cst_11 = arith.constant 1.000000e+00 : f32
    %36 = vector.broadcast %cst_11 : f32 to vector<2x256xf32>
    %37 = arith.addf %36, %35 : vector<2x256xf32>
    %38 = arith.divf %36, %37 : vector<2x256xf32>
    %39 = vector.extract_strided_slice %32 {offsets = [0, 256], sizes = [2, 128], strides = [1, 1]} : vector<2x384xf32> to vector<2x128xf32>
    %40 = vector.extract_strided_slice %38 {offsets = [0, 0], sizes = [2, 128], strides = [1, 1]} : vector<2x256xf32> to vector<2x128xf32>
    %41 = vector.broadcast %11 : vector<1x128xf32> to vector<2x128xf32>
    %42 = arith.mulf %40, %41 : vector<2x128xf32>
    %43 = arith.addf %39, %42 : vector<2x128xf32>
    %44 = math.tanh %43 : vector<2x128xf32>
    %45 = vector.extract_strided_slice %38 {offsets = [0, 128], sizes = [2, 128], strides = [1, 1]} : vector<2x256xf32> to vector<2x128xf32>
    %cst_12 = arith.constant 1.000000e+00 : f32
    %46 = vector.broadcast %cst_12 : f32 to vector<2x128xf32>
    %47 = arith.subf %46, %45 : vector<2x128xf32>
    %48 = arith.mulf %47, %44 : vector<2x128xf32>
    %49 = vector.extract_strided_slice %8 {offsets = [2, 0], sizes = [2, 384], strides = [1, 1]} : vector<16x384xf32> to vector<2x384xf32>
    %c128 = arith.constant 128 : index
    %c0_13 = arith.constant 0 : index
    %50 = vector.load %arg2[%c128, %c0_13] : memref<520x384xf32, #tpu.memory_space<vmem>>, vector<128x384xf32>
    %cst_14 = arith.constant dense<0.000000e+00> : vector<2x384xf32>
    %51 = tpu.matmul %28, %50, %cst_14 {dimension_numbers = #tpu.dot_dimension_numbers<[1], [0], [0], [1], [0, 0, 1, 1], [], []>} : vector<2x128xf32>, vector<128x384xf32>, vector<2x384xf32> -> vector<2x384xf32>
    %52 = vector.extract_strided_slice %49 {offsets = [0, 0], sizes = [2, 256], strides = [1, 1]} : vector<2x384xf32> to vector<2x256xf32>
    %53 = vector.extract_strided_slice %51 {offsets = [0, 0], sizes = [2, 256], strides = [1, 1]} : vector<2x384xf32> to vector<2x256xf32>
    %54 = arith.addf %52, %53 : vector<2x256xf32>
    %55 = arith.negf %54 : vector<2x256xf32>
    %56 = math.exp %55 : vector<2x256xf32>
    %cst_15 = arith.constant 1.000000e+00 : f32
    %57 = vector.broadcast %cst_15 : f32 to vector<2x256xf32>
    %58 = arith.addf %57, %56 : vector<2x256xf32>
    %59 = arith.divf %57, %58 : vector<2x256xf32>
    %60 = vector.extract_strided_slice %59 {offsets = [0, 0], sizes = [2, 128], strides = [1, 1]} : vector<2x256xf32> to vector<2x128xf32>
    %61 = vector.extract_strided_slice %59 {offsets = [0, 128], sizes = [2, 128], strides = [1, 1]} : vector<2x256xf32> to vector<2x128xf32>
    %62 = vector.extract_strided_slice %49 {offsets = [0, 256], sizes = [2, 128], strides = [1, 1]} : vector<2x384xf32> to vector<2x128xf32>
    %63 = vector.extract_strided_slice %51 {offsets = [0, 256], sizes = [2, 128], strides = [1, 1]} : vector<2x384xf32> to vector<2x128xf32>
    %64 = vector.broadcast %10 : vector<1x128xf32> to vector<2x128xf32>
    %65 = arith.addf %63, %64 : vector<2x128xf32>
    %66 = arith.mulf %60, %65 : vector<2x128xf32>
    %67 = arith.addf %62, %66 : vector<2x128xf32>
    %68 = math.tanh %67 : vector<2x128xf32>
    %cst_16 = arith.constant 1.000000e+00 : f32
    %69 = vector.broadcast %cst_16 : f32 to vector<2x128xf32>
    %70 = arith.subf %69, %61 : vector<2x128xf32>
    %71 = arith.mulf %70, %68 : vector<2x128xf32>
    %72 = arith.mulf %61, %28 : vector<2x128xf32>
    %73 = arith.addf %71, %72 : vector<2x128xf32>
    %c256_17 = arith.constant 256 : index
    %c0_18 = arith.constant 0 : index
    %74 = vector.load %arg2[%c256_17, %c0_18] : memref<520x384xf32, #tpu.memory_space<vmem>>, vector<128x384xf32>
    %cst_19 = arith.constant dense<0.000000e+00> : vector<2x384xf32>
    %75 = tpu.matmul %73, %74, %cst_19 {dimension_numbers = #tpu.dot_dimension_numbers<[1], [0], [0], [1], [0, 0, 1, 1], [], []>} : vector<2x128xf32>, vector<128x384xf32>, vector<2x384xf32> -> vector<2x384xf32>
    %76 = vector.broadcast %9 : vector<1x384xf32> to vector<2x384xf32>
    %77 = arith.addf %75, %76 : vector<2x384xf32>
    %c384 = arith.constant 384 : index
    %c0_20 = arith.constant 0 : index
    %78 = vector.load %arg2[%c384, %c0_20] : memref<520x384xf32, #tpu.memory_space<vmem>>, vector<128x384xf32>
    %cst_21 = arith.constant dense<0.000000e+00> : vector<2x384xf32>
    %79 = tpu.matmul %48, %78, %cst_21 {dimension_numbers = #tpu.dot_dimension_numbers<[1], [0], [0], [1], [0, 0, 1, 1], [], []>} : vector<2x128xf32>, vector<128x384xf32>, vector<2x384xf32> -> vector<2x384xf32>
    %80 = vector.extract_strided_slice %77 {offsets = [0, 0], sizes = [2, 256], strides = [1, 1]} : vector<2x384xf32> to vector<2x256xf32>
    %81 = vector.extract_strided_slice %79 {offsets = [0, 0], sizes = [2, 256], strides = [1, 1]} : vector<2x384xf32> to vector<2x256xf32>
    %82 = arith.addf %80, %81 : vector<2x256xf32>
    %83 = arith.negf %82 : vector<2x256xf32>
    %84 = math.exp %83 : vector<2x256xf32>
    %cst_22 = arith.constant 1.000000e+00 : f32
    %85 = vector.broadcast %cst_22 : f32 to vector<2x256xf32>
    %86 = arith.addf %85, %84 : vector<2x256xf32>
    %87 = arith.divf %85, %86 : vector<2x256xf32>
    %88 = vector.extract_strided_slice %87 {offsets = [0, 0], sizes = [2, 128], strides = [1, 1]} : vector<2x256xf32> to vector<2x128xf32>
    %89 = vector.extract_strided_slice %87 {offsets = [0, 128], sizes = [2, 128], strides = [1, 1]} : vector<2x256xf32> to vector<2x128xf32>
    %90 = vector.extract_strided_slice %77 {offsets = [0, 256], sizes = [2, 128], strides = [1, 1]} : vector<2x384xf32> to vector<2x128xf32>
    %91 = vector.extract_strided_slice %79 {offsets = [0, 256], sizes = [2, 128], strides = [1, 1]} : vector<2x384xf32> to vector<2x128xf32>
    %92 = vector.broadcast %11 : vector<1x128xf32> to vector<2x128xf32>
    %93 = arith.addf %91, %92 : vector<2x128xf32>
    %94 = arith.mulf %88, %93 : vector<2x128xf32>
    %95 = arith.addf %90, %94 : vector<2x128xf32>
    %96 = math.tanh %95 : vector<2x128xf32>
    %cst_23 = arith.constant 1.000000e+00 : f32
    %97 = vector.broadcast %cst_23 : f32 to vector<2x128xf32>
    %98 = arith.subf %97, %89 : vector<2x128xf32>
    %99 = arith.mulf %98, %96 : vector<2x128xf32>
    %100 = arith.mulf %89, %48 : vector<2x128xf32>
    %101 = arith.addf %99, %100 : vector<2x128xf32>
    %102 = vector.extract_strided_slice %8 {offsets = [4, 0], sizes = [2, 384], strides = [1, 1]} : vector<16x384xf32> to vector<2x384xf32>
    %c128_24 = arith.constant 128 : index
    %c0_25 = arith.constant 0 : index
    %103 = vector.load %arg2[%c128_24, %c0_25] : memref<520x384xf32, #tpu.memory_space<vmem>>, vector<128x384xf32>
    %cst_26 = arith.constant dense<0.000000e+00> : vector<2x384xf32>
    %104 = tpu.matmul %73, %103, %cst_26 {dimension_numbers = #tpu.dot_dimension_numbers<[1], [0], [0], [1], [0, 0, 1, 1], [], []>} : vector<2x128xf32>, vector<128x384xf32>, vector<2x384xf32> -> vector<2x384xf32>
    %105 = vector.extract_strided_slice %102 {offsets = [0, 0], sizes = [2, 256], strides = [1, 1]} : vector<2x384xf32> to vector<2x256xf32>
    %106 = vector.extract_strided_slice %104 {offsets = [0, 0], sizes = [2, 256], strides = [1, 1]} : vector<2x384xf32> to vector<2x256xf32>
    %107 = arith.addf %105, %106 : vector<2x256xf32>
    %108 = arith.negf %107 : vector<2x256xf32>
    %109 = math.exp %108 : vector<2x256xf32>
    %cst_27 = arith.constant 1.000000e+00 : f32
    %110 = vector.broadcast %cst_27 : f32 to vector<2x256xf32>
    %111 = arith.addf %110, %109 : vector<2x256xf32>
    %112 = arith.divf %110, %111 : vector<2x256xf32>
    %113 = vector.extract_strided_slice %112 {offsets = [0, 0], sizes = [2, 128], strides = [1, 1]} : vector<2x256xf32> to vector<2x128xf32>
    %114 = vector.extract_strided_slice %112 {offsets = [0, 128], sizes = [2, 128], strides = [1, 1]} : vector<2x256xf32> to vector<2x128xf32>
    %115 = vector.extract_strided_slice %102 {offsets = [0, 256], sizes = [2, 128], strides = [1, 1]} : vector<2x384xf32> to vector<2x128xf32>
    %116 = vector.extract_strided_slice %104 {offsets = [0, 256], sizes = [2, 128], strides = [1, 1]} : vector<2x384xf32> to vector<2x128xf32>
    %117 = vector.broadcast %10 : vector<1x128xf32> to vector<2x128xf32>
    %118 = arith.addf %116, %117 : vector<2x128xf32>
    %119 = arith.mulf %113, %118 : vector<2x128xf32>
    %120 = arith.addf %115, %119 : vector<2x128xf32>
    %121 = math.tanh %120 : vector<2x128xf32>
    %cst_28 = arith.constant 1.000000e+00 : f32
    %122 = vector.broadcast %cst_28 : f32 to vector<2x128xf32>
    %123 = arith.subf %122, %114 : vector<2x128xf32>
    %124 = arith.mulf %123, %121 : vector<2x128xf32>
    %125 = arith.mulf %114, %73 : vector<2x128xf32>
    %126 = arith.addf %124, %125 : vector<2x128xf32>
    %c256_29 = arith.constant 256 : index
    %c0_30 = arith.constant 0 : index
    %127 = vector.load %arg2[%c256_29, %c0_30] : memref<520x384xf32, #tpu.memory_space<vmem>>, vector<128x384xf32>
    %cst_31 = arith.constant dense<0.000000e+00> : vector<2x384xf32>
    %128 = tpu.matmul %126, %127, %cst_31 {dimension_numbers = #tpu.dot_dimension_numbers<[1], [0], [0], [1], [0, 0, 1, 1], [], []>} : vector<2x128xf32>, vector<128x384xf32>, vector<2x384xf32> -> vector<2x384xf32>
    %129 = vector.broadcast %9 : vector<1x384xf32> to vector<2x384xf32>
    %130 = arith.addf %128, %129 : vector<2x384xf32>
    %c384_32 = arith.constant 384 : index
    %c0_33 = arith.constant 0 : index
    %131 = vector.load %arg2[%c384_32, %c0_33] : memref<520x384xf32, #tpu.memory_space<vmem>>, vector<128x384xf32>
    %cst_34 = arith.constant dense<0.000000e+00> : vector<2x384xf32>
    %132 = tpu.matmul %101, %131, %cst_34 {dimension_numbers = #tpu.dot_dimension_numbers<[1], [0], [0], [1], [0, 0, 1, 1], [], []>} : vector<2x128xf32>, vector<128x384xf32>, vector<2x384xf32> -> vector<2x384xf32>
    %133 = vector.extract_strided_slice %130 {offsets = [0, 0], sizes = [2, 256], strides = [1, 1]} : vector<2x384xf32> to vector<2x256xf32>
    %134 = vector.extract_strided_slice %132 {offsets = [0, 0], sizes = [2, 256], strides = [1, 1]} : vector<2x384xf32> to vector<2x256xf32>
    %135 = arith.addf %133, %134 : vector<2x256xf32>
    %136 = arith.negf %135 : vector<2x256xf32>
    %137 = math.exp %136 : vector<2x256xf32>
    %cst_35 = arith.constant 1.000000e+00 : f32
    %138 = vector.broadcast %cst_35 : f32 to vector<2x256xf32>
    %139 = arith.addf %138, %137 : vector<2x256xf32>
    %140 = arith.divf %138, %139 : vector<2x256xf32>
    %141 = vector.extract_strided_slice %140 {offsets = [0, 0], sizes = [2, 128], strides = [1, 1]} : vector<2x256xf32> to vector<2x128xf32>
    %142 = vector.extract_strided_slice %140 {offsets = [0, 128], sizes = [2, 128], strides = [1, 1]} : vector<2x256xf32> to vector<2x128xf32>
    %143 = vector.extract_strided_slice %130 {offsets = [0, 256], sizes = [2, 128], strides = [1, 1]} : vector<2x384xf32> to vector<2x128xf32>
    %144 = vector.extract_strided_slice %132 {offsets = [0, 256], sizes = [2, 128], strides = [1, 1]} : vector<2x384xf32> to vector<2x128xf32>
    %145 = vector.broadcast %11 : vector<1x128xf32> to vector<2x128xf32>
    %146 = arith.addf %144, %145 : vector<2x128xf32>
    %147 = arith.mulf %141, %146 : vector<2x128xf32>
    %148 = arith.addf %143, %147 : vector<2x128xf32>
    %149 = math.tanh %148 : vector<2x128xf32>
    %cst_36 = arith.constant 1.000000e+00 : f32
    %150 = vector.broadcast %cst_36 : f32 to vector<2x128xf32>
    %151 = arith.subf %150, %142 : vector<2x128xf32>
    %152 = arith.mulf %151, %149 : vector<2x128xf32>
    %153 = arith.mulf %142, %101 : vector<2x128xf32>
    %154 = arith.addf %152, %153 : vector<2x128xf32>
    %155 = vector.extract_strided_slice %8 {offsets = [6, 0], sizes = [2, 384], strides = [1, 1]} : vector<16x384xf32> to vector<2x384xf32>
    %c128_37 = arith.constant 128 : index
    %c0_38 = arith.constant 0 : index
    %156 = vector.load %arg2[%c128_37, %c0_38] : memref<520x384xf32, #tpu.memory_space<vmem>>, vector<128x384xf32>
    %cst_39 = arith.constant dense<0.000000e+00> : vector<2x384xf32>
    %157 = tpu.matmul %126, %156, %cst_39 {dimension_numbers = #tpu.dot_dimension_numbers<[1], [0], [0], [1], [0, 0, 1, 1], [], []>} : vector<2x128xf32>, vector<128x384xf32>, vector<2x384xf32> -> vector<2x384xf32>
    %158 = vector.extract_strided_slice %155 {offsets = [0, 0], sizes = [2, 256], strides = [1, 1]} : vector<2x384xf32> to vector<2x256xf32>
    %159 = vector.extract_strided_slice %157 {offsets = [0, 0], sizes = [2, 256], strides = [1, 1]} : vector<2x384xf32> to vector<2x256xf32>
    %160 = arith.addf %158, %159 : vector<2x256xf32>
    %161 = arith.negf %160 : vector<2x256xf32>
    %162 = math.exp %161 : vector<2x256xf32>
    %cst_40 = arith.constant 1.000000e+00 : f32
    %163 = vector.broadcast %cst_40 : f32 to vector<2x256xf32>
    %164 = arith.addf %163, %162 : vector<2x256xf32>
    %165 = arith.divf %163, %164 : vector<2x256xf32>
    %166 = vector.extract_strided_slice %165 {offsets = [0, 0], sizes = [2, 128], strides = [1, 1]} : vector<2x256xf32> to vector<2x128xf32>
    %167 = vector.extract_strided_slice %165 {offsets = [0, 128], sizes = [2, 128], strides = [1, 1]} : vector<2x256xf32> to vector<2x128xf32>
    %168 = vector.extract_strided_slice %155 {offsets = [0, 256], sizes = [2, 128], strides = [1, 1]} : vector<2x384xf32> to vector<2x128xf32>
    %169 = vector.extract_strided_slice %157 {offsets = [0, 256], sizes = [2, 128], strides = [1, 1]} : vector<2x384xf32> to vector<2x128xf32>
    %170 = vector.broadcast %10 : vector<1x128xf32> to vector<2x128xf32>
    %171 = arith.addf %169, %170 : vector<2x128xf32>
    %172 = arith.mulf %166, %171 : vector<2x128xf32>
    %173 = arith.addf %168, %172 : vector<2x128xf32>
    %174 = math.tanh %173 : vector<2x128xf32>
    %cst_41 = arith.constant 1.000000e+00 : f32
    %175 = vector.broadcast %cst_41 : f32 to vector<2x128xf32>
    %176 = arith.subf %175, %167 : vector<2x128xf32>
    %177 = arith.mulf %176, %174 : vector<2x128xf32>
    %178 = arith.mulf %167, %126 : vector<2x128xf32>
    %179 = arith.addf %177, %178 : vector<2x128xf32>
    %c256_42 = arith.constant 256 : index
    %c0_43 = arith.constant 0 : index
    %180 = vector.load %arg2[%c256_42, %c0_43] : memref<520x384xf32, #tpu.memory_space<vmem>>, vector<128x384xf32>
    %cst_44 = arith.constant dense<0.000000e+00> : vector<2x384xf32>
    %181 = tpu.matmul %179, %180, %cst_44 {dimension_numbers = #tpu.dot_dimension_numbers<[1], [0], [0], [1], [0, 0, 1, 1], [], []>} : vector<2x128xf32>, vector<128x384xf32>, vector<2x384xf32> -> vector<2x384xf32>
    %182 = vector.broadcast %9 : vector<1x384xf32> to vector<2x384xf32>
    %183 = arith.addf %181, %182 : vector<2x384xf32>
    %c384_45 = arith.constant 384 : index
    %c0_46 = arith.constant 0 : index
    %184 = vector.load %arg2[%c384_45, %c0_46] : memref<520x384xf32, #tpu.memory_space<vmem>>, vector<128x384xf32>
    %cst_47 = arith.constant dense<0.000000e+00> : vector<2x384xf32>
    %185 = tpu.matmul %154, %184, %cst_47 {dimension_numbers = #tpu.dot_dimension_numbers<[1], [0], [0], [1], [0, 0, 1, 1], [], []>} : vector<2x128xf32>, vector<128x384xf32>, vector<2x384xf32> -> vector<2x384xf32>
    %186 = vector.extract_strided_slice %183 {offsets = [0, 0], sizes = [2, 256], strides = [1, 1]} : vector<2x384xf32> to vector<2x256xf32>
    %187 = vector.extract_strided_slice %185 {offsets = [0, 0], sizes = [2, 256], strides = [1, 1]} : vector<2x384xf32> to vector<2x256xf32>
    %188 = arith.addf %186, %187 : vector<2x256xf32>
    %189 = arith.negf %188 : vector<2x256xf32>
    %190 = math.exp %189 : vector<2x256xf32>
    %cst_48 = arith.constant 1.000000e+00 : f32
    %191 = vector.broadcast %cst_48 : f32 to vector<2x256xf32>
    %192 = arith.addf %191, %190 : vector<2x256xf32>
    %193 = arith.divf %191, %192 : vector<2x256xf32>
    %194 = vector.extract_strided_slice %193 {offsets = [0, 0], sizes = [2, 128], strides = [1, 1]} : vector<2x256xf32> to vector<2x128xf32>
    %195 = vector.extract_strided_slice %193 {offsets = [0, 128], sizes = [2, 128], strides = [1, 1]} : vector<2x256xf32> to vector<2x128xf32>
    %196 = vector.extract_strided_slice %183 {offsets = [0, 256], sizes = [2, 128], strides = [1, 1]} : vector<2x384xf32> to vector<2x128xf32>
    %197 = vector.extract_strided_slice %185 {offsets = [0, 256], sizes = [2, 128], strides = [1, 1]} : vector<2x384xf32> to vector<2x128xf32>
    %198 = vector.broadcast %11 : vector<1x128xf32> to vector<2x128xf32>
    %199 = arith.addf %197, %198 : vector<2x128xf32>
    %200 = arith.mulf %194, %199 : vector<2x128xf32>
    %201 = arith.addf %196, %200 : vector<2x128xf32>
    %202 = math.tanh %201 : vector<2x128xf32>
    %cst_49 = arith.constant 1.000000e+00 : f32
    %203 = vector.broadcast %cst_49 : f32 to vector<2x128xf32>
    %204 = arith.subf %203, %195 : vector<2x128xf32>
    %205 = arith.mulf %204, %202 : vector<2x128xf32>
    %206 = arith.mulf %195, %154 : vector<2x128xf32>
    %207 = arith.addf %205, %206 : vector<2x128xf32>
    %208 = vector.extract_strided_slice %8 {offsets = [8, 0], sizes = [2, 384], strides = [1, 1]} : vector<16x384xf32> to vector<2x384xf32>
    %c128_50 = arith.constant 128 : index
    %c0_51 = arith.constant 0 : index
    %209 = vector.load %arg2[%c128_50, %c0_51] : memref<520x384xf32, #tpu.memory_space<vmem>>, vector<128x384xf32>
    %cst_52 = arith.constant dense<0.000000e+00> : vector<2x384xf32>
    %210 = tpu.matmul %179, %209, %cst_52 {dimension_numbers = #tpu.dot_dimension_numbers<[1], [0], [0], [1], [0, 0, 1, 1], [], []>} : vector<2x128xf32>, vector<128x384xf32>, vector<2x384xf32> -> vector<2x384xf32>
    %211 = vector.extract_strided_slice %208 {offsets = [0, 0], sizes = [2, 256], strides = [1, 1]} : vector<2x384xf32> to vector<2x256xf32>
    %212 = vector.extract_strided_slice %210 {offsets = [0, 0], sizes = [2, 256], strides = [1, 1]} : vector<2x384xf32> to vector<2x256xf32>
    %213 = arith.addf %211, %212 : vector<2x256xf32>
    %214 = arith.negf %213 : vector<2x256xf32>
    %215 = math.exp %214 : vector<2x256xf32>
    %cst_53 = arith.constant 1.000000e+00 : f32
    %216 = vector.broadcast %cst_53 : f32 to vector<2x256xf32>
    %217 = arith.addf %216, %215 : vector<2x256xf32>
    %218 = arith.divf %216, %217 : vector<2x256xf32>
    %219 = vector.extract_strided_slice %218 {offsets = [0, 0], sizes = [2, 128], strides = [1, 1]} : vector<2x256xf32> to vector<2x128xf32>
    %220 = vector.extract_strided_slice %218 {offsets = [0, 128], sizes = [2, 128], strides = [1, 1]} : vector<2x256xf32> to vector<2x128xf32>
    %221 = vector.extract_strided_slice %208 {offsets = [0, 256], sizes = [2, 128], strides = [1, 1]} : vector<2x384xf32> to vector<2x128xf32>
    %222 = vector.extract_strided_slice %210 {offsets = [0, 256], sizes = [2, 128], strides = [1, 1]} : vector<2x384xf32> to vector<2x128xf32>
    %223 = vector.broadcast %10 : vector<1x128xf32> to vector<2x128xf32>
    %224 = arith.addf %222, %223 : vector<2x128xf32>
    %225 = arith.mulf %219, %224 : vector<2x128xf32>
    %226 = arith.addf %221, %225 : vector<2x128xf32>
    %227 = math.tanh %226 : vector<2x128xf32>
    %cst_54 = arith.constant 1.000000e+00 : f32
    %228 = vector.broadcast %cst_54 : f32 to vector<2x128xf32>
    %229 = arith.subf %228, %220 : vector<2x128xf32>
    %230 = arith.mulf %229, %227 : vector<2x128xf32>
    %231 = arith.mulf %220, %179 : vector<2x128xf32>
    %232 = arith.addf %230, %231 : vector<2x128xf32>
    %c256_55 = arith.constant 256 : index
    %c0_56 = arith.constant 0 : index
    %233 = vector.load %arg2[%c256_55, %c0_56] : memref<520x384xf32, #tpu.memory_space<vmem>>, vector<128x384xf32>
    %cst_57 = arith.constant dense<0.000000e+00> : vector<2x384xf32>
    %234 = tpu.matmul %232, %233, %cst_57 {dimension_numbers = #tpu.dot_dimension_numbers<[1], [0], [0], [1], [0, 0, 1, 1], [], []>} : vector<2x128xf32>, vector<128x384xf32>, vector<2x384xf32> -> vector<2x384xf32>
    %235 = vector.broadcast %9 : vector<1x384xf32> to vector<2x384xf32>
    %236 = arith.addf %234, %235 : vector<2x384xf32>
    %c384_58 = arith.constant 384 : index
    %c0_59 = arith.constant 0 : index
    %237 = vector.load %arg2[%c384_58, %c0_59] : memref<520x384xf32, #tpu.memory_space<vmem>>, vector<128x384xf32>
    %cst_60 = arith.constant dense<0.000000e+00> : vector<2x384xf32>
    %238 = tpu.matmul %207, %237, %cst_60 {dimension_numbers = #tpu.dot_dimension_numbers<[1], [0], [0], [1], [0, 0, 1, 1], [], []>} : vector<2x128xf32>, vector<128x384xf32>, vector<2x384xf32> -> vector<2x384xf32>
    %239 = vector.extract_strided_slice %236 {offsets = [0, 0], sizes = [2, 256], strides = [1, 1]} : vector<2x384xf32> to vector<2x256xf32>
    %240 = vector.extract_strided_slice %238 {offsets = [0, 0], sizes = [2, 256], strides = [1, 1]} : vector<2x384xf32> to vector<2x256xf32>
    %241 = arith.addf %239, %240 : vector<2x256xf32>
    %242 = arith.negf %241 : vector<2x256xf32>
    %243 = math.exp %242 : vector<2x256xf32>
    %cst_61 = arith.constant 1.000000e+00 : f32
    %244 = vector.broadcast %cst_61 : f32 to vector<2x256xf32>
    %245 = arith.addf %244, %243 : vector<2x256xf32>
    %246 = arith.divf %244, %245 : vector<2x256xf32>
    %247 = vector.extract_strided_slice %246 {offsets = [0, 0], sizes = [2, 128], strides = [1, 1]} : vector<2x256xf32> to vector<2x128xf32>
    %248 = vector.extract_strided_slice %246 {offsets = [0, 128], sizes = [2, 128], strides = [1, 1]} : vector<2x256xf32> to vector<2x128xf32>
    %249 = vector.extract_strided_slice %236 {offsets = [0, 256], sizes = [2, 128], strides = [1, 1]} : vector<2x384xf32> to vector<2x128xf32>
    %250 = vector.extract_strided_slice %238 {offsets = [0, 256], sizes = [2, 128], strides = [1, 1]} : vector<2x384xf32> to vector<2x128xf32>
    %251 = vector.broadcast %11 : vector<1x128xf32> to vector<2x128xf32>
    %252 = arith.addf %250, %251 : vector<2x128xf32>
    %253 = arith.mulf %247, %252 : vector<2x128xf32>
    %254 = arith.addf %249, %253 : vector<2x128xf32>
    %255 = math.tanh %254 : vector<2x128xf32>
    %cst_62 = arith.constant 1.000000e+00 : f32
    %256 = vector.broadcast %cst_62 : f32 to vector<2x128xf32>
    %257 = arith.subf %256, %248 : vector<2x128xf32>
    %258 = arith.mulf %257, %255 : vector<2x128xf32>
    %259 = arith.mulf %248, %207 : vector<2x128xf32>
    %260 = arith.addf %258, %259 : vector<2x128xf32>
    %261 = vector.extract_strided_slice %8 {offsets = [10, 0], sizes = [2, 384], strides = [1, 1]} : vector<16x384xf32> to vector<2x384xf32>
    %c128_63 = arith.constant 128 : index
    %c0_64 = arith.constant 0 : index
    %262 = vector.load %arg2[%c128_63, %c0_64] : memref<520x384xf32, #tpu.memory_space<vmem>>, vector<128x384xf32>
    %cst_65 = arith.constant dense<0.000000e+00> : vector<2x384xf32>
    %263 = tpu.matmul %232, %262, %cst_65 {dimension_numbers = #tpu.dot_dimension_numbers<[1], [0], [0], [1], [0, 0, 1, 1], [], []>} : vector<2x128xf32>, vector<128x384xf32>, vector<2x384xf32> -> vector<2x384xf32>
    %264 = vector.extract_strided_slice %261 {offsets = [0, 0], sizes = [2, 256], strides = [1, 1]} : vector<2x384xf32> to vector<2x256xf32>
    %265 = vector.extract_strided_slice %263 {offsets = [0, 0], sizes = [2, 256], strides = [1, 1]} : vector<2x384xf32> to vector<2x256xf32>
    %266 = arith.addf %264, %265 : vector<2x256xf32>
    %267 = arith.negf %266 : vector<2x256xf32>
    %268 = math.exp %267 : vector<2x256xf32>
    %cst_66 = arith.constant 1.000000e+00 : f32
    %269 = vector.broadcast %cst_66 : f32 to vector<2x256xf32>
    %270 = arith.addf %269, %268 : vector<2x256xf32>
    %271 = arith.divf %269, %270 : vector<2x256xf32>
    %272 = vector.extract_strided_slice %271 {offsets = [0, 0], sizes = [2, 128], strides = [1, 1]} : vector<2x256xf32> to vector<2x128xf32>
    %273 = vector.extract_strided_slice %271 {offsets = [0, 128], sizes = [2, 128], strides = [1, 1]} : vector<2x256xf32> to vector<2x128xf32>
    %274 = vector.extract_strided_slice %261 {offsets = [0, 256], sizes = [2, 128], strides = [1, 1]} : vector<2x384xf32> to vector<2x128xf32>
    %275 = vector.extract_strided_slice %263 {offsets = [0, 256], sizes = [2, 128], strides = [1, 1]} : vector<2x384xf32> to vector<2x128xf32>
    %276 = vector.broadcast %10 : vector<1x128xf32> to vector<2x128xf32>
    %277 = arith.addf %275, %276 : vector<2x128xf32>
    %278 = arith.mulf %272, %277 : vector<2x128xf32>
    %279 = arith.addf %274, %278 : vector<2x128xf32>
    %280 = math.tanh %279 : vector<2x128xf32>
    %cst_67 = arith.constant 1.000000e+00 : f32
    %281 = vector.broadcast %cst_67 : f32 to vector<2x128xf32>
    %282 = arith.subf %281, %273 : vector<2x128xf32>
    %283 = arith.mulf %282, %280 : vector<2x128xf32>
    %284 = arith.mulf %273, %232 : vector<2x128xf32>
    %285 = arith.addf %283, %284 : vector<2x128xf32>
    %c256_68 = arith.constant 256 : index
    %c0_69 = arith.constant 0 : index
    %286 = vector.load %arg2[%c256_68, %c0_69] : memref<520x384xf32, #tpu.memory_space<vmem>>, vector<128x384xf32>
    %cst_70 = arith.constant dense<0.000000e+00> : vector<2x384xf32>
    %287 = tpu.matmul %285, %286, %cst_70 {dimension_numbers = #tpu.dot_dimension_numbers<[1], [0], [0], [1], [0, 0, 1, 1], [], []>} : vector<2x128xf32>, vector<128x384xf32>, vector<2x384xf32> -> vector<2x384xf32>
    %288 = vector.broadcast %9 : vector<1x384xf32> to vector<2x384xf32>
    %289 = arith.addf %287, %288 : vector<2x384xf32>
    %c384_71 = arith.constant 384 : index
    %c0_72 = arith.constant 0 : index
    %290 = vector.load %arg2[%c384_71, %c0_72] : memref<520x384xf32, #tpu.memory_space<vmem>>, vector<128x384xf32>
    %cst_73 = arith.constant dense<0.000000e+00> : vector<2x384xf32>
    %291 = tpu.matmul %260, %290, %cst_73 {dimension_numbers = #tpu.dot_dimension_numbers<[1], [0], [0], [1], [0, 0, 1, 1], [], []>} : vector<2x128xf32>, vector<128x384xf32>, vector<2x384xf32> -> vector<2x384xf32>
    %292 = vector.extract_strided_slice %289 {offsets = [0, 0], sizes = [2, 256], strides = [1, 1]} : vector<2x384xf32> to vector<2x256xf32>
    %293 = vector.extract_strided_slice %291 {offsets = [0, 0], sizes = [2, 256], strides = [1, 1]} : vector<2x384xf32> to vector<2x256xf32>
    %294 = arith.addf %292, %293 : vector<2x256xf32>
    %295 = arith.negf %294 : vector<2x256xf32>
    %296 = math.exp %295 : vector<2x256xf32>
    %cst_74 = arith.constant 1.000000e+00 : f32
    %297 = vector.broadcast %cst_74 : f32 to vector<2x256xf32>
    %298 = arith.addf %297, %296 : vector<2x256xf32>
    %299 = arith.divf %297, %298 : vector<2x256xf32>
    %300 = vector.extract_strided_slice %299 {offsets = [0, 0], sizes = [2, 128], strides = [1, 1]} : vector<2x256xf32> to vector<2x128xf32>
    %301 = vector.extract_strided_slice %299 {offsets = [0, 128], sizes = [2, 128], strides = [1, 1]} : vector<2x256xf32> to vector<2x128xf32>
    %302 = vector.extract_strided_slice %289 {offsets = [0, 256], sizes = [2, 128], strides = [1, 1]} : vector<2x384xf32> to vector<2x128xf32>
    %303 = vector.extract_strided_slice %291 {offsets = [0, 256], sizes = [2, 128], strides = [1, 1]} : vector<2x384xf32> to vector<2x128xf32>
    %304 = vector.broadcast %11 : vector<1x128xf32> to vector<2x128xf32>
    %305 = arith.addf %303, %304 : vector<2x128xf32>
    %306 = arith.mulf %300, %305 : vector<2x128xf32>
    %307 = arith.addf %302, %306 : vector<2x128xf32>
    %308 = math.tanh %307 : vector<2x128xf32>
    %cst_75 = arith.constant 1.000000e+00 : f32
    %309 = vector.broadcast %cst_75 : f32 to vector<2x128xf32>
    %310 = arith.subf %309, %301 : vector<2x128xf32>
    %311 = arith.mulf %310, %308 : vector<2x128xf32>
    %312 = arith.mulf %301, %260 : vector<2x128xf32>
    %313 = arith.addf %311, %312 : vector<2x128xf32>
    %314 = vector.extract_strided_slice %8 {offsets = [12, 0], sizes = [2, 384], strides = [1, 1]} : vector<16x384xf32> to vector<2x384xf32>
    %c128_76 = arith.constant 128 : index
    %c0_77 = arith.constant 0 : index
    %315 = vector.load %arg2[%c128_76, %c0_77] : memref<520x384xf32, #tpu.memory_space<vmem>>, vector<128x384xf32>
    %cst_78 = arith.constant dense<0.000000e+00> : vector<2x384xf32>
    %316 = tpu.matmul %285, %315, %cst_78 {dimension_numbers = #tpu.dot_dimension_numbers<[1], [0], [0], [1], [0, 0, 1, 1], [], []>} : vector<2x128xf32>, vector<128x384xf32>, vector<2x384xf32> -> vector<2x384xf32>
    %317 = vector.extract_strided_slice %314 {offsets = [0, 0], sizes = [2, 256], strides = [1, 1]} : vector<2x384xf32> to vector<2x256xf32>
    %318 = vector.extract_strided_slice %316 {offsets = [0, 0], sizes = [2, 256], strides = [1, 1]} : vector<2x384xf32> to vector<2x256xf32>
    %319 = arith.addf %317, %318 : vector<2x256xf32>
    %320 = arith.negf %319 : vector<2x256xf32>
    %321 = math.exp %320 : vector<2x256xf32>
    %cst_79 = arith.constant 1.000000e+00 : f32
    %322 = vector.broadcast %cst_79 : f32 to vector<2x256xf32>
    %323 = arith.addf %322, %321 : vector<2x256xf32>
    %324 = arith.divf %322, %323 : vector<2x256xf32>
    %325 = vector.extract_strided_slice %324 {offsets = [0, 0], sizes = [2, 128], strides = [1, 1]} : vector<2x256xf32> to vector<2x128xf32>
    %326 = vector.extract_strided_slice %324 {offsets = [0, 128], sizes = [2, 128], strides = [1, 1]} : vector<2x256xf32> to vector<2x128xf32>
    %327 = vector.extract_strided_slice %314 {offsets = [0, 256], sizes = [2, 128], strides = [1, 1]} : vector<2x384xf32> to vector<2x128xf32>
    %328 = vector.extract_strided_slice %316 {offsets = [0, 256], sizes = [2, 128], strides = [1, 1]} : vector<2x384xf32> to vector<2x128xf32>
    %329 = vector.broadcast %10 : vector<1x128xf32> to vector<2x128xf32>
    %330 = arith.addf %328, %329 : vector<2x128xf32>
    %331 = arith.mulf %325, %330 : vector<2x128xf32>
    %332 = arith.addf %327, %331 : vector<2x128xf32>
    %333 = math.tanh %332 : vector<2x128xf32>
    %cst_80 = arith.constant 1.000000e+00 : f32
    %334 = vector.broadcast %cst_80 : f32 to vector<2x128xf32>
    %335 = arith.subf %334, %326 : vector<2x128xf32>
    %336 = arith.mulf %335, %333 : vector<2x128xf32>
    %337 = arith.mulf %326, %285 : vector<2x128xf32>
    %338 = arith.addf %336, %337 : vector<2x128xf32>
    %c256_81 = arith.constant 256 : index
    %c0_82 = arith.constant 0 : index
    %339 = vector.load %arg2[%c256_81, %c0_82] : memref<520x384xf32, #tpu.memory_space<vmem>>, vector<128x384xf32>
    %cst_83 = arith.constant dense<0.000000e+00> : vector<2x384xf32>
    %340 = tpu.matmul %338, %339, %cst_83 {dimension_numbers = #tpu.dot_dimension_numbers<[1], [0], [0], [1], [0, 0, 1, 1], [], []>} : vector<2x128xf32>, vector<128x384xf32>, vector<2x384xf32> -> vector<2x384xf32>
    %341 = vector.broadcast %9 : vector<1x384xf32> to vector<2x384xf32>
    %342 = arith.addf %340, %341 : vector<2x384xf32>
    %c384_84 = arith.constant 384 : index
    %c0_85 = arith.constant 0 : index
    %343 = vector.load %arg2[%c384_84, %c0_85] : memref<520x384xf32, #tpu.memory_space<vmem>>, vector<128x384xf32>
    %cst_86 = arith.constant dense<0.000000e+00> : vector<2x384xf32>
    %344 = tpu.matmul %313, %343, %cst_86 {dimension_numbers = #tpu.dot_dimension_numbers<[1], [0], [0], [1], [0, 0, 1, 1], [], []>} : vector<2x128xf32>, vector<128x384xf32>, vector<2x384xf32> -> vector<2x384xf32>
    %345 = vector.extract_strided_slice %342 {offsets = [0, 0], sizes = [2, 256], strides = [1, 1]} : vector<2x384xf32> to vector<2x256xf32>
    %346 = vector.extract_strided_slice %344 {offsets = [0, 0], sizes = [2, 256], strides = [1, 1]} : vector<2x384xf32> to vector<2x256xf32>
    %347 = arith.addf %345, %346 : vector<2x256xf32>
    %348 = arith.negf %347 : vector<2x256xf32>
    %349 = math.exp %348 : vector<2x256xf32>
    %cst_87 = arith.constant 1.000000e+00 : f32
    %350 = vector.broadcast %cst_87 : f32 to vector<2x256xf32>
    %351 = arith.addf %350, %349 : vector<2x256xf32>
    %352 = arith.divf %350, %351 : vector<2x256xf32>
    %353 = vector.extract_strided_slice %352 {offsets = [0, 0], sizes = [2, 128], strides = [1, 1]} : vector<2x256xf32> to vector<2x128xf32>
    %354 = vector.extract_strided_slice %352 {offsets = [0, 128], sizes = [2, 128], strides = [1, 1]} : vector<2x256xf32> to vector<2x128xf32>
    %355 = vector.extract_strided_slice %342 {offsets = [0, 256], sizes = [2, 128], strides = [1, 1]} : vector<2x384xf32> to vector<2x128xf32>
    %356 = vector.extract_strided_slice %344 {offsets = [0, 256], sizes = [2, 128], strides = [1, 1]} : vector<2x384xf32> to vector<2x128xf32>
    %357 = vector.broadcast %11 : vector<1x128xf32> to vector<2x128xf32>
    %358 = arith.addf %356, %357 : vector<2x128xf32>
    %359 = arith.mulf %353, %358 : vector<2x128xf32>
    %360 = arith.addf %355, %359 : vector<2x128xf32>
    %361 = math.tanh %360 : vector<2x128xf32>
    %cst_88 = arith.constant 1.000000e+00 : f32
    %362 = vector.broadcast %cst_88 : f32 to vector<2x128xf32>
    %363 = arith.subf %362, %354 : vector<2x128xf32>
    %364 = arith.mulf %363, %361 : vector<2x128xf32>
    %365 = arith.mulf %354, %313 : vector<2x128xf32>
    %366 = arith.addf %364, %365 : vector<2x128xf32>
    %367 = vector.extract_strided_slice %8 {offsets = [14, 0], sizes = [2, 384], strides = [1, 1]} : vector<16x384xf32> to vector<2x384xf32>
    %c128_89 = arith.constant 128 : index
    %c0_90 = arith.constant 0 : index
    %368 = vector.load %arg2[%c128_89, %c0_90] : memref<520x384xf32, #tpu.memory_space<vmem>>, vector<128x384xf32>
    %cst_91 = arith.constant dense<0.000000e+00> : vector<2x384xf32>
    %369 = tpu.matmul %338, %368, %cst_91 {dimension_numbers = #tpu.dot_dimension_numbers<[1], [0], [0], [1], [0, 0, 1, 1], [], []>} : vector<2x128xf32>, vector<128x384xf32>, vector<2x384xf32> -> vector<2x384xf32>
    %370 = vector.extract_strided_slice %367 {offsets = [0, 0], sizes = [2, 256], strides = [1, 1]} : vector<2x384xf32> to vector<2x256xf32>
    %371 = vector.extract_strided_slice %369 {offsets = [0, 0], sizes = [2, 256], strides = [1, 1]} : vector<2x384xf32> to vector<2x256xf32>
    %372 = arith.addf %370, %371 : vector<2x256xf32>
    %373 = arith.negf %372 : vector<2x256xf32>
    %374 = math.exp %373 : vector<2x256xf32>
    %cst_92 = arith.constant 1.000000e+00 : f32
    %375 = vector.broadcast %cst_92 : f32 to vector<2x256xf32>
    %376 = arith.addf %375, %374 : vector<2x256xf32>
    %377 = arith.divf %375, %376 : vector<2x256xf32>
    %378 = vector.extract_strided_slice %377 {offsets = [0, 0], sizes = [2, 128], strides = [1, 1]} : vector<2x256xf32> to vector<2x128xf32>
    %379 = vector.extract_strided_slice %377 {offsets = [0, 128], sizes = [2, 128], strides = [1, 1]} : vector<2x256xf32> to vector<2x128xf32>
    %380 = vector.extract_strided_slice %367 {offsets = [0, 256], sizes = [2, 128], strides = [1, 1]} : vector<2x384xf32> to vector<2x128xf32>
    %381 = vector.extract_strided_slice %369 {offsets = [0, 256], sizes = [2, 128], strides = [1, 1]} : vector<2x384xf32> to vector<2x128xf32>
    %382 = vector.broadcast %10 : vector<1x128xf32> to vector<2x128xf32>
    %383 = arith.addf %381, %382 : vector<2x128xf32>
    %384 = arith.mulf %378, %383 : vector<2x128xf32>
    %385 = arith.addf %380, %384 : vector<2x128xf32>
    %386 = math.tanh %385 : vector<2x128xf32>
    %cst_93 = arith.constant 1.000000e+00 : f32
    %387 = vector.broadcast %cst_93 : f32 to vector<2x128xf32>
    %388 = arith.subf %387, %379 : vector<2x128xf32>
    %389 = arith.mulf %388, %386 : vector<2x128xf32>
    %390 = arith.mulf %379, %338 : vector<2x128xf32>
    %391 = arith.addf %389, %390 : vector<2x128xf32>
    %c256_94 = arith.constant 256 : index
    %c0_95 = arith.constant 0 : index
    %392 = vector.load %arg2[%c256_94, %c0_95] : memref<520x384xf32, #tpu.memory_space<vmem>>, vector<128x384xf32>
    %cst_96 = arith.constant dense<0.000000e+00> : vector<2x384xf32>
    %393 = tpu.matmul %391, %392, %cst_96 {dimension_numbers = #tpu.dot_dimension_numbers<[1], [0], [0], [1], [0, 0, 1, 1], [], []>} : vector<2x128xf32>, vector<128x384xf32>, vector<2x384xf32> -> vector<2x384xf32>
    %394 = vector.broadcast %9 : vector<1x384xf32> to vector<2x384xf32>
    %395 = arith.addf %393, %394 : vector<2x384xf32>
    %c384_97 = arith.constant 384 : index
    %c0_98 = arith.constant 0 : index
    %396 = vector.load %arg2[%c384_97, %c0_98] : memref<520x384xf32, #tpu.memory_space<vmem>>, vector<128x384xf32>
    %cst_99 = arith.constant dense<0.000000e+00> : vector<2x384xf32>
    %397 = tpu.matmul %366, %396, %cst_99 {dimension_numbers = #tpu.dot_dimension_numbers<[1], [0], [0], [1], [0, 0, 1, 1], [], []>} : vector<2x128xf32>, vector<128x384xf32>, vector<2x384xf32> -> vector<2x384xf32>
    %398 = vector.extract_strided_slice %395 {offsets = [0, 0], sizes = [2, 256], strides = [1, 1]} : vector<2x384xf32> to vector<2x256xf32>
    %399 = vector.extract_strided_slice %397 {offsets = [0, 0], sizes = [2, 256], strides = [1, 1]} : vector<2x384xf32> to vector<2x256xf32>
    %400 = arith.addf %398, %399 : vector<2x256xf32>
    %401 = arith.negf %400 : vector<2x256xf32>
    %402 = math.exp %401 : vector<2x256xf32>
    %cst_100 = arith.constant 1.000000e+00 : f32
    %403 = vector.broadcast %cst_100 : f32 to vector<2x256xf32>
    %404 = arith.addf %403, %402 : vector<2x256xf32>
    %405 = arith.divf %403, %404 : vector<2x256xf32>
    %406 = vector.extract_strided_slice %405 {offsets = [0, 0], sizes = [2, 128], strides = [1, 1]} : vector<2x256xf32> to vector<2x128xf32>
    %407 = vector.extract_strided_slice %405 {offsets = [0, 128], sizes = [2, 128], strides = [1, 1]} : vector<2x256xf32> to vector<2x128xf32>
    %408 = vector.extract_strided_slice %395 {offsets = [0, 256], sizes = [2, 128], strides = [1, 1]} : vector<2x384xf32> to vector<2x128xf32>
    %409 = vector.extract_strided_slice %397 {offsets = [0, 256], sizes = [2, 128], strides = [1, 1]} : vector<2x384xf32> to vector<2x128xf32>
    %410 = vector.broadcast %11 : vector<1x128xf32> to vector<2x128xf32>
    %411 = arith.addf %409, %410 : vector<2x128xf32>
    %412 = arith.mulf %406, %411 : vector<2x128xf32>
    %413 = arith.addf %408, %412 : vector<2x128xf32>
    %414 = math.tanh %413 : vector<2x128xf32>
    %cst_101 = arith.constant 1.000000e+00 : f32
    %415 = vector.broadcast %cst_101 : f32 to vector<2x128xf32>
    %416 = arith.subf %415, %407 : vector<2x128xf32>
    %417 = arith.mulf %416, %414 : vector<2x128xf32>
    %418 = arith.mulf %407, %366 : vector<2x128xf32>
    %419 = arith.addf %417, %418 : vector<2x128xf32>
    %c0_102 = arith.constant 0 : index
    %c0_103 = arith.constant 0 : index
    %c0_104 = arith.constant 0 : index
    %420 = vector.load %arg3[%c0_102, %c0_103, %c0_104] : memref<1x4x128xf32, #tpu.memory_space<vmem>>, vector<1x2x128xf32>
    %421 = vector.shape_cast %420 : vector<1x2x128xf32> to vector<2x128xf32>
    %422 = vector.shape_cast %391 : vector<2x128xf32> to vector<1x2x128xf32>
    tpu.vector_store %arg3[%c0_102, %c0_103, %c0_104], %422 {strides = array<i32>} : memref<1x4x128xf32, #tpu.memory_space<vmem>>, vector<1x2x128xf32>,
    %c0_105 = arith.constant 0 : index
    %c2 = arith.constant 2 : index
    %c0_106 = arith.constant 0 : index
    %423 = vector.load %arg3[%c0_105, %c2, %c0_106] : memref<1x4x128xf32, #tpu.memory_space<vmem>>, vector<1x2x128xf32>
    %424 = vector.shape_cast %423 : vector<1x2x128xf32> to vector<2x128xf32>
    %425 = vector.shape_cast %419 : vector<2x128xf32> to vector<1x2x128xf32>
    tpu.vector_store %arg3[%c0_105, %c2, %c0_106], %425 {strides = array<i32>} : memref<1x4x128xf32, #tpu.memory_space<vmem>>, vector<1x2x128xf32>,
    return
  }
  func.func @transform_0(%arg0: i32) -> (i32, i32, i32) {
    %c0_i32 = arith.constant 0 : i32
    %c0_i32_0 = arith.constant 0 : i32
    %c0_i32_1 = arith.constant 0 : i32
    return %arg0, %c0_i32, %c0_i32_0 : i32, i32, i32
  }
  func.func @transform_1(%arg0: i32) -> (i32, i32) {
    %c0_i32 = arith.constant 0 : i32
    %c0_i32_0 = arith.constant 0 : i32
    %c0_i32_1 = arith.constant 0 : i32
    return %c0_i32, %c0_i32_0 : i32, i32
  }
  func.func @transform_2(%arg0: i32) -> (i32, i32, i32) {
    %c0_i32 = arith.constant 0 : i32
    %c0_i32_0 = arith.constant 0 : i32
    %c0_i32_1 = arith.constant 0 : i32
    return %arg0, %c0_i32, %c0_i32_0 : i32, i32, i32
  }
}

</mosaic_0001>

<llo_original>
// kernel: encoder_forward.1
$region0: #{encoder_forward.1}
  #allocation0 [shape = 'u32[]', space=smem, size = 0x4, offset = 0x4, fixed_abs, tag = 'smem constant byte address 0x4 - core index']
  #allocation1 [shape = 'u32[144,128]{1,0:T(1,128)}', space=vmem, size = 0x12000, scoped, tag = 'internal scratch']
  %s0 = inlined_call_operand.vmem [shape: s32[1,16,1], index: 0, kind: input, shape index: {}]
  %s1 = inlined_call_operand.hbm [shape: f32[520,384], index: 1, kind: input, shape index: {}]
  %s2 = inlined_call_operand.vmem [shape: f32[1,4,128], index: 2, kind: output, shape index: {}]
  %s3 = sld [smem:[#allocation0]]
  $region22: #{encoder_forward.1} parent=0
    _
  %s5 = ssub.s32 1, %s3
  %s6 = scalar_select 0, %s5, %s3
  $region1: #{encoder_forward.1} parent=0
    #allocation2 [shape = 'u8[798720]{0}', space=vmem, size = 0xc3000, scoped, tag = 'input window, operand 1, single buffered']
    #allocation3 [shape = 's32[1]{0}', space=sflag, size = 0x4, scoped, tag = 'scoped memory for encoder_forward.1']
    %7 = vsyncpa [#allocation3], 0
    // Predicated region
    $region2: #{encoder_forward.1} parent=1 // pred_check
      _
    $region3: #{encoder_forward.1} parent=1 // pred_check_branch
      %9 = sbr.rel (0) target = $region5
    $region4: #{encoder_forward.1} parent=1 // pred_region
      _
    $region5: #{encoder_forward.1} parent=1 // pred_fallthru
      _
    // Predicated region
    $region6: #{encoder_forward.1} parent=1 // pred_check
      _
    $region7: #{encoder_forward.1} parent=1 // pred_check_branch
      %11 = sbr.rel (0) target = $region9
    $region8: #{encoder_forward.1} parent=1 // pred_region
      %s13 = ssub.s32 24960, 24960
      %14 = vsyncadd [#allocation3], %s13
      %s15 = sshll.u32 [#allocation2], 4
      %s16 = int_to_ptr.vmem [resolvable:$true] %s15
      %21 = dma.hbm_to_vmem [thread:$0]  %s1, 24960, %s16, [#allocation3], 384, 384, 24
    $region9: #{encoder_forward.1} parent=1 // pred_fallthru
      _
    // Predicated region
    $region10: #{encoder_forward.1} parent=1 // pred_check
      _
    $region11: #{encoder_forward.1} parent=1 // pred_check_branch
      %23 = sbr.rel (0) target = $region13
    $region12: #{encoder_forward.1} parent=1 // pred_region
      %24 = dma.done [#allocation3], 24960
    $region13: #{encoder_forward.1} parent=1 // pred_fallthru
      _
    %v25 = vld [vmem:[%s0] sm:$0xff]
    %v26 = vld [vmem:[%s0 + $0x8] sm:$0xff]
    %v27 = vlaneseq
    %v28 = vand.u32 %v27, 127
    %29 = vset.pattern.permute.xlu0 0
    %30 = vperm.xlu0 %29, %v25
    %v31 = vpop.permute.xlu0 %30
    %32 = vset.pattern.permute.xlu0 0
    %33 = vperm.xlu0 %32, %v26
    %v34 = vpop.permute.xlu0 %33
    %vm35 = vcmp.eq.s32.totalorder %v28, %v31
    %vm36 = vcmp.eq.s32.totalorder %v28, %v34
    %v37 = vsel %vm35, 1, 0
    %v38 = vsel %vm36, 1, 0
    %v39 = vcvt.s32.f32 %v37
    %v40 = vcvt.s32.f32 %v38
    %v41 = vld [vmem:[#allocation2] sm:$0xff]
    %v42 = vld [vmem:[#allocation2 + $0x8] sm:$0xff]
    %v43 = vld [vmem:[#allocation2 + $0x10] sm:$0xff]
    %v44 = vld [vmem:[#allocation2 + $0x18] sm:$0xff]
    %v45 = vld [vmem:[#allocation2 + $0x20] sm:$0xff]
    %v46 = vld [vmem:[#allocation2 + $0x28] sm:$0xff]
    %v47 = vld [vmem:[#allocation2 + $0x30] sm:$0xff]
    %v48 = vld [vmem:[#allocation2 + $0x38] sm:$0xff]
    %v49 = vld [vmem:[#allocation2 + $0x40] sm:$0xff]
    %v50 = vld [vmem:[#allocation2 + $0x48] sm:$0xff]
    %v51 = vld [vmem:[#allocation2 + $0x50] sm:$0xff]
    %v52 = vld [vmem:[#allocation2 + $0x58] sm:$0xff]
    %v53 = vld [vmem:[#allocation2 + $0x60] sm:$0xff]
    %v54 = vld [vmem:[#allocation2 + $0x68] sm:$0xff]
    %v55 = vld [vmem:[#allocation2 + $0x70] sm:$0xff]
    %v56 = vld [vmem:[#allocation2 + $0x78] sm:$0xff]
    %v57 = vld [vmem:[#allocation2 + $0x80] sm:$0xff]
    %v58 = vld [vmem:[#allocation2 + $0x88] sm:$0xff]
    %v59 = vld [vmem:[#allocation2 + $0x90] sm:$0xff]
    %v60 = vld [vmem:[#allocation2 + $0x98] sm:$0xff]
    %v61 = vld [vmem:[#allocation2 + $0xa0] sm:$0xff]
    %v62 = vld [vmem:[#allocation2 + $0xa8] sm:$0xff]
    %v63 = vld [vmem:[#allocation2 + $0xb0] sm:$0xff]
    %v64 = vld [vmem:[#allocation2 + $0xb8] sm:$0xff]
    %v65 = vld [vmem:[#allocation2 + $0xc0] sm:$0xff]
    %v66 = vld [vmem:[#allocation2 + $0xc8] sm:$0xff]
    %v67 = vld [vmem:[#allocation2 + $0xd0] sm:$0xff]
    %v68 = vld [vmem:[#allocation2 + $0xd8] sm:$0xff]
    %v69 = vld [vmem:[#allocation2 + $0xe0] sm:$0xff]
    %v70 = vld [vmem:[#allocation2 + $0xe8] sm:$0xff]
    %v71 = vld [vmem:[#allocation2 + $0xf0] sm:$0xff]
    %v72 = vld [vmem:[#allocation2 + $0xf8] sm:$0xff]
    %v73 = vld [vmem:[#allocation2 + $0x100] sm:$0xff]
    %v74 = vld [vmem:[#allocation2 + $0x108] sm:$0xff]
    %v75 = vld [vmem:[#allocation2 + $0x110] sm:$0xff]
    %v76 = vld [vmem:[#allocation2 + $0x118] sm:$0xff]
    %v77 = vld [vmem:[#allocation2 + $0x120] sm:$0xff]
    %v78 = vld [vmem:[#allocation2 + $0x128] sm:$0xff]
    %v79 = vld [vmem:[#allocation2 + $0x130] sm:$0xff]
    %v80 = vld [vmem:[#allocation2 + $0x138] sm:$0xff]
    %v81 = vld [vmem:[#allocation2 + $0x140] sm:$0xff]
    %v82 = vld [vmem:[#allocation2 + $0x148] sm:$0xff]
    %v83 = vld [vmem:[#allocation2 + $0x150] sm:$0xff]
    %v84 = vld [vmem:[#allocation2 + $0x158] sm:$0xff]
    %v85 = vld [vmem:[#allocation2 + $0x160] sm:$0xff]
    %v86 = vld [vmem:[#allocation2 + $0x168] sm:$0xff]
    %v87 = vld [vmem:[#allocation2 + $0x170] sm:$0xff]
    %v88 = vld [vmem:[#allocation2 + $0x178] sm:$0xff]
    %89 = vmatprep.subr.mxu0 %v42
    %90 = vmatpush1.msra.mxu0 %v41
    %91 = vmatprep.subr.mxu0 %v45
    %92 = vmatpush1.msra.mxu0 %v44
    %93 = vmatprep.subr.mxu0 %v48
    %94 = vmatpush1.msra.mxu0 %v47
    %95 = vmatprep.subr.mxu0 %v51
    %96 = vmatpush1.msra.mxu0 %v50
    %97 = vmatprep.subr.mxu0 %v54
    %98 = vmatpush1.msra.mxu0 %v53
    %99 = vmatprep.subr.mxu0 %v57
    %100 = vmatpush1.msra.mxu0 %v56
    %101 = vmatprep.subr.mxu0 %v60
    %102 = vmatpush1.msra.mxu0 %v59
    %103 = vmatprep.subr.mxu0 %v63
    %104 = vmatpush1.msra.mxu0 %v62
    %105 = vmatprep.subr.mxu0 %v66
    %106 = vmatpush1.msra.mxu0 %v65
    %107 = vmatprep.subr.mxu0 %v69
    %108 = vmatpush1.msra.mxu0 %v68
    %109 = vmatprep.subr.mxu0 %v72
    %110 = vmatpush1.msra.mxu0 %v71
    %111 = vmatprep.subr.mxu0 %v75
    %112 = vmatpush1.msra.mxu0 %v74
    %113 = vmatprep.subr.mxu0 %v78
    %114 = vmatpush1.msra.mxu0 %v77
    %115 = vmatprep.subr.mxu0 %v81
    %116 = vmatpush1.msra.mxu0 %v80
    %117 = vmatprep.subr.mxu0 %v84
    %118 = vmatpush1.msra.mxu0 %v83
    %119 = vmatprep.subr.mxu0 %v87
    %120 = vmatpush1.msra.mxu0 %v86
    %121 = vmatprep.subr.mxu0 0.0
    %122 = vmatpush1.msra.mxu0 0.0
    %123 = vmatprep.subr.mxu0 0.0
    %124 = vmatpush1.msra.mxu0 0.0
    %125 = vmatprep.subr.mxu0 0.0
    %126 = vmatpush1.msra.mxu0 0.0
    %127 = vmatprep.subr.mxu0 0.0
    %128 = vmatpush1.msra.mxu0 0.0
    %129 = vmatprep.subr.mxu0 0.0
    %130 = vmatpush1.msra.mxu0 0.0
    %131 = vmatprep.subr.mxu0 0.0
    %132 = vmatpush1.msra.mxu0 0.0
    %133 = vmatprep.subr.mxu0 0.0
    %134 = vmatpush1.msra.mxu0 0.0
    %135 = vmatprep.subr.mxu0 0.0
    %136 = vmatpush1.msra.mxu0 0.0
    %137 = vmatprep.subr.mxu0 0.0
    %138 = vmatpush1.msra.mxu0 0.0
    %139 = vmatprep.subr.mxu0 0.0
    %140 = vmatpush1.msra.mxu0 0.0
    %141 = vmatprep.subr.mxu0 0.0
    %142 = vmatpush1.msra.mxu0 0.0
    %143 = vmatprep.subr.mxu0 0.0
    %144 = vmatpush1.msra.mxu0 0.0
    %145 = vmatprep.subr.mxu0 0.0
    %146 = vmatpush1.msra.mxu0 0.0
    %147 = vmatprep.subr.mxu0 0.0
    %148 = vmatpush1.msra.mxu0 0.0
    %149 = vmatprep.subr.mxu0 0.0
    %150 = vmatpush1.msra.mxu0 0.0
    %151 = vmatprep.subr.mxu0 0.0
    %152 = vmatpush1.msra.mxu0 0.0
    %153 = vmatprep.mubr.f32.mxu0 0.0
    %154 = vmatmul.mubr.f32.gmra.mrb[0].mxu0 %v39
    %v155 = vpop.f32.mrb[0].mxu0
    %v156 = vadd.f32 0.0, %v155
    %v157 = vpop.f32.mrb[0].mxu0
    %v158 = vadd.f32 0.0, %v157
    %159 = vmatprep.mubr.f32.mxu0 0.0
    %160 = vmatmul.mubr.f32.gmra.mrb[0].mxu0 %v40
    %v161 = vpop.f32.mrb[0].mxu0
    %v162 = vadd.f32 0.0, %v161
    %v163 = vpop.f32.mrb[0].mxu0
    %v164 = vadd.f32 0.0, %v163
    %165 = vdwg.mxu0
    %166 = vmatprep.subr.mxu0 0.0
    %167 = vmatpush1.msra.mxu0 %v43
    %168 = vmatprep.subr.mxu0 0.0
    %169 = vmatpush1.msra.mxu0 %v46
    %170 = vmatprep.subr.mxu0 0.0
    %171 = vmatpush1.msra.mxu0 %v49
    %172 = vmatprep.subr.mxu0 0.0
    %173 = vmatpush1.msra.mxu0 %v52
    %174 = vmatprep.subr.mxu0 0.0
    %175 = vmatpush1.msra.mxu0 %v55
    %176 = vmatprep.subr.mxu0 0.0
    %177 = vmatpush1.msra.mxu0 %v58
    %178 = vmatprep.subr.mxu0 0.0
    %179 = vmatpush1.msra.mxu0 %v61
    %180 = vmatprep.subr.mxu0 0.0
    %181 = vmatpush1.msra.mxu0 %v64
    %182 = vmatprep.subr.mxu0 0.0
    %183 = vmatpush1.msra.mxu0 %v67
    %184 = vmatprep.subr.mxu0 0.0
    %185 = vmatpush1.msra.mxu0 %v70
    %186 = vmatprep.subr.mxu0 0.0
    %187 = vmatpush1.msra.mxu0 %v73
    %188 = vmatprep.subr.mxu0 0.0
    %189 = vmatpush1.msra.mxu0 %v76
    %190 = vmatprep.subr.mxu0 0.0
    %191 = vmatpush1.msra.mxu0 %v79
    %192 = vmatprep.subr.mxu0 0.0
    %193 = vmatpush1.msra.mxu0 %v82
    %194 = vmatprep.subr.mxu0 0.0
    %195 = vmatpush1.msra.mxu0 %v85
    %196 = vmatprep.subr.mxu0 0.0
    %197 = vmatpush1.msra.mxu0 %v88
    %198 = vmatprep.subr.mxu0 0.0
    %199 = vmatpush1.msra.mxu0 0.0
    %200 = vmatprep.subr.mxu0 0.0
    %201 = vmatpush1.msra.mxu0 0.0
    %202 = vmatprep.subr.mxu0 0.0
    %203 = vmatpush1.msra.mxu0 0.0
    %204 = vmatprep.subr.mxu0 0.0
    %205 = vmatpush1.msra.mxu0 0.0
    %206 = vmatprep.subr.mxu0 0.0
    %207 = vmatpush1.msra.mxu0 0.0
    %208 = vmatprep.subr.mxu0 0.0
    %209 = vmatpush1.msra.mxu0 0.0
    %210 = vmatprep.subr.mxu0 0.0
    %211 = vmatpush1.msra.mxu0 0.0
    %212 = vmatprep.subr.mxu0 0.0
    %213 = vmatpush1.msra.mxu0 0.0
    %214 = vmatprep.subr.mxu0 0.0
    %215 = vmatpush1.msra.mxu0 0.0
    %216 = vmatprep.subr.mxu0 0.0
    %217 = vmatpush1.msra.mxu0 0.0
    %218 = vmatprep.subr.mxu0 0.0
    %219 = vmatpush1.msra.mxu0 0.0
    %220 = vmatprep.subr.mxu0 0.0
    %221 = vmatpush1.msra.mxu0 0.0
    %222 = vmatprep.subr.mxu0 0.0
    %223 = vmatpush1.msra.mxu0 0.0
    %224 = vmatprep.subr.mxu0 0.0
    %225 = vmatpush1.msra.mxu0 0.0
    %226 = vmatprep.subr.mxu0 0.0
    %227 = vmatpush1.msra.mxu0 0.0
    %228 = vmatprep.subr.mxu0 0.0
    %229 = vmatpush1.msra.mxu0 0.0
    %230 = vmatprep.mubr.f32.mxu0 0.0
    %231 = vmatmul.mubr.f32.gmra.mrb[0].mxu0 %v39
    %v232 = vpop.f32.mrb[0].mxu0
    %v233 = vadd.f32 0.0, %v232
    %v234 = vpop.f32.mrb[0].mxu0
    %235 = vmatprep.mubr.f32.mxu0 0.0
    %236 = vmatmul.mubr.f32.gmra.mrb[0].mxu0 %v40
    %v237 = vpop.f32.mrb[0].mxu0
    %v238 = vadd.f32 0.0, %v237
    %v239 = vpop.f32.mrb[0].mxu0
    %240 = vdwg.mxu0
    %s241 = scalar_lea.vmem [#allocation2], 1536
    %v242 = vld [vmem:[%s241] ss:$8 sm:$0x7]
    %v243 = vld [vmem:[#allocation2 + $0x601] ss:$0 sm:$0xff]
    %v244 = vld [vmem:[#allocation2 + $0x602] ss:$0 sm:$0xff]
    %v245 = vxor.u32 %v156, 2147483648
    %v246 = vxor.u32 %v158, 2147483648
    %v247 = vmul.f32 %v245, 1.442695
    %v248 = vpow.pop %v247
    %v249 = vmul.f32 %v246, 1.442695
    %v250 = vpow.pop %v249
    %v251 = vadd.f32 %v248, 1.0
    %v252 = vadd.f32 %v250, 1.0
    %v253 = vrcp.pop %v251
    %v254 = vmul.f32 1.0, %v253
    %v255 = vrcp.pop %v252
    %v256 = vmul.f32 1.0, %v255
    %v257 = vmul.f32 %v254, %v243
    %v258 = vadd.f32 %v233, %v257
    %v259 = vtanh.pop %v258
    %v260 = vsub.f32 1.0, %v256
    %v261 = vmul.f32 %v260, %v259
    %v262 = vld [vmem:[#allocation2 + $0x300] sm:$0xff]
    %v263 = vld [vmem:[#allocation2 + $0x308] sm:$0xff]
    %v264 = vld [vmem:[#allocation2 + $0x310] sm:$0xff]
    %v265 = vld [vmem:[#allocation2 + $0x318] sm:$0xff]
    %v266 = vld [vmem:[#allocation2 + $0x320] sm:$0xff]
    %v267 = vld [vmem:[#allocation2 + $0x328] sm:$0xff]
    %v268 = vld [vmem:[#allocation2 + $0x330] sm:$0xff]
    %v269 = vld [vmem:[#allocation2 + $0x338] sm:$0xff]
    %v270 = vld [vmem:[#allocation2 + $0x340] sm:$0xff]
    %v271 = vld [vmem:[#allocation2 + $0x348] sm:$0xff]
    %v272 = vld [vmem:[#allocation2 + $0x350] sm:$0xff]
    %v273 = vld [vmem:[#allocation2 + $0x358] sm:$0xff]
    %v274 = vld [vmem:[#allocation2 + $0x360] sm:$0xff]
    %v275 = vld [vmem:[#allocation2 + $0x368] sm:$0xff]
    %v276 = vld [vmem:[#allocation2 + $0x370] sm:$0xff]
    %v277 = vld [vmem:[#allocation2 + $0x378] sm:$0xff]
    %v278 = vld [vmem:[#allocation2 + $0x380] sm:$0xff]
    %v279 = vld [vmem:[#allocation2 + $0x388] sm:$0xff]
    %v280 = vld [vmem:[#allocation2 + $0x390] sm:$0xff]
    %v281 = vld [vmem:[#allocation2 + $0x398] sm:$0xff]
    %v282 = vld [vmem:[#allocation2 + $0x3a0] sm:$0xff]
    %v283 = vld [vmem:[#allocation2 + $0x3a8] sm:$0xff]
    %v284 = vld [vmem:[#allocation2 + $0x3b0] sm:$0xff]
    %v285 = vld [vmem:[#allocation2 + $0x3b8] sm:$0xff]
    %v286 = vld [vmem:[#allocation2 + $0x3c0] sm:$0xff]
    %v287 = vld [vmem:[#allocation2 + $0x3c8] sm:$0xff]
    %v288 = vld [vmem:[#allocation2 + $0x3d0] sm:$0xff]
    %v289 = vld [vmem:[#allocation2 + $0x3d8] sm:$0xff]
    %v290 = vld [vmem:[#allocation2 + $0x3e0] sm:$0xff]
    %v291 = vld [vmem:[#allocation2 + $0x3e8] sm:$0xff]
    %v292 = vld [vmem:[#allocation2 + $0x3f0] sm:$0xff]
    %v293 = vld [vmem:[#allocation2 + $0x3f8] sm:$0xff]
    %v294 = vld [vmem:[#allocation2 + $0x400] sm:$0xff]
    %v295 = vld [vmem:[#allocation2 + $0x408] sm:$0xff]
    %v296 = vld [vmem:[#allocation2 + $0x410] sm:$0xff]
    %v297 = vld [vmem:[#allocation2 + $0x418] sm:$0xff]
    %v298 = vld [vmem:[#allocation2 + $0x420] sm:$0xff]
    %v299 = vld [vmem:[#allocation2 + $0x428] sm:$0xff]
    %v300 = vld [vmem:[#allocation2 + $0x430] sm:$0xff]
    %v301 = vld [vmem:[#allocation2 + $0x438] sm:$0xff]
    %v302 = vld [vmem:[#allocation2 + $0x440] sm:$0xff]
    %v303 = vld [vmem:[#allocation2 + $0x448] sm:$0xff]
    %v304 = vld [vmem:[#allocation2 + $0x450] sm:$0xff]
    %v305 = vld [vmem:[#allocation2 + $0x458] sm:$0xff]
    %v306 = vld [vmem:[#allocation2 + $0x460] sm:$0xff]
    %v307 = vld [vmem:[#allocation2 + $0x468] sm:$0xff]
    %v308 = vld [vmem:[#allocation2 + $0x470] sm:$0xff]
    %v309 = vld [vmem:[#allocation2 + $0x478] sm:$0xff]
    %v311 = vlaneseq
    %v312 = vshrl.u32 %v311, 7
    %v313 = vsub.s32 0, %v312
    %v314 = vrot.slane %v242, %v313
    %v315 = vlaneseq
    %v316 = vshrl.u32 %v315, 7
    %v317 = vsub.s32 1, %v316
    %v318 = vrot.slane %v242, %v317
    %v319 = vlaneseq
    %v320 = vshrl.u32 %v319, 7
    %v321 = vsub.s32 2, %v320
    %v322 = vrot.slane %v242, %v321
    %326 = vmatprep.subr.mxu0 %v263
    %327 = vmatpush1.msra.mxu0 %v262
    %328 = vmatprep.subr.mxu0 %v266
    %329 = vmatpush1.msra.mxu0 %v265
    %330 = vmatprep.subr.mxu0 %v269
    %331 = vmatpush1.msra.mxu0 %v268
    %332 = vmatprep.subr.mxu0 %v272
    %333 = vmatpush1.msra.mxu0 %v271
    %334 = vmatprep.subr.mxu0 %v275
    %335 = vmatpush1.msra.mxu0 %v274
    %336 = vmatprep.subr.mxu0 %v278
    %337 = vmatpush1.msra.mxu0 %v277
    %338 = vmatprep.subr.mxu0 %v281
    %339 = vmatpush1.msra.mxu0 %v280
    %340 = vmatprep.subr.mxu0 %v284
    %341 = vmatpush1.msra.mxu0 %v283
    %342 = vmatprep.subr.mxu0 %v287
    %343 = vmatpush1.msra.mxu0 %v286
    %344 = vmatprep.subr.mxu0 %v290
    %345 = vmatpush1.msra.mxu0 %v289
    %346 = vmatprep.subr.mxu0 %v293
    %347 = vmatpush1.msra.mxu0 %v292
    %348 = vmatprep.subr.mxu0 %v296
    %349 = vmatpush1.msra.mxu0 %v295
    %350 = vmatprep.subr.mxu0 %v299
    %351 = vmatpush1.msra.mxu0 %v298
    %352 = vmatprep.subr.mxu0 %v302
    %353 = vmatpush1.msra.mxu0 %v301
    %354 = vmatprep.subr.mxu0 %v305
    %355 = vmatpush1.msra.mxu0 %v304
    %356 = vmatprep.subr.mxu0 %v308
    %357 = vmatpush1.msra.mxu0 %v307
    %358 = vmatprep.subr.mxu0 0.0
    %359 = vmatpush1.msra.mxu0 0.0
    %360 = vmatprep.subr.mxu0 0.0
    %361 = vmatpush1.msra.mxu0 0.0
    %362 = vmatprep.subr.mxu0 0.0
    %363 = vmatpush1.msra.mxu0 0.0
    %364 = vmatprep.subr.mxu0 0.0
    %365 = vmatpush1.msra.mxu0 0.0
    %366 = vmatprep.subr.mxu0 0.0
    %367 = vmatpush1.msra.mxu0 0.0
    %368 = vmatprep.subr.mxu0 0.0
    %369 = vmatpush1.msra.mxu0 0.0
    %370 = vmatprep.subr.mxu0 0.0
    %371 = vmatpush1.msra.mxu0 0.0
    %372 = vmatprep.subr.mxu0 0.0
    %373 = vmatpush1.msra.mxu0 0.0
    %374 = vmatprep.subr.mxu0 0.0
    %375 = vmatpush1.msra.mxu0 0.0
    %376 = vmatprep.subr.mxu0 0.0
    %377 = vmatpush1.msra.mxu0 0.0
    %378 = vmatprep.subr.mxu0 0.0
    %379 = vmatpush1.msra.mxu0 0.0
    %380 = vmatprep.subr.mxu0 0.0
    %381 = vmatpush1.msra.mxu0 0.0
    %382 = vmatprep.subr.mxu0 0.0
    %383 = vmatpush1.msra.mxu0 0.0
    %384 = vmatprep.subr.mxu0 0.0
    %385 = vmatpush1.msra.mxu0 0.0
    %386 = vmatprep.subr.mxu0 0.0
    %387 = vmatpush1.msra.mxu0 0.0
    %388 = vmatprep.subr.mxu0 0.0
    %389 = vmatpush1.msra.mxu0 0.0
    %390 = vmatprep.mubr.f32.mxu0 0.0
    %391 = vmatmul.mubr.f32.gmra.mrb[0].mxu0 %v261
    %v392 = vpop.f32.mrb[0].mxu0
    %v393 = vadd.f32 %v314, %v392
    %v394 = vpop.f32.mrb[0].mxu0
    %v395 = vadd.f32 %v318, %v394
    %396 = vdwg.mxu0
    %397 = vmatprep.subr.mxu0 0.0
    %398 = vmatpush1.msra.mxu0 %v264
    %399 = vmatprep.subr.mxu0 0.0
    %400 = vmatpush1.msra.mxu0 %v267
    %401 = vmatprep.subr.mxu0 0.0
    %402 = vmatpush1.msra.mxu0 %v270
    %403 = vmatprep.subr.mxu0 0.0
    %404 = vmatpush1.msra.mxu0 %v273
    %405 = vmatprep.subr.mxu0 0.0
    %406 = vmatpush1.msra.mxu0 %v276
    %407 = vmatprep.subr.mxu0 0.0
    %408 = vmatpush1.msra.mxu0 %v279
    %409 = vmatprep.subr.mxu0 0.0
    %410 = vmatpush1.msra.mxu0 %v282
    %411 = vmatprep.subr.mxu0 0.0
    %412 = vmatpush1.msra.mxu0 %v285
    %413 = vmatprep.subr.mxu0 0.0
    %414 = vmatpush1.msra.mxu0 %v288
    %415 = vmatprep.subr.mxu0 0.0
    %416 = vmatpush1.msra.mxu0 %v291
    %417 = vmatprep.subr.mxu0 0.0
    %418 = vmatpush1.msra.mxu0 %v294
    %419 = vmatprep.subr.mxu0 0.0
    %420 = vmatpush1.msra.mxu0 %v297
    %421 = vmatprep.subr.mxu0 0.0
    %422 = vmatpush1.msra.mxu0 %v300
    %423 = vmatprep.subr.mxu0 0.0
    %424 = vmatpush1.msra.mxu0 %v303
    %425 = vmatprep.subr.mxu0 0.0
    %426 = vmatpush1.msra.mxu0 %v306
    %427 = vmatprep.subr.mxu0 0.0
    %428 = vmatpush1.msra.mxu0 %v309
    %429 = vmatprep.subr.mxu0 0.0
    %430 = vmatpush1.msra.mxu0 0.0
    %431 = vmatprep.subr.mxu0 0.0
    %432 = vmatpush1.msra.mxu0 0.0
    %433 = vmatprep.subr.mxu0 0.0
    %434 = vmatpush1.msra.mxu0 0.0
    %435 = vmatprep.subr.mxu0 0.0
    %436 = vmatpush1.msra.mxu0 0.0
    %437 = vmatprep.subr.mxu0 0.0
    %438 = vmatpush1.msra.mxu0 0.0
    %439 = vmatprep.subr.mxu0 0.0
    %440 = vmatpush1.msra.mxu0 0.0
    %441 = vmatprep.subr.mxu0 0.0
    %442 = vmatpush1.msra.mxu0 0.0
    %443 = vmatprep.subr.mxu0 0.0
    %444 = vmatpush1.msra.mxu0 0.0
    %445 = vmatprep.subr.mxu0 0.0
    %446 = vmatpush1.msra.mxu0 0.0
    %447 = vmatprep.subr.mxu0 0.0
    %448 = vmatpush1.msra.mxu0 0.0
    %449 = vmatprep.subr.mxu0 0.0
    %450 = vmatpush1.msra.mxu0 0.0
    %451 = vmatprep.subr.mxu0 0.0
    %452 = vmatpush1.msra.mxu0 0.0
    %453 = vmatprep.subr.mxu0 0.0
    %454 = vmatpush1.msra.mxu0 0.0
    %455 = vmatprep.subr.mxu0 0.0
    %456 = vmatpush1.msra.mxu0 0.0
    %457 = vmatprep.subr.mxu0 0.0
    %458 = vmatpush1.msra.mxu0 0.0
    %459 = vmatprep.subr.mxu0 0.0
    %460 = vmatpush1.msra.mxu0 0.0
    %461 = vmatprep.mubr.f32.mxu0 0.0
    %462 = vmatmul.mubr.f32.gmra.mrb[0].mxu0 %v261
    %v463 = vpop.f32.mrb[0].mxu0
    %v464 = vadd.f32 %v322, %v463
    %v465 = vpop.f32.mrb[0].mxu0
    %466 = vdwg.mxu0
    %v467 = vxor.u32 %v393, 2147483648
    %v468 = vxor.u32 %v395, 2147483648
    %v469 = vmul.f32 %v467, 1.442695
    %v470 = vpow.pop %v469
    %v471 = vmul.f32 %v468, 1.442695
    %v472 = vpow.pop %v471
    %v473 = vadd.f32 %v470, 1.0
    %v474 = vadd.f32 %v472, 1.0
    %v475 = vrcp.pop %v473
    %v476 = vmul.f32 1.0, %v475
    %v477 = vrcp.pop %v474
    %v478 = vmul.f32 1.0, %v477
    %v479 = vmul.f32 %v476, %v244
    %v480 = vadd.f32 %v464, %v479
    %v481 = vtanh.pop %v480
    %v482 = vsub.f32 1.0, %v478
    %v483 = vmul.f32 %v482, %v481
    %v484 = vld [vmem:[#allocation2 + $0x180] sm:$0xff]
    %v485 = vld [vmem:[#allocation2 + $0x188] sm:$0xff]
    %v486 = vld [vmem:[#allocation2 + $0x190] sm:$0xff]
    %v487 = vld [vmem:[#allocation2 + $0x198] sm:$0xff]
    %v488 = vld [vmem:[#allocation2 + $0x1a0] sm:$0xff]
    %v489 = vld [vmem:[#allocation2 + $0x1a8] sm:$0xff]
    %v490 = vld [vmem:[#allocation2 + $0x1b0] sm:$0xff]
    %v491 = vld [vmem:[#allocation2 + $0x1b8] sm:$0xff]
    %v492 = vld [vmem:[#allocation2 + $0x1c0] sm:$0xff]
    %v493 = vld [vmem:[#allocation2 + $0x1c8] sm:$0xff]
    %v494 = vld [vmem:[#allocation2 + $0x1d0] sm:$0xff]
    %v495 = vld [vmem:[#allocation2 + $0x1d8] sm:$0xff]
    %v496 = vld [vmem:[#allocation2 + $0x1e0] sm:$0xff]
    %v497 = vld [vmem:[#allocation2 + $0x1e8] sm:$0xff]
    %v498 = vld [vmem:[#allocation2 + $0x1f0] sm:$0xff]
    %v499 = vld [vmem:[#allocation2 + $0x1f8] sm:$0xff]
    %v500 = vld [vmem:[#allocation2 + $0x200] sm:$0xff]
    %v501 = vld [vmem:[#allocation2 + $0x208] sm:$0xff]
    %v502 = vld [vmem:[#allocation2 + $0x210] sm:$0xff]
    %v503 = vld [vmem:[#allocation2 + $0x218] sm:$0xff]
    %v504 = vld [vmem:[#allocation2 + $0x220] sm:$0xff]
    %v505 = vld [vmem:[#allocation2 + $0x228] sm:$0xff]
    %v506 = vld [vmem:[#allocation2 + $0x230] sm:$0xff]
    %v507 = vld [vmem:[#allocation2 + $0x238] sm:$0xff]
    %v508 = vld [vmem:[#allocation2 + $0x240] sm:$0xff]
    %v509 = vld [vmem:[#allocation2 + $0x248] sm:$0xff]
    %v510 = vld [vmem:[#allocation2 + $0x250] sm:$0xff]
    %v511 = vld [vmem:[#allocation2 + $0x258] sm:$0xff]
    %v512 = vld [vmem:[#allocation2 + $0x260] sm:$0xff]
    %v513 = vld [vmem:[#allocation2 + $0x268] sm:$0xff]
    %v514 = vld [vmem:[#allocation2 + $0x270] sm:$0xff]
    %v515 = vld [vmem:[#allocation2 + $0x278] sm:$0xff]
    %v516 = vld [vmem:[#allocation2 + $0x280] sm:$0xff]
    %v517 = vld [vmem:[#allocation2 + $0x288] sm:$0xff]
    %v518 = vld [vmem:[#allocation2 + $0x290] sm:$0xff]
    %v519 = vld [vmem:[#allocation2 + $0x298] sm:$0xff]
    %v520 = vld [vmem:[#allocation2 + $0x2a0] sm:$0xff]
    %v521 = vld [vmem:[#allocation2 + $0x2a8] sm:$0xff]
    %v522 = vld [vmem:[#allocation2 + $0x2b0] sm:$0xff]
    %v523 = vld [vmem:[#allocation2 + $0x2b8] sm:$0xff]
    %v524 = vld [vmem:[#allocation2 + $0x2c0] sm:$0xff]
    %v525 = vld [vmem:[#allocation2 + $0x2c8] sm:$0xff]
    %v526 = vld [vmem:[#allocation2 + $0x2d0] sm:$0xff]
    %v527 = vld [vmem:[#allocation2 + $0x2d8] sm:$0xff]
    %v528 = vld [vmem:[#allocation2 + $0x2e0] sm:$0xff]
    %v529 = vld [vmem:[#allocation2 + $0x2e8] sm:$0xff]
    %v530 = vld [vmem:[#allocation2 + $0x2f0] sm:$0xff]
    %v531 = vld [vmem:[#allocation2 + $0x2f8] sm:$0xff]
    %532 = vmatprep.subr.mxu0 %v485
    %533 = vmatpush1.msra.mxu0 %v484
    %534 = vmatprep.subr.mxu0 %v488
    %535 = vmatpush1.msra.mxu0 %v487
    %536 = vmatprep.subr.mxu0 %v491
    %537 = vmatpush1.msra.mxu0 %v490
    %538 = vmatprep.subr.mxu0 %v494
    %539 = vmatpush1.msra.mxu0 %v493
    %540 = vmatprep.subr.mxu0 %v497
    %541 = vmatpush1.msra.mxu0 %v496
    %542 = vmatprep.subr.mxu0 %v500
    %543 = vmatpush1.msra.mxu0 %v499
    %544 = vmatprep.subr.mxu0 %v503
    %545 = vmatpush1.msra.mxu0 %v502
    %546 = vmatprep.subr.mxu0 %v506
    %547 = vmatpush1.msra.mxu0 %v505
    %548 = vmatprep.subr.mxu0 %v509
    %549 = vmatpush1.msra.mxu0 %v508
    %550 = vmatprep.subr.mxu0 %v512
    %551 = vmatpush1.msra.mxu0 %v511
    %552 = vmatprep.subr.mxu0 %v515
    %553 = vmatpush1.msra.mxu0 %v514
    %554 = vmatprep.subr.mxu0 %v518
    %555 = vmatpush1.msra.mxu0 %v517
    %556 = vmatprep.subr.mxu0 %v521
    %557 = vmatpush1.msra.mxu0 %v520
    %558 = vmatprep.subr.mxu0 %v524
    %559 = vmatpush1.msra.mxu0 %v523
    %560 = vmatprep.subr.mxu0 %v527
    %561 = vmatpush1.msra.mxu0 %v526
    %562 = vmatprep.subr.mxu0 %v530
    %563 = vmatpush1.msra.mxu0 %v529
    %564 = vmatprep.subr.mxu0 0.0
    %565 = vmatpush1.msra.mxu0 0.0
    %566 = vmatprep.subr.mxu0 0.0
    %567 = vmatpush1.msra.mxu0 0.0
    %568 = vmatprep.subr.mxu0 0.0
    %569 = vmatpush1.msra.mxu0 0.0
    %570 = vmatprep.subr.mxu0 0.0
    %571 = vmatpush1.msra.mxu0 0.0
    %572 = vmatprep.subr.mxu0 0.0
    %573 = vmatpush1.msra.mxu0 0.0
    %574 = vmatprep.subr.mxu0 0.0
    %575 = vmatpush1.msra.mxu0 0.0
    %576 = vmatprep.subr.mxu0 0.0
    %577 = vmatpush1.msra.mxu0 0.0
    %578 = vmatprep.subr.mxu0 0.0
    %579 = vmatpush1.msra.mxu0 0.0
    %580 = vmatprep.subr.mxu0 0.0
    %581 = vmatpush1.msra.mxu0 0.0
    %582 = vmatprep.subr.mxu0 0.0
    %583 = vmatpush1.msra.mxu0 0.0
    %584 = vmatprep.subr.mxu0 0.0
    %585 = vmatpush1.msra.mxu0 0.0
    %586 = vmatprep.subr.mxu0 0.0
    %587 = vmatpush1.msra.mxu0 0.0
    %588 = vmatprep.subr.mxu0 0.0
    %589 = vmatpush1.msra.mxu0 0.0
    %590 = vmatprep.subr.mxu0 0.0
    %591 = vmatpush1.msra.mxu0 0.0
    %592 = vmatprep.subr.mxu0 0.0
    %593 = vmatpush1.msra.mxu0 0.0
    %594 = vmatprep.subr.mxu0 0.0
    %595 = vmatpush1.msra.mxu0 0.0
    %596 = vmatprep.mubr.f32.mxu0 0.0
    %597 = vmatmul.mubr.f32.gmra.mrb[0].mxu0 %v261
    %v598 = vpop.f32.mrb[0].mxu0
    %v599 = vadd.f32 0.0, %v598
    %v600 = vpop.f32.mrb[0].mxu0
    %v601 = vadd.f32 0.0, %v600
    %602 = vdwg.mxu0
    %603 = vmatprep.subr.mxu0 0.0
    %604 = vmatpush1.msra.mxu0 %v486
    %605 = vmatprep.subr.mxu0 0.0
    %606 = vmatpush1.msra.mxu0 %v489
    %607 = vmatprep.subr.mxu0 0.0
    %608 = vmatpush1.msra.mxu0 %v492
    %609 = vmatprep.subr.mxu0 0.0
    %610 = vmatpush1.msra.mxu0 %v495
    %611 = vmatprep.subr.mxu0 0.0
    %612 = vmatpush1.msra.mxu0 %v498
    %613 = vmatprep.subr.mxu0 0.0
    %614 = vmatpush1.msra.mxu0 %v501
    %615 = vmatprep.subr.mxu0 0.0
    %616 = vmatpush1.msra.mxu0 %v504
    %617 = vmatprep.subr.mxu0 0.0
    %618 = vmatpush1.msra.mxu0 %v507
    %619 = vmatprep.subr.mxu0 0.0
    %620 = vmatpush1.msra.mxu0 %v510
    %621 = vmatprep.subr.mxu0 0.0
    %622 = vmatpush1.msra.mxu0 %v513
    %623 = vmatprep.subr.mxu0 0.0
    %624 = vmatpush1.msra.mxu0 %v516
    %625 = vmatprep.subr.mxu0 0.0
    %626 = vmatpush1.msra.mxu0 %v519
    %627 = vmatprep.subr.mxu0 0.0
    %628 = vmatpush1.msra.mxu0 %v522
    %629 = vmatprep.subr.mxu0 0.0
    %630 = vmatpush1.msra.mxu0 %v525
    %631 = vmatprep.subr.mxu0 0.0
    %632 = vmatpush1.msra.mxu0 %v528
    %633 = vmatprep.subr.mxu0 0.0
    %634 = vmatpush1.msra.mxu0 %v531
    %635 = vmatprep.subr.mxu0 0.0
    %636 = vmatpush1.msra.mxu0 0.0
    %637 = vmatprep.subr.mxu0 0.0
    %638 = vmatpush1.msra.mxu0 0.0
    %639 = vmatprep.subr.mxu0 0.0
    %640 = vmatpush1.msra.mxu0 0.0
    %641 = vmatprep.subr.mxu0 0.0
    %642 = vmatpush1.msra.mxu0 0.0
    %643 = vmatprep.subr.mxu0 0.0
    %644 = vmatpush1.msra.mxu0 0.0
    %645 = vmatprep.subr.mxu0 0.0
    %646 = vmatpush1.msra.mxu0 0.0
    %647 = vmatprep.subr.mxu0 0.0
    %648 = vmatpush1.msra.mxu0 0.0
    %649 = vmatprep.subr.mxu0 0.0
    %650 = vmatpush1.msra.mxu0 0.0
    %651 = vmatprep.subr.mxu0 0.0
    %652 = vmatpush1.msra.mxu0 0.0
    %653 = vmatprep.subr.mxu0 0.0
    %654 = vmatpush1.msra.mxu0 0.0
    %655 = vmatprep.subr.mxu0 0.0
    %656 = vmatpush1.msra.mxu0 0.0
    %657 = vmatprep.subr.mxu0 0.0
    %658 = vmatpush1.msra.mxu0 0.0
    %659 = vmatprep.subr.mxu0 0.0
    %660 = vmatpush1.msra.mxu0 0.0
    %661 = vmatprep.subr.mxu0 0.0
    %662 = vmatpush1.msra.mxu0 0.0
    %663 = vmatprep.subr.mxu0 0.0
    %664 = vmatpush1.msra.mxu0 0.0
    %665 = vmatprep.subr.mxu0 0.0
    %666 = vmatpush1.msra.mxu0 0.0
    %667 = vmatprep.mubr.f32.mxu0 0.0
    %668 = vmatmul.mubr.f32.gmra.mrb[0].mxu0 %v261
    %v669 = vpop.f32.mrb[0].mxu0
    %v670 = vadd.f32 0.0, %v669
    %v671 = vpop.f32.mrb[0].mxu0
    %672 = vdwg.mxu0
    %v675 = vrot.slane %v599, 6
    %v676 = vrot.slane %v601, 6
    %v679 = vadd.f32 %v156, %v675
    %v680 = vadd.f32 %v158, %v676
    %v681 = vxor.u32 %v679, 2147483648
    %v682 = vxor.u32 %v680, 2147483648
    %v683 = vmul.f32 %v681, 1.442695
    %v684 = vpow.pop %v683
    %v685 = vmul.f32 %v682, 1.442695
    %v686 = vpow.pop %v685
    %v687 = vadd.f32 %v684, 1.0
    %v688 = vadd.f32 %v686, 1.0
    %v689 = vrcp.pop %v687
    %v690 = vmul.f32 1.0, %v689
    %v691 = vrcp.pop %v688
    %v692 = vmul.f32 1.0, %v691
    %v693 = vadd.f32 %v670, %v243
    %v695 = vrot.slane %v693, 6
    %v697 = vmul.f32 %v690, %v695
    %v698 = vadd.f32 %v233, %v697
    %v699 = vtanh.pop %v698
    %v700 = vsub.f32 1.0, %v692
    %v701 = vmul.f32 %v700, %v699
    %v703 = vrot.slane %v261, 6
    %v705 = vmul.f32 %v692, %v703
    %v706 = vadd.f32 %v701, %v705
    %v708 = vrot.slane %v706, 2
    %710 = vmatprep.subr.mxu0 %v263
    %711 = vmatpush1.msra.mxu0 %v262
    %712 = vmatprep.subr.mxu0 %v266
    %713 = vmatpush1.msra.mxu0 %v265
    %714 = vmatprep.subr.mxu0 %v269
    %715 = vmatpush1.msra.mxu0 %v268
    %716 = vmatprep.subr.mxu0 %v272
    %717 = vmatpush1.msra.mxu0 %v271
    %718 = vmatprep.subr.mxu0 %v275
    %719 = vmatpush1.msra.mxu0 %v274
    %720 = vmatprep.subr.mxu0 %v278
    %721 = vmatpush1.msra.mxu0 %v277
    %722 = vmatprep.subr.mxu0 %v281
    %723 = vmatpush1.msra.mxu0 %v280
    %724 = vmatprep.subr.mxu0 %v284
    %725 = vmatpush1.msra.mxu0 %v283
    %726 = vmatprep.subr.mxu0 %v287
    %727 = vmatpush1.msra.mxu0 %v286
    %728 = vmatprep.subr.mxu0 %v290
    %729 = vmatpush1.msra.mxu0 %v289
    %730 = vmatprep.subr.mxu0 %v293
    %731 = vmatpush1.msra.mxu0 %v292
    %732 = vmatprep.subr.mxu0 %v296
    %733 = vmatpush1.msra.mxu0 %v295
    %734 = vmatprep.subr.mxu0 %v299
    %735 = vmatpush1.msra.mxu0 %v298
    %736 = vmatprep.subr.mxu0 %v302
    %737 = vmatpush1.msra.mxu0 %v301
    %738 = vmatprep.subr.mxu0 %v305
    %739 = vmatpush1.msra.mxu0 %v304
    %740 = vmatprep.subr.mxu0 %v308
    %741 = vmatpush1.msra.mxu0 %v307
    %742 = vmatprep.subr.mxu0 0.0
    %743 = vmatpush1.msra.mxu0 0.0
    %744 = vmatprep.subr.mxu0 0.0
    %745 = vmatpush1.msra.mxu0 0.0
    %746 = vmatprep.subr.mxu0 0.0
    %747 = vmatpush1.msra.mxu0 0.0
    %748 = vmatprep.subr.mxu0 0.0
    %749 = vmatpush1.msra.mxu0 0.0
    %750 = vmatprep.subr.mxu0 0.0
    %751 = vmatpush1.msra.mxu0 0.0
    %752 = vmatprep.subr.mxu0 0.0
    %753 = vmatpush1.msra.mxu0 0.0
    %754 = vmatprep.subr.mxu0 0.0
    %755 = vmatpush1.msra.mxu0 0.0
    %756 = vmatprep.subr.mxu0 0.0
    %757 = vmatpush1.msra.mxu0 0.0
    %758 = vmatprep.subr.mxu0 0.0
    %759 = vmatpush1.msra.mxu0 0.0
    %760 = vmatprep.subr.mxu0 0.0
    %761 = vmatpush1.msra.mxu0 0.0
    %762 = vmatprep.subr.mxu0 0.0
    %763 = vmatpush1.msra.mxu0 0.0
    %764 = vmatprep.subr.mxu0 0.0
    %765 = vmatpush1.msra.mxu0 0.0
    %766 = vmatprep.subr.mxu0 0.0
    %767 = vmatpush1.msra.mxu0 0.0
    %768 = vmatprep.subr.mxu0 0.0
    %769 = vmatpush1.msra.mxu0 0.0
    %770 = vmatprep.subr.mxu0 0.0
    %771 = vmatpush1.msra.mxu0 0.0
    %772 = vmatprep.subr.mxu0 0.0
    %773 = vmatpush1.msra.mxu0 0.0
    %774 = vmatprep.mubr.f32.mxu0 0.0
    %775 = vmatmul.mubr.f32.gmra.mrb[0].mxu0 %v708
    %v776 = vpop.f32.mrb[0].mxu0
    %v777 = vadd.f32 %v314, %v776
    %v778 = vpop.f32.mrb[0].mxu0
    %v779 = vadd.f32 %v318, %v778
    %780 = vdwg.mxu0
    %781 = vmatprep.subr.mxu0 0.0
    %782 = vmatpush1.msra.mxu0 %v264
    %783 = vmatprep.subr.mxu0 0.0
    %784 = vmatpush1.msra.mxu0 %v267
    %785 = vmatprep.subr.mxu0 0.0
    %786 = vmatpush1.msra.mxu0 %v270
    %787 = vmatprep.subr.mxu0 0.0
    %788 = vmatpush1.msra.mxu0 %v273
    %789 = vmatprep.subr.mxu0 0.0
    %790 = vmatpush1.msra.mxu0 %v276
    %791 = vmatprep.subr.mxu0 0.0
    %792 = vmatpush1.msra.mxu0 %v279
    %793 = vmatprep.subr.mxu0 0.0
    %794 = vmatpush1.msra.mxu0 %v282
    %795 = vmatprep.subr.mxu0 0.0
    %796 = vmatpush1.msra.mxu0 %v285
    %797 = vmatprep.subr.mxu0 0.0
    %798 = vmatpush1.msra.mxu0 %v288
    %799 = vmatprep.subr.mxu0 0.0
    %800 = vmatpush1.msra.mxu0 %v291
    %801 = vmatprep.subr.mxu0 0.0
    %802 = vmatpush1.msra.mxu0 %v294
    %803 = vmatprep.subr.mxu0 0.0
    %804 = vmatpush1.msra.mxu0 %v297
    %805 = vmatprep.subr.mxu0 0.0
    %806 = vmatpush1.msra.mxu0 %v300
    %807 = vmatprep.subr.mxu0 0.0
    %808 = vmatpush1.msra.mxu0 %v303
    %809 = vmatprep.subr.mxu0 0.0
    %810 = vmatpush1.msra.mxu0 %v306
    %811 = vmatprep.subr.mxu0 0.0
    %812 = vmatpush1.msra.mxu0 %v309
    %813 = vmatprep.subr.mxu0 0.0
    %814 = vmatpush1.msra.mxu0 0.0
    %815 = vmatprep.subr.mxu0 0.0
    %816 = vmatpush1.msra.mxu0 0.0
    %817 = vmatprep.subr.mxu0 0.0
    %818 = vmatpush1.msra.mxu0 0.0
    %819 = vmatprep.subr.mxu0 0.0
    %820 = vmatpush1.msra.mxu0 0.0
    %821 = vmatprep.subr.mxu0 0.0
    %822 = vmatpush1.msra.mxu0 0.0
    %823 = vmatprep.subr.mxu0 0.0
    %824 = vmatpush1.msra.mxu0 0.0
    %825 = vmatprep.subr.mxu0 0.0
    %826 = vmatpush1.msra.mxu0 0.0
    %827 = vmatprep.subr.mxu0 0.0
    %828 = vmatpush1.msra.mxu0 0.0
    %829 = vmatprep.subr.mxu0 0.0
    %830 = vmatpush1.msra.mxu0 0.0
    %831 = vmatprep.subr.mxu0 0.0
    %832 = vmatpush1.msra.mxu0 0.0
    %833 = vmatprep.subr.mxu0 0.0
    %834 = vmatpush1.msra.mxu0 0.0
    %835 = vmatprep.subr.mxu0 0.0
    %836 = vmatpush1.msra.mxu0 0.0
    %837 = vmatprep.subr.mxu0 0.0
    %838 = vmatpush1.msra.mxu0 0.0
    %839 = vmatprep.subr.mxu0 0.0
    %840 = vmatpush1.msra.mxu0 0.0
    %841 = vmatprep.subr.mxu0 0.0
    %842 = vmatpush1.msra.mxu0 0.0
    %843 = vmatprep.subr.mxu0 0.0
    %844 = vmatpush1.msra.mxu0 0.0
    %845 = vmatprep.mubr.f32.mxu0 0.0
    %846 = vmatmul.mubr.f32.gmra.mrb[0].mxu0 %v708
    %v847 = vpop.f32.mrb[0].mxu0
    %v848 = vadd.f32 %v322, %v847
    %v849 = vpop.f32.mrb[0].mxu0
    %850 = vdwg.mxu0
    %v851 = vld [vmem:[#allocation2 + $0x480] sm:$0xff]
    %v852 = vld [vmem:[#allocation2 + $0x488] sm:$0xff]
    %v853 = vld [vmem:[#allocation2 + $0x490] sm:$0xff]
    %v854 = vld [vmem:[#allocation2 + $0x498] sm:$0xff]
    %v855 = vld [vmem:[#allocation2 + $0x4a0] sm:$0xff]
    %v856 = vld [vmem:[#allocation2 + $0x4a8] sm:$0xff]
    %v857 = vld [vmem:[#allocation2 + $0x4b0] sm:$0xff]
    %v858 = vld [vmem:[#allocation2 + $0x4b8] sm:$0xff]
    %v859 = vld [vmem:[#allocation2 + $0x4c0] sm:$0xff]
    %v860 = vld [vmem:[#allocation2 + $0x4c8] sm:$0xff]
    %v861 = vld [vmem:[#allocation2 + $0x4d0] sm:$0xff]
    %v862 = vld [vmem:[#allocation2 + $0x4d8] sm:$0xff]
    %v863 = vld [vmem:[#allocation2 + $0x4e0] sm:$0xff]
    %v864 = vld [vmem:[#allocation2 + $0x4e8] sm:$0xff]
    %v865 = vld [vmem:[#allocation2 + $0x4f0] sm:$0xff]
    %v866 = vld [vmem:[#allocation2 + $0x4f8] sm:$0xff]
    %v867 = vld [vmem:[#allocation2 + $0x500] sm:$0xff]
    %v868 = vld [vmem:[#allocation2 + $0x508] sm:$0xff]
    %v869 = vld [vmem:[#allocation2 + $0x510] sm:$0xff]
    %v870 = vld [vmem:[#allocation2 + $0x518] sm:$0xff]
    %v871 = vld [vmem:[#allocation2 + $0x520] sm:$0xff]
    %v872 = vld [vmem:[#allocation2 + $0x528] sm:$0xff]
    %v873 = vld [vmem:[#allocation2 + $0x530] sm:$0xff]
    %v874 = vld [vmem:[#allocation2 + $0x538] sm:$0xff]
    %v875 = vld [vmem:[#allocation2 + $0x540] sm:$0xff]
    %v876 = vld [vmem:[#allocation2 + $0x548] sm:$0xff]
    %v877 = vld [vmem:[#allocation2 + $0x550] sm:$0xff]
    %v878 = vld [vmem:[#allocation2 + $0x558] sm:$0xff]
    %v879 = vld [vmem:[#allocation2 + $0x560] sm:$0xff]
    %v880 = vld [vmem:[#allocation2 + $0x568] sm:$0xff]
    %v881 = vld [vmem:[#allocation2 + $0x570] sm:$0xff]
    %v882 = vld [vmem:[#allocation2 + $0x578] sm:$0xff]
    %v883 = vld [vmem:[#allocation2 + $0x580] sm:$0xff]
    %v884 = vld [vmem:[#allocation2 + $0x588] sm:$0xff]
    %v885 = vld [vmem:[#allocation2 + $0x590] sm:$0xff]
    %v886 = vld [vmem:[#allocation2 + $0x598] sm:$0xff]
    %v887 = vld [vmem:[#allocation2 + $0x5a0] sm:$0xff]
    %v888 = vld [vmem:[#allocation2 + $0x5a8] sm:$0xff]
    %v889 = vld [vmem:[#allocation2 + $0x5b0] sm:$0xff]
    %v890 = vld [vmem:[#allocation2 + $0x5b8] sm:$0xff]
    %v891 = vld [vmem:[#allocation2 + $0x5c0] sm:$0xff]
    %v892 = vld [vmem:[#allocation2 + $0x5c8] sm:$0xff]
    %v893 = vld [vmem:[#allocation2 + $0x5d0] sm:$0xff]
    %v894 = vld [vmem:[#allocation2 + $0x5d8] sm:$0xff]
    %v895 = vld [vmem:[#allocation2 + $0x5e0] sm:$0xff]
    %v896 = vld [vmem:[#allocation2 + $0x5e8] sm:$0xff]
    %v897 = vld [vmem:[#allocation2 + $0x5f0] sm:$0xff]
    %v898 = vld [vmem:[#allocation2 + $0x5f8] sm:$0xff]
    %899 = vmatprep.subr.mxu0 %v852
    %900 = vmatpush1.msra.mxu0 %v851
    %901 = vmatprep.subr.mxu0 %v855
    %902 = vmatpush1.msra.mxu0 %v854
    %903 = vmatprep.subr.mxu0 %v858
    %904 = vmatpush1.msra.mxu0 %v857
    %905 = vmatprep.subr.mxu0 %v861
    %906 = vmatpush1.msra.mxu0 %v860
    %907 = vmatprep.subr.mxu0 %v864
    %908 = vmatpush1.msra.mxu0 %v863
    %909 = vmatprep.subr.mxu0 %v867
    %910 = vmatpush1.msra.mxu0 %v866
    %911 = vmatprep.subr.mxu0 %v870
    %912 = vmatpush1.msra.mxu0 %v869
    %913 = vmatprep.subr.mxu0 %v873
    %914 = vmatpush1.msra.mxu0 %v872
    %915 = vmatprep.subr.mxu0 %v876
    %916 = vmatpush1.msra.mxu0 %v875
    %917 = vmatprep.subr.mxu0 %v879
    %918 = vmatpush1.msra.mxu0 %v878
    %919 = vmatprep.subr.mxu0 %v882
    %920 = vmatpush1.msra.mxu0 %v881
    %921 = vmatprep.subr.mxu0 %v885
    %922 = vmatpush1.msra.mxu0 %v884
    %923 = vmatprep.subr.mxu0 %v888
    %924 = vmatpush1.msra.mxu0 %v887
    %925 = vmatprep.subr.mxu0 %v891
    %926 = vmatpush1.msra.mxu0 %v890
    %927 = vmatprep.subr.mxu0 %v894
    %928 = vmatpush1.msra.mxu0 %v893
    %929 = vmatprep.subr.mxu0 %v897
    %930 = vmatpush1.msra.mxu0 %v896
    %931 = vmatprep.subr.mxu0 0.0
    %932 = vmatpush1.msra.mxu0 0.0
    %933 = vmatprep.subr.mxu0 0.0
    %934 = vmatpush1.msra.mxu0 0.0
    %935 = vmatprep.subr.mxu0 0.0
    %936 = vmatpush1.msra.mxu0 0.0
    %937 = vmatprep.subr.mxu0 0.0
    %938 = vmatpush1.msra.mxu0 0.0
    %939 = vmatprep.subr.mxu0 0.0
    %940 = vmatpush1.msra.mxu0 0.0
    %941 = vmatprep.subr.mxu0 0.0
    %942 = vmatpush1.msra.mxu0 0.0
    %943 = vmatprep.subr.mxu0 0.0
    %944 = vmatpush1.msra.mxu0 0.0
    %945 = vmatprep.subr.mxu0 0.0
    %946 = vmatpush1.msra.mxu0 0.0
    %947 = vmatprep.subr.mxu0 0.0
    %948 = vmatpush1.msra.mxu0 0.0
    %949 = vmatprep.subr.mxu0 0.0
    %950 = vmatpush1.msra.mxu0 0.0
    %951 = vmatprep.subr.mxu0 0.0
    %952 = vmatpush1.msra.mxu0 0.0
    %953 = vmatprep.subr.mxu0 0.0
    %954 = vmatpush1.msra.mxu0 0.0
    %955 = vmatprep.subr.mxu0 0.0
    %956 = vmatpush1.msra.mxu0 0.0
    %957 = vmatprep.subr.mxu0 0.0
    %958 = vmatpush1.msra.mxu0 0.0
    %959 = vmatprep.subr.mxu0 0.0
    %960 = vmatpush1.msra.mxu0 0.0
    %961 = vmatprep.subr.mxu0 0.0
    %962 = vmatpush1.msra.mxu0 0.0
    %963 = vmatprep.mubr.f32.mxu0 0.0
    %964 = vmatmul.mubr.f32.gmra.mrb[0].mxu0 %v483
    %v965 = vpop.f32.mrb[0].mxu0
    %v966 = vadd.f32 0.0, %v965
    %v967 = vpop.f32.mrb[0].mxu0
    %v968 = vadd.f32 0.0, %v967
    %969 = vdwg.mxu0
    %970 = vmatprep.subr.mxu0 0.0
    %971 = vmatpush1.msra.mxu0 %v853
    %972 = vmatprep.subr.mxu0 0.0
    %973 = vmatpush1.msra.mxu0 %v856
    %974 = vmatprep.subr.mxu0 0.0
    %975 = vmatpush1.msra.mxu0 %v859
    %976 = vmatprep.subr.mxu0 0.0
    %977 = vmatpush1.msra.mxu0 %v862
    %978 = vmatprep.subr.mxu0 0.0
    %979 = vmatpush1.msra.mxu0 %v865
    %980 = vmatprep.subr.mxu0 0.0
    %981 = vmatpush1.msra.mxu0 %v868
    %982 = vmatprep.subr.mxu0 0.0
    %983 = vmatpush1.msra.mxu0 %v871
    %984 = vmatprep.subr.mxu0 0.0
    %985 = vmatpush1.msra.mxu0 %v874
    %986 = vmatprep.subr.mxu0 0.0
    %987 = vmatpush1.msra.mxu0 %v877
    %988 = vmatprep.subr.mxu0 0.0
    %989 = vmatpush1.msra.mxu0 %v880
    %990 = vmatprep.subr.mxu0 0.0
    %991 = vmatpush1.msra.mxu0 %v883
    %992 = vmatprep.subr.mxu0 0.0
    %993 = vmatpush1.msra.mxu0 %v886
    %994 = vmatprep.subr.mxu0 0.0
    %995 = vmatpush1.msra.mxu0 %v889
    %996 = vmatprep.subr.mxu0 0.0
    %997 = vmatpush1.msra.mxu0 %v892
    %998 = vmatprep.subr.mxu0 0.0
    %999 = vmatpush1.msra.mxu0 %v895
    %1000 = vmatprep.subr.mxu0 0.0
    %1001 = vmatpush1.msra.mxu0 %v898
    %1002 = vmatprep.subr.mxu0 0.0
    %1003 = vmatpush1.msra.mxu0 0.0
    %1004 = vmatprep.subr.mxu0 0.0
    %1005 = vmatpush1.msra.mxu0 0.0
    %1006 = vmatprep.subr.mxu0 0.0
    %1007 = vmatpush1.msra.mxu0 0.0
    %1008 = vmatprep.subr.mxu0 0.0
    %1009 = vmatpush1.msra.mxu0 0.0
    %1010 = vmatprep.subr.mxu0 0.0
    %1011 = vmatpush1.msra.mxu0 0.0
    %1012 = vmatprep.subr.mxu0 0.0
    %1013 = vmatpush1.msra.mxu0 0.0
    %1014 = vmatprep.subr.mxu0 0.0
    %1015 = vmatpush1.msra.mxu0 0.0
    %1016 = vmatprep.subr.mxu0 0.0
    %1017 = vmatpush1.msra.mxu0 0.0
    %1018 = vmatprep.subr.mxu0 0.0
    %1019 = vmatpush1.msra.mxu0 0.0
    %1020 = vmatprep.subr.mxu0 0.0
    %1021 = vmatpush1.msra.mxu0 0.0
    %1022 = vmatprep.subr.mxu0 0.0
    %1023 = vmatpush1.msra.mxu0 0.0
    %1024 = vmatprep.subr.mxu0 0.0
    %1025 = vmatpush1.msra.mxu0 0.0
    %1026 = vmatprep.subr.mxu0 0.0
    %1027 = vmatpush1.msra.mxu0 0.0
    %1028 = vmatprep.subr.mxu0 0.0
    %1029 = vmatpush1.msra.mxu0 0.0
    %1030 = vmatprep.subr.mxu0 0.0
    %1031 = vmatpush1.msra.mxu0 0.0
    %1032 = vmatprep.subr.mxu0 0.0
    %1033 = vmatpush1.msra.mxu0 0.0
    %1034 = vmatprep.mubr.f32.mxu0 0.0
    %1035 = vmatmul.mubr.f32.gmra.mrb[0].mxu0 %v483
    %v1036 = vpop.f32.mrb[0].mxu0
    %v1037 = vadd.f32 0.0, %v1036
    %v1038 = vpop.f32.mrb[0].mxu0
    %1039 = vdwg.mxu0
    %v1040 = vadd.f32 %v777, %v966
    %v1041 = vadd.f32 %v779, %v968
    %v1042 = vxor.u32 %v1040, 2147483648
    %v1043 = vxor.u32 %v1041, 2147483648
    %v1044 = vmul.f32 %v1042, 1.442695
    %v1045 = vpow.pop %v1044
    %v1046 = vmul.f32 %v1043, 1.442695
    %v1047 = vpow.pop %v1046
    %v1048 = vadd.f32 %v1045, 1.0
    %v1049 = vadd.f32 %v1047, 1.0
    %v1050 = vrcp.pop %v1048
    %v1051 = vmul.f32 1.0, %v1050
    %v1052 = vrcp.pop %v1049
    %v1053 = vmul.f32 1.0, %v1052
    %v1054 = vadd.f32 %v1037, %v244
    %v1055 = vmul.f32 %v1051, %v1054
    %v1056 = vadd.f32 %v848, %v1055
    %v1057 = vtanh.pop %v1056
    %v1058 = vsub.f32 1.0, %v1053
    %v1059 = vmul.f32 %v1058, %v1057
    %v1060 = vmul.f32 %v1053, %v483
    %v1061 = vadd.f32 %v1059, %v1060
    %1062 = vmatprep.subr.mxu0 %v485
    %1063 = vmatpush1.msra.mxu0 %v484
    %1064 = vmatprep.subr.mxu0 %v488
    %1065 = vmatpush1.msra.mxu0 %v487
    %1066 = vmatprep.subr.mxu0 %v491
    %1067 = vmatpush1.msra.mxu0 %v490
    %1068 = vmatprep.subr.mxu0 %v494
    %1069 = vmatpush1.msra.mxu0 %v493
    %1070 = vmatprep.subr.mxu0 %v497
    %1071 = vmatpush1.msra.mxu0 %v496
    %1072 = vmatprep.subr.mxu0 %v500
    %1073 = vmatpush1.msra.mxu0 %v499
    %1074 = vmatprep.subr.mxu0 %v503
    %1075 = vmatpush1.msra.mxu0 %v502
    %1076 = vmatprep.subr.mxu0 %v506
    %1077 = vmatpush1.msra.mxu0 %v505
    %1078 = vmatprep.subr.mxu0 %v509
    %1079 = vmatpush1.msra.mxu0 %v508
    %1080 = vmatprep.subr.mxu0 %v512
    %1081 = vmatpush1.msra.mxu0 %v511
    %1082 = vmatprep.subr.mxu0 %v515
    %1083 = vmatpush1.msra.mxu0 %v514
    %1084 = vmatprep.subr.mxu0 %v518
    %1085 = vmatpush1.msra.mxu0 %v517
    %1086 = vmatprep.subr.mxu0 %v521
    %1087 = vmatpush1.msra.mxu0 %v520
    %1088 = vmatprep.subr.mxu0 %v524
    %1089 = vmatpush1.msra.mxu0 %v523
    %1090 = vmatprep.subr.mxu0 %v527
    %1091 = vmatpush1.msra.mxu0 %v526
    %1092 = vmatprep.subr.mxu0 %v530
    %1093 = vmatpush1.msra.mxu0 %v529
    %1094 = vmatprep.subr.mxu0 0.0
    %1095 = vmatpush1.msra.mxu0 0.0
    %1096 = vmatprep.subr.mxu0 0.0
    %1097 = vmatpush1.msra.mxu0 0.0
    %1098 = vmatprep.subr.mxu0 0.0
    %1099 = vmatpush1.msra.mxu0 0.0
    %1100 = vmatprep.subr.mxu0 0.0
    %1101 = vmatpush1.msra.mxu0 0.0
    %1102 = vmatprep.subr.mxu0 0.0
    %1103 = vmatpush1.msra.mxu0 0.0
    %1104 = vmatprep.subr.mxu0 0.0
    %1105 = vmatpush1.msra.mxu0 0.0
    %1106 = vmatprep.subr.mxu0 0.0
    %1107 = vmatpush1.msra.mxu0 0.0
    %1108 = vmatprep.subr.mxu0 0.0
    %1109 = vmatpush1.msra.mxu0 0.0
    %1110 = vmatprep.subr.mxu0 0.0
    %1111 = vmatpush1.msra.mxu0 0.0
    %1112 = vmatprep.subr.mxu0 0.0
    %1113 = vmatpush1.msra.mxu0 0.0
    %1114 = vmatprep.subr.mxu0 0.0
    %1115 = vmatpush1.msra.mxu0 0.0
    %1116 = vmatprep.subr.mxu0 0.0
    %1117 = vmatpush1.msra.mxu0 0.0
    %1118 = vmatprep.subr.mxu0 0.0
    %1119 = vmatpush1.msra.mxu0 0.0
    %1120 = vmatprep.subr.mxu0 0.0
    %1121 = vmatpush1.msra.mxu0 0.0
    %1122 = vmatprep.subr.mxu0 0.0
    %1123 = vmatpush1.msra.mxu0 0.0
    %1124 = vmatprep.subr.mxu0 0.0
    %1125 = vmatpush1.msra.mxu0 0.0
    %1126 = vmatprep.mubr.f32.mxu0 0.0
    %1127 = vmatmul.mubr.f32.gmra.mrb[0].mxu0 %v708
    %v1128 = vpop.f32.mrb[0].mxu0
    %v1129 = vadd.f32 0.0, %v1128
    %v1130 = vpop.f32.mrb[0].mxu0
    %v1131 = vadd.f32 0.0, %v1130
    %1132 = vdwg.mxu0
    %1133 = vmatprep.subr.mxu0 0.0
    %1134 = vmatpush1.msra.mxu0 %v486
    %1135 = vmatprep.subr.mxu0 0.0
    %1136 = vmatpush1.msra.mxu0 %v489
    %1137 = vmatprep.subr.mxu0 0.0
    %1138 = vmatpush1.msra.mxu0 %v492
    %1139 = vmatprep.subr.mxu0 0.0
    %1140 = vmatpush1.msra.mxu0 %v495
    %1141 = vmatprep.subr.mxu0 0.0
    %1142 = vmatpush1.msra.mxu0 %v498
    %1143 = vmatprep.subr.mxu0 0.0
    %1144 = vmatpush1.msra.mxu0 %v501
    %1145 = vmatprep.subr.mxu0 0.0
    %1146 = vmatpush1.msra.mxu0 %v504
    %1147 = vmatprep.subr.mxu0 0.0
    %1148 = vmatpush1.msra.mxu0 %v507
    %1149 = vmatprep.subr.mxu0 0.0
    %1150 = vmatpush1.msra.mxu0 %v510
    %1151 = vmatprep.subr.mxu0 0.0
    %1152 = vmatpush1.msra.mxu0 %v513
    %1153 = vmatprep.subr.mxu0 0.0
    %1154 = vmatpush1.msra.mxu0 %v516
    %1155 = vmatprep.subr.mxu0 0.0
    %1156 = vmatpush1.msra.mxu0 %v519
    %1157 = vmatprep.subr.mxu0 0.0
    %1158 = vmatpush1.msra.mxu0 %v522
    %1159 = vmatprep.subr.mxu0 0.0
    %1160 = vmatpush1.msra.mxu0 %v525
    %1161 = vmatprep.subr.mxu0 0.0
    %1162 = vmatpush1.msra.mxu0 %v528
    %1163 = vmatprep.subr.mxu0 0.0
    %1164 = vmatpush1.msra.mxu0 %v531
    %1165 = vmatprep.subr.mxu0 0.0
    %1166 = vmatpush1.msra.mxu0 0.0
    %1167 = vmatprep.subr.mxu0 0.0
    %1168 = vmatpush1.msra.mxu0 0.0
    %1169 = vmatprep.subr.mxu0 0.0
    %1170 = vmatpush1.msra.mxu0 0.0
    %1171 = vmatprep.subr.mxu0 0.0
    %1172 = vmatpush1.msra.mxu0 0.0
    %1173 = vmatprep.subr.mxu0 0.0
    %1174 = vmatpush1.msra.mxu0 0.0
    %1175 = vmatprep.subr.mxu0 0.0
    %1176 = vmatpush1.msra.mxu0 0.0
    %1177 = vmatprep.subr.mxu0 0.0
    %1178 = vmatpush1.msra.mxu0 0.0
    %1179 = vmatprep.subr.mxu0 0.0
    %1180 = vmatpush1.msra.mxu0 0.0
    %1181 = vmatprep.subr.mxu0 0.0
    %1182 = vmatpush1.msra.mxu0 0.0
    %1183 = vmatprep.subr.mxu0 0.0
    %1184 = vmatpush1.msra.mxu0 0.0
    %1185 = vmatprep.subr.mxu0 0.0
    %1186 = vmatpush1.msra.mxu0 0.0
    %1187 = vmatprep.subr.mxu0 0.0
    %1188 = vmatpush1.msra.mxu0 0.0
    %1189 = vmatprep.subr.mxu0 0.0
    %1190 = vmatpush1.msra.mxu0 0.0
    %1191 = vmatprep.subr.mxu0 0.0
    %1192 = vmatpush1.msra.mxu0 0.0
    %1193 = vmatprep.subr.mxu0 0.0
    %1194 = vmatpush1.msra.mxu0 0.0
    %1195 = vmatprep.subr.mxu0 0.0
    %1196 = vmatpush1.msra.mxu0 0.0
    %1197 = vmatprep.mubr.f32.mxu0 0.0
    %1198 = vmatmul.mubr.f32.gmra.mrb[0].mxu0 %v708
    %v1199 = vpop.f32.mrb[0].mxu0
    %v1200 = vadd.f32 0.0, %v1199
    %v1201 = vpop.f32.mrb[0].mxu0
    %1202 = vdwg.mxu0
    %v1205 = vrot.slane %v1129, 4
    %v1206 = vrot.slane %v1131, 4
    %v1209 = vadd.f32 %v156, %v1205
    %v1210 = vadd.f32 %v158, %v1206
    %v1211 = vxor.u32 %v1209, 2147483648
    %v1212 = vxor.u32 %v1210, 2147483648
    %v1213 = vmul.f32 %v1211, 1.442695
    %v1214 = vpow.pop %v1213
    %v1215 = vmul.f32 %v1212, 1.442695
    %v1216 = vpow.pop %v1215
    %v1217 = vadd.f32 %v1214, 1.0
    %v1218 = vadd.f32 %v1216, 1.0
    %v1219 = vrcp.pop %v1217
    %v1220 = vmul.f32 1.0, %v1219
    %v1221 = vrcp.pop %v1218
    %v1222 = vmul.f32 1.0, %v1221
    %v1223 = vadd.f32 %v1200, %v243
    %v1225 = vrot.slane %v1223, 4
    %v1227 = vmul.f32 %v1220, %v1225
    %v1228 = vadd.f32 %v233, %v1227
    %v1229 = vtanh.pop %v1228
    %v1230 = vsub.f32 1.0, %v1222
    %v1231 = vmul.f32 %v1230, %v1229
    %v1232 = vrot.slane %v706, 6
    %v1234 = vmul.f32 %v1222, %v1232
    %v1235 = vadd.f32 %v1231, %v1234
    %v1237 = vrot.slane %v1235, 4
    %1239 = vmatprep.subr.mxu0 %v263
    %1240 = vmatpush1.msra.mxu0 %v262
    %1241 = vmatprep.subr.mxu0 %v266
    %1242 = vmatpush1.msra.mxu0 %v265
    %1243 = vmatprep.subr.mxu0 %v269
    %1244 = vmatpush1.msra.mxu0 %v268
    %1245 = vmatprep.subr.mxu0 %v272
    %1246 = vmatpush1.msra.mxu0 %v271
    %1247 = vmatprep.subr.mxu0 %v275
    %1248 = vmatpush1.msra.mxu0 %v274
    %1249 = vmatprep.subr.mxu0 %v278
    %1250 = vmatpush1.msra.mxu0 %v277
    %1251 = vmatprep.subr.mxu0 %v281
    %1252 = vmatpush1.msra.mxu0 %v280
    %1253 = vmatprep.subr.mxu0 %v284
    %1254 = vmatpush1.msra.mxu0 %v283
    %1255 = vmatprep.subr.mxu0 %v287
    %1256 = vmatpush1.msra.mxu0 %v286
    %1257 = vmatprep.subr.mxu0 %v290
    %1258 = vmatpush1.msra.mxu0 %v289
    %1259 = vmatprep.subr.mxu0 %v293
    %1260 = vmatpush1.msra.mxu0 %v292
    %1261 = vmatprep.subr.mxu0 %v296
    %1262 = vmatpush1.msra.mxu0 %v295
    %1263 = vmatprep.subr.mxu0 %v299
    %1264 = vmatpush1.msra.mxu0 %v298
    %1265 = vmatprep.subr.mxu0 %v302
    %1266 = vmatpush1.msra.mxu0 %v301
    %1267 = vmatprep.subr.mxu0 %v305
    %1268 = vmatpush1.msra.mxu0 %v304
    %1269 = vmatprep.subr.mxu0 %v308
    %1270 = vmatpush1.msra.mxu0 %v307
    %1271 = vmatprep.subr.mxu0 0.0
    %1272 = vmatpush1.msra.mxu0 0.0
    %1273 = vmatprep.subr.mxu0 0.0
    %1274 = vmatpush1.msra.mxu0 0.0
    %1275 = vmatprep.subr.mxu0 0.0
    %1276 = vmatpush1.msra.mxu0 0.0
    %1277 = vmatprep.subr.mxu0 0.0
    %1278 = vmatpush1.msra.mxu0 0.0
    %1279 = vmatprep.subr.mxu0 0.0
    %1280 = vmatpush1.msra.mxu0 0.0
    %1281 = vmatprep.subr.mxu0 0.0
    %1282 = vmatpush1.msra.mxu0 0.0
    %1283 = vmatprep.subr.mxu0 0.0
    %1284 = vmatpush1.msra.mxu0 0.0
    %1285 = vmatprep.subr.mxu0 0.0
    %1286 = vmatpush1.msra.mxu0 0.0
    %1287 = vmatprep.subr.mxu0 0.0
    %1288 = vmatpush1.msra.mxu0 0.0
    %1289 = vmatprep.subr.mxu0 0.0
    %1290 = vmatpush1.msra.mxu0 0.0
    %1291 = vmatprep.subr.mxu0 0.0
    %1292 = vmatpush1.msra.mxu0 0.0
    %1293 = vmatprep.subr.mxu0 0.0
    %1294 = vmatpush1.msra.mxu0 0.0
    %1295 = vmatprep.subr.mxu0 0.0
    %1296 = vmatpush1.msra.mxu0 0.0
    %1297 = vmatprep.subr.mxu0 0.0
    %1298 = vmatpush1.msra.mxu0 0.0
    %1299 = vmatprep.subr.mxu0 0.0
    %1300 = vmatpush1.msra.mxu0 0.0
    %1301 = vmatprep.subr.mxu0 0.0
    %1302 = vmatpush1.msra.mxu0 0.0
    %1303 = vmatprep.mubr.f32.mxu0 0.0
    %1304 = vmatmul.mubr.f32.gmra.mrb[0].mxu0 %v1237
    %v1305 = vpop.f32.mrb[0].mxu0
    %v1306 = vadd.f32 %v314, %v1305
    %v1307 = vpop.f32.mrb[0].mxu0
    %v1308 = vadd.f32 %v318, %v1307
    %1309 = vdwg.mxu0
    %1310 = vmatprep.subr.mxu0 0.0
    %1311 = vmatpush1.msra.mxu0 %v264
    %1312 = vmatprep.subr.mxu0 0.0
    %1313 = vmatpush1.msra.mxu0 %v267
    %1314 = vmatprep.subr.mxu0 0.0
    %1315 = vmatpush1.msra.mxu0 %v270
    %1316 = vmatprep.subr.mxu0 0.0
    %1317 = vmatpush1.msra.mxu0 %v273
    %1318 = vmatprep.subr.mxu0 0.0
    %1319 = vmatpush1.msra.mxu0 %v276
    %1320 = vmatprep.subr.mxu0 0.0
    %1321 = vmatpush1.msra.mxu0 %v279
    %1322 = vmatprep.subr.mxu0 0.0
    %1323 = vmatpush1.msra.mxu0 %v282
    %1324 = vmatprep.subr.mxu0 0.0
    %1325 = vmatpush1.msra.mxu0 %v285
    %1326 = vmatprep.subr.mxu0 0.0
    %1327 = vmatpush1.msra.mxu0 %v288
    %1328 = vmatprep.subr.mxu0 0.0
    %1329 = vmatpush1.msra.mxu0 %v291
    %1330 = vmatprep.subr.mxu0 0.0
    %1331 = vmatpush1.msra.mxu0 %v294
    %1332 = vmatprep.subr.mxu0 0.0
    %1333 = vmatpush1.msra.mxu0 %v297
    %1334 = vmatprep.subr.mxu0 0.0
    %1335 = vmatpush1.msra.mxu0 %v300
    %1336 = vmatprep.subr.mxu0 0.0
    %1337 = vmatpush1.msra.mxu0 %v303
    %1338 = vmatprep.subr.mxu0 0.0
    %1339 = vmatpush1.msra.mxu0 %v306
    %1340 = vmatprep.subr.mxu0 0.0
    %1341 = vmatpush1.msra.mxu0 %v309
    %1342 = vmatprep.subr.mxu0 0.0
    %1343 = vmatpush1.msra.mxu0 0.0
    %1344 = vmatprep.subr.mxu0 0.0
    %1345 = vmatpush1.msra.mxu0 0.0
    %1346 = vmatprep.subr.mxu0 0.0
    %1347 = vmatpush1.msra.mxu0 0.0
    %1348 = vmatprep.subr.mxu0 0.0
    %1349 = vmatpush1.msra.mxu0 0.0
    %1350 = vmatprep.subr.mxu0 0.0
    %1351 = vmatpush1.msra.mxu0 0.0
    %1352 = vmatprep.subr.mxu0 0.0
    %1353 = vmatpush1.msra.mxu0 0.0
    %1354 = vmatprep.subr.mxu0 0.0
    %1355 = vmatpush1.msra.mxu0 0.0
    %1356 = vmatprep.subr.mxu0 0.0
    %1357 = vmatpush1.msra.mxu0 0.0
    %1358 = vmatprep.subr.mxu0 0.0
    %1359 = vmatpush1.msra.mxu0 0.0
    %1360 = vmatprep.subr.mxu0 0.0
    %1361 = vmatpush1.msra.mxu0 0.0
    %1362 = vmatprep.subr.mxu0 0.0
    %1363 = vmatpush1.msra.mxu0 0.0
    %1364 = vmatprep.subr.mxu0 0.0
    %1365 = vmatpush1.msra.mxu0 0.0
    %1366 = vmatprep.subr.mxu0 0.0
    %1367 = vmatpush1.msra.mxu0 0.0
    %1368 = vmatprep.subr.mxu0 0.0
    %1369 = vmatpush1.msra.mxu0 0.0
    %1370 = vmatprep.subr.mxu0 0.0
    %1371 = vmatpush1.msra.mxu0 0.0
    %1372 = vmatprep.subr.mxu0 0.0
    %1373 = vmatpush1.msra.mxu0 0.0
    %1374 = vmatprep.mubr.f32.mxu0 0.0
    %1375 = vmatmul.mubr.f32.gmra.mrb[0].mxu0 %v1237
    %v1376 = vpop.f32.mrb[0].mxu0
    %v1377 = vadd.f32 %v322, %v1376
    %v1378 = vpop.f32.mrb[0].mxu0
    %1379 = vdwg.mxu0
    %1380 = vmatprep.subr.mxu0 %v852
    %1381 = vmatpush1.msra.mxu0 %v851
    %1382 = vmatprep.subr.mxu0 %v855
    %1383 = vmatpush1.msra.mxu0 %v854
    %1384 = vmatprep.subr.mxu0 %v858
    %1385 = vmatpush1.msra.mxu0 %v857
    %1386 = vmatprep.subr.mxu0 %v861
    %1387 = vmatpush1.msra.mxu0 %v860
    %1388 = vmatprep.subr.mxu0 %v864
    %1389 = vmatpush1.msra.mxu0 %v863
    %1390 = vmatprep.subr.mxu0 %v867
    %1391 = vmatpush1.msra.mxu0 %v866
    %1392 = vmatprep.subr.mxu0 %v870
    %1393 = vmatpush1.msra.mxu0 %v869
    %1394 = vmatprep.subr.mxu0 %v873
    %1395 = vmatpush1.msra.mxu0 %v872
    %1396 = vmatprep.subr.mxu0 %v876
    %1397 = vmatpush1.msra.mxu0 %v875
    %1398 = vmatprep.subr.mxu0 %v879
    %1399 = vmatpush1.msra.mxu0 %v878
    %1400 = vmatprep.subr.mxu0 %v882
    %1401 = vmatpush1.msra.mxu0 %v881
    %1402 = vmatprep.subr.mxu0 %v885
    %1403 = vmatpush1.msra.mxu0 %v884
    %1404 = vmatprep.subr.mxu0 %v888
    %1405 = vmatpush1.msra.mxu0 %v887
    %1406 = vmatprep.subr.mxu0 %v891
    %1407 = vmatpush1.msra.mxu0 %v890
    %1408 = vmatprep.subr.mxu0 %v894
    %1409 = vmatpush1.msra.mxu0 %v893
    %1410 = vmatprep.subr.mxu0 %v897
    %1411 = vmatpush1.msra.mxu0 %v896
    %1412 = vmatprep.subr.mxu0 0.0
    %1413 = vmatpush1.msra.mxu0 0.0
    %1414 = vmatprep.subr.mxu0 0.0
    %1415 = vmatpush1.msra.mxu0 0.0
    %1416 = vmatprep.subr.mxu0 0.0
    %1417 = vmatpush1.msra.mxu0 0.0
    %1418 = vmatprep.subr.mxu0 0.0
    %1419 = vmatpush1.msra.mxu0 0.0
    %1420 = vmatprep.subr.mxu0 0.0
    %1421 = vmatpush1.msra.mxu0 0.0
    %1422 = vmatprep.subr.mxu0 0.0
    %1423 = vmatpush1.msra.mxu0 0.0
    %1424 = vmatprep.subr.mxu0 0.0
    %1425 = vmatpush1.msra.mxu0 0.0
    %1426 = vmatprep.subr.mxu0 0.0
    %1427 = vmatpush1.msra.mxu0 0.0
    %1428 = vmatprep.subr.mxu0 0.0
    %1429 = vmatpush1.msra.mxu0 0.0
    %1430 = vmatprep.subr.mxu0 0.0
    %1431 = vmatpush1.msra.mxu0 0.0
    %1432 = vmatprep.subr.mxu0 0.0
    %1433 = vmatpush1.msra.mxu0 0.0
    %1434 = vmatprep.subr.mxu0 0.0
    %1435 = vmatpush1.msra.mxu0 0.0
    %1436 = vmatprep.subr.mxu0 0.0
    %1437 = vmatpush1.msra.mxu0 0.0
    %1438 = vmatprep.subr.mxu0 0.0
    %1439 = vmatpush1.msra.mxu0 0.0
    %1440 = vmatprep.subr.mxu0 0.0
    %1441 = vmatpush1.msra.mxu0 0.0
    %1442 = vmatprep.subr.mxu0 0.0
    %1443 = vmatpush1.msra.mxu0 0.0
    %1444 = vmatprep.mubr.f32.mxu0 0.0
    %1445 = vmatmul.mubr.f32.gmra.mrb[0].mxu0 %v1061
    %v1446 = vpop.f32.mrb[0].mxu0
    %v1447 = vadd.f32 0.0, %v1446
    %v1448 = vpop.f32.mrb[0].mxu0
    %v1449 = vadd.f32 0.0, %v1448
    %1450 = vdwg.mxu0
    %1451 = vmatprep.subr.mxu0 0.0
    %1452 = vmatpush1.msra.mxu0 %v853
    %1453 = vmatprep.subr.mxu0 0.0
    %1454 = vmatpush1.msra.mxu0 %v856
    %1455 = vmatprep.subr.mxu0 0.0
    %1456 = vmatpush1.msra.mxu0 %v859
    %1457 = vmatprep.subr.mxu0 0.0
    %1458 = vmatpush1.msra.mxu0 %v862
    %1459 = vmatprep.subr.mxu0 0.0
    %1460 = vmatpush1.msra.mxu0 %v865
    %1461 = vmatprep.subr.mxu0 0.0
    %1462 = vmatpush1.msra.mxu0 %v868
    %1463 = vmatprep.subr.mxu0 0.0
    %1464 = vmatpush1.msra.mxu0 %v871
    %1465 = vmatprep.subr.mxu0 0.0
    %1466 = vmatpush1.msra.mxu0 %v874
    %1467 = vmatprep.subr.mxu0 0.0
    %1468 = vmatpush1.msra.mxu0 %v877
    %1469 = vmatprep.subr.mxu0 0.0
    %1470 = vmatpush1.msra.mxu0 %v880
    %1471 = vmatprep.subr.mxu0 0.0
    %1472 = vmatpush1.msra.mxu0 %v883
    %1473 = vmatprep.subr.mxu0 0.0
    %1474 = vmatpush1.msra.mxu0 %v886
    %1475 = vmatprep.subr.mxu0 0.0
    %1476 = vmatpush1.msra.mxu0 %v889
    %1477 = vmatprep.subr.mxu0 0.0
    %1478 = vmatpush1.msra.mxu0 %v892
    %1479 = vmatprep.subr.mxu0 0.0
    %1480 = vmatpush1.msra.mxu0 %v895
    %1481 = vmatprep.subr.mxu0 0.0
    %1482 = vmatpush1.msra.mxu0 %v898
    %1483 = vmatprep.subr.mxu0 0.0
    %1484 = vmatpush1.msra.mxu0 0.0
    %1485 = vmatprep.subr.mxu0 0.0
    %1486 = vmatpush1.msra.mxu0 0.0
    %1487 = vmatprep.subr.mxu0 0.0
    %1488 = vmatpush1.msra.mxu0 0.0
    %1489 = vmatprep.subr.mxu0 0.0
    %1490 = vmatpush1.msra.mxu0 0.0
    %1491 = vmatprep.subr.mxu0 0.0
    %1492 = vmatpush1.msra.mxu0 0.0
    %1493 = vmatprep.subr.mxu0 0.0
    %1494 = vmatpush1.msra.mxu0 0.0
    %1495 = vmatprep.subr.mxu0 0.0
    %1496 = vmatpush1.msra.mxu0 0.0
    %1497 = vmatprep.subr.mxu0 0.0
    %1498 = vmatpush1.msra.mxu0 0.0
    %1499 = vmatprep.subr.mxu0 0.0
    %1500 = vmatpush1.msra.mxu0 0.0
    %1501 = vmatprep.subr.mxu0 0.0
    %1502 = vmatpush1.msra.mxu0 0.0
    %1503 = vmatprep.subr.mxu0 0.0
    %1504 = vmatpush1.msra.mxu0 0.0
    %1505 = vmatprep.subr.mxu0 0.0
    %1506 = vmatpush1.msra.mxu0 0.0
    %1507 = vmatprep.subr.mxu0 0.0
    %1508 = vmatpush1.msra.mxu0 0.0
    %1509 = vmatprep.subr.mxu0 0.0
    %1510 = vmatpush1.msra.mxu0 0.0
    %1511 = vmatprep.subr.mxu0 0.0
    %1512 = vmatpush1.msra.mxu0 0.0
    %1513 = vmatprep.subr.mxu0 0.0
    %1514 = vmatpush1.msra.mxu0 0.0
    %1515 = vmatprep.mubr.f32.mxu0 0.0
    %1516 = vmatmul.mubr.f32.gmra.mrb[0].mxu0 %v1061
    %v1517 = vpop.f32.mrb[0].mxu0
    %v1518 = vadd.f32 0.0, %v1517
    %v1519 = vpop.f32.mrb[0].mxu0
    %1520 = vdwg.mxu0
    %v1521 = vadd.f32 %v1306, %v1447
    %v1522 = vadd.f32 %v1308, %v1449
    %v1523 = vxor.u32 %v1521, 2147483648
    %v1524 = vxor.u32 %v1522, 2147483648
    %v1525 = vmul.f32 %v1523, 1.442695
    %v1526 = vpow.pop %v1525
    %v1527 = vmul.f32 %v1524, 1.442695
    %v1528 = vpow.pop %v1527
    %v1529 = vadd.f32 %v1526, 1.0
    %v1530 = vadd.f32 %v1528, 1.0
    %v1531 = vrcp.pop %v1529
    %v1532 = vmul.f32 1.0, %v1531
    %v1533 = vrcp.pop %v1530
    %v1534 = vmul.f32 1.0, %v1533
    %v1535 = vadd.f32 %v1518, %v244
    %v1536 = vmul.f32 %v1532, %v1535
    %v1537 = vadd.f32 %v1377, %v1536
    %v1538 = vtanh.pop %v1537
    %v1539 = vsub.f32 1.0, %v1534
    %v1540 = vmul.f32 %v1539, %v1538
    %v1541 = vmul.f32 %v1534, %v1061
    %v1542 = vadd.f32 %v1540, %v1541
    %1543 = vmatprep.subr.mxu0 %v485
    %1544 = vmatpush1.msra.mxu0 %v484
    %1545 = vmatprep.subr.mxu0 %v488
    %1546 = vmatpush1.msra.mxu0 %v487
    %1547 = vmatprep.subr.mxu0 %v491
    %1548 = vmatpush1.msra.mxu0 %v490
    %1549 = vmatprep.subr.mxu0 %v494
    %1550 = vmatpush1.msra.mxu0 %v493
    %1551 = vmatprep.subr.mxu0 %v497
    %1552 = vmatpush1.msra.mxu0 %v496
    %1553 = vmatprep.subr.mxu0 %v500
    %1554 = vmatpush1.msra.mxu0 %v499
    %1555 = vmatprep.subr.mxu0 %v503
    %1556 = vmatpush1.msra.mxu0 %v502
    %1557 = vmatprep.subr.mxu0 %v506
    %1558 = vmatpush1.msra.mxu0 %v505
    %1559 = vmatprep.subr.mxu0 %v509
    %1560 = vmatpush1.msra.mxu0 %v508
    %1561 = vmatprep.subr.mxu0 %v512
    %1562 = vmatpush1.msra.mxu0 %v511
    %1563 = vmatprep.subr.mxu0 %v515
    %1564 = vmatpush1.msra.mxu0 %v514
    %1565 = vmatprep.subr.mxu0 %v518
    %1566 = vmatpush1.msra.mxu0 %v517
    %1567 = vmatprep.subr.mxu0 %v521
    %1568 = vmatpush1.msra.mxu0 %v520
    %1569 = vmatprep.subr.mxu0 %v524
    %1570 = vmatpush1.msra.mxu0 %v523
    %1571 = vmatprep.subr.mxu0 %v527
    %1572 = vmatpush1.msra.mxu0 %v526
    %1573 = vmatprep.subr.mxu0 %v530
    %1574 = vmatpush1.msra.mxu0 %v529
    %1575 = vmatprep.subr.mxu0 0.0
    %1576 = vmatpush1.msra.mxu0 0.0
    %1577 = vmatprep.subr.mxu0 0.0
    %1578 = vmatpush1.msra.mxu0 0.0
    %1579 = vmatprep.subr.mxu0 0.0
    %1580 = vmatpush1.msra.mxu0 0.0
    %1581 = vmatprep.subr.mxu0 0.0
    %1582 = vmatpush1.msra.mxu0 0.0
    %1583 = vmatprep.subr.mxu0 0.0
    %1584 = vmatpush1.msra.mxu0 0.0
    %1585 = vmatprep.subr.mxu0 0.0
    %1586 = vmatpush1.msra.mxu0 0.0
    %1587 = vmatprep.subr.mxu0 0.0
    %1588 = vmatpush1.msra.mxu0 0.0
    %1589 = vmatprep.subr.mxu0 0.0
    %1590 = vmatpush1.msra.mxu0 0.0
    %1591 = vmatprep.subr.mxu0 0.0
    %1592 = vmatpush1.msra.mxu0 0.0
    %1593 = vmatprep.subr.mxu0 0.0
    %1594 = vmatpush1.msra.mxu0 0.0
    %1595 = vmatprep.subr.mxu0 0.0
    %1596 = vmatpush1.msra.mxu0 0.0
    %1597 = vmatprep.subr.mxu0 0.0
    %1598 = vmatpush1.msra.mxu0 0.0
    %1599 = vmatprep.subr.mxu0 0.0
    %1600 = vmatpush1.msra.mxu0 0.0
    %1601 = vmatprep.subr.mxu0 0.0
    %1602 = vmatpush1.msra.mxu0 0.0
    %1603 = vmatprep.subr.mxu0 0.0
    %1604 = vmatpush1.msra.mxu0 0.0
    %1605 = vmatprep.subr.mxu0 0.0
    %1606 = vmatpush1.msra.mxu0 0.0
    %1607 = vmatprep.mubr.f32.mxu0 0.0
    %1608 = vmatmul.mubr.f32.gmra.mrb[0].mxu0 %v1237
    %v1609 = vpop.f32.mrb[0].mxu0
    %v1610 = vadd.f32 0.0, %v1609
    %v1611 = vpop.f32.mrb[0].mxu0
    %v1612 = vadd.f32 0.0, %v1611
    %1613 = vdwg.mxu0
    %1614 = vmatprep.subr.mxu0 0.0
    %1615 = vmatpush1.msra.mxu0 %v486
    %1616 = vmatprep.subr.mxu0 0.0
    %1617 = vmatpush1.msra.mxu0 %v489
    %1618 = vmatprep.subr.mxu0 0.0
    %1619 = vmatpush1.msra.mxu0 %v492
    %1620 = vmatprep.subr.mxu0 0.0
    %1621 = vmatpush1.msra.mxu0 %v495
    %1622 = vmatprep.subr.mxu0 0.0
    %1623 = vmatpush1.msra.mxu0 %v498
    %1624 = vmatprep.subr.mxu0 0.0
    %1625 = vmatpush1.msra.mxu0 %v501
    %1626 = vmatprep.subr.mxu0 0.0
    %1627 = vmatpush1.msra.mxu0 %v504
    %1628 = vmatprep.subr.mxu0 0.0
    %1629 = vmatpush1.msra.mxu0 %v507
    %1630 = vmatprep.subr.mxu0 0.0
    %1631 = vmatpush1.msra.mxu0 %v510
    %1632 = vmatprep.subr.mxu0 0.0
    %1633 = vmatpush1.msra.mxu0 %v513
    %1634 = vmatprep.subr.mxu0 0.0
    %1635 = vmatpush1.msra.mxu0 %v516
    %1636 = vmatprep.subr.mxu0 0.0
    %1637 = vmatpush1.msra.mxu0 %v519
    %1638 = vmatprep.subr.mxu0 0.0
    %1639 = vmatpush1.msra.mxu0 %v522
    %1640 = vmatprep.subr.mxu0 0.0
    %1641 = vmatpush1.msra.mxu0 %v525
    %1642 = vmatprep.subr.mxu0 0.0
    %1643 = vmatpush1.msra.mxu0 %v528
    %1644 = vmatprep.subr.mxu0 0.0
    %1645 = vmatpush1.msra.mxu0 %v531
    %1646 = vmatprep.subr.mxu0 0.0
    %1647 = vmatpush1.msra.mxu0 0.0
    %1648 = vmatprep.subr.mxu0 0.0
    %1649 = vmatpush1.msra.mxu0 0.0
    %1650 = vmatprep.subr.mxu0 0.0
    %1651 = vmatpush1.msra.mxu0 0.0
    %1652 = vmatprep.subr.mxu0 0.0
    %1653 = vmatpush1.msra.mxu0 0.0
    %1654 = vmatprep.subr.mxu0 0.0
    %1655 = vmatpush1.msra.mxu0 0.0
    %1656 = vmatprep.subr.mxu0 0.0
    %1657 = vmatpush1.msra.mxu0 0.0
    %1658 = vmatprep.subr.mxu0 0.0
    %1659 = vmatpush1.msra.mxu0 0.0
    %1660 = vmatprep.subr.mxu0 0.0
    %1661 = vmatpush1.msra.mxu0 0.0
    %1662 = vmatprep.subr.mxu0 0.0
    %1663 = vmatpush1.msra.mxu0 0.0
    %1664 = vmatprep.subr.mxu0 0.0
    %1665 = vmatpush1.msra.mxu0 0.0
    %1666 = vmatprep.subr.mxu0 0.0
    %1667 = vmatpush1.msra.mxu0 0.0
    %1668 = vmatprep.subr.mxu0 0.0
    %1669 = vmatpush1.msra.mxu0 0.0
    %1670 = vmatprep.subr.mxu0 0.0
    %1671 = vmatpush1.msra.mxu0 0.0
    %1672 = vmatprep.subr.mxu0 0.0
    %1673 = vmatpush1.msra.mxu0 0.0
    %1674 = vmatprep.subr.mxu0 0.0
    %1675 = vmatpush1.msra.mxu0 0.0
    %1676 = vmatprep.subr.mxu0 0.0
    %1677 = vmatpush1.msra.mxu0 0.0
    %1678 = vmatprep.mubr.f32.mxu0 0.0
    %1679 = vmatmul.mubr.f32.gmra.mrb[0].mxu0 %v1237
    %v1680 = vpop.f32.mrb[0].mxu0
    %v1681 = vadd.f32 0.0, %v1680
    %v1682 = vpop.f32.mrb[0].mxu0
    %1683 = vdwg.mxu0
    %v1686 = vrot.slane %v1610, 2
    %v1687 = vrot.slane %v1612, 2
    %v1690 = vadd.f32 %v156, %v1686
    %v1691 = vadd.f32 %v158, %v1687
    %v1692 = vxor.u32 %v1690, 2147483648
    %v1693 = vxor.u32 %v1691, 2147483648
    %v1694 = vmul.f32 %v1692, 1.442695
    %v1695 = vpow.pop %v1694
    %v1696 = vmul.f32 %v1693, 1.442695
    %v1697 = vpow.pop %v1696
    %v1698 = vadd.f32 %v1695, 1.0
    %v1699 = vadd.f32 %v1697, 1.0
    %v1700 = vrcp.pop %v1698
    %v1701 = vmul.f32 1.0, %v1700
    %v1702 = vrcp.pop %v1699
    %v1703 = vmul.f32 1.0, %v1702
    %v1704 = vadd.f32 %v1681, %v243
    %v1706 = vrot.slane %v1704, 2
    %v1708 = vmul.f32 %v1701, %v1706
    %v1709 = vadd.f32 %v233, %v1708
    %v1710 = vtanh.pop %v1709
    %v1711 = vsub.f32 1.0, %v1703
    %v1712 = vmul.f32 %v1711, %v1710
    %v1713 = vrot.slane %v1235, 6
    %v1715 = vmul.f32 %v1703, %v1713
    %v1716 = vadd.f32 %v1712, %v1715
    %v1718 = vrot.slane %v1716, 6
    %1720 = vmatprep.subr.mxu0 %v263
    %1721 = vmatpush1.msra.mxu0 %v262
    %1722 = vmatprep.subr.mxu0 %v266
    %1723 = vmatpush1.msra.mxu0 %v265
    %1724 = vmatprep.subr.mxu0 %v269
    %1725 = vmatpush1.msra.mxu0 %v268
    %1726 = vmatprep.subr.mxu0 %v272
    %1727 = vmatpush1.msra.mxu0 %v271
    %1728 = vmatprep.subr.mxu0 %v275
    %1729 = vmatpush1.msra.mxu0 %v274
    %1730 = vmatprep.subr.mxu0 %v278
    %1731 = vmatpush1.msra.mxu0 %v277
    %1732 = vmatprep.subr.mxu0 %v281
    %1733 = vmatpush1.msra.mxu0 %v280
    %1734 = vmatprep.subr.mxu0 %v284
    %1735 = vmatpush1.msra.mxu0 %v283
    %1736 = vmatprep.subr.mxu0 %v287
    %1737 = vmatpush1.msra.mxu0 %v286
    %1738 = vmatprep.subr.mxu0 %v290
    %1739 = vmatpush1.msra.mxu0 %v289
    %1740 = vmatprep.subr.mxu0 %v293
    %1741 = vmatpush1.msra.mxu0 %v292
    %1742 = vmatprep.subr.mxu0 %v296
    %1743 = vmatpush1.msra.mxu0 %v295
    %1744 = vmatprep.subr.mxu0 %v299
    %1745 = vmatpush1.msra.mxu0 %v298
    %1746 = vmatprep.subr.mxu0 %v302
    %1747 = vmatpush1.msra.mxu0 %v301
    %1748 = vmatprep.subr.mxu0 %v305
    %1749 = vmatpush1.msra.mxu0 %v304
    %1750 = vmatprep.subr.mxu0 %v308
    %1751 = vmatpush1.msra.mxu0 %v307
    %1752 = vmatprep.subr.mxu0 0.0
    %1753 = vmatpush1.msra.mxu0 0.0
    %1754 = vmatprep.subr.mxu0 0.0
    %1755 = vmatpush1.msra.mxu0 0.0
    %1756 = vmatprep.subr.mxu0 0.0
    %1757 = vmatpush1.msra.mxu0 0.0
    %1758 = vmatprep.subr.mxu0 0.0
    %1759 = vmatpush1.msra.mxu0 0.0
    %1760 = vmatprep.subr.mxu0 0.0
    %1761 = vmatpush1.msra.mxu0 0.0
    %1762 = vmatprep.subr.mxu0 0.0
    %1763 = vmatpush1.msra.mxu0 0.0
    %1764 = vmatprep.subr.mxu0 0.0
    %1765 = vmatpush1.msra.mxu0 0.0
    %1766 = vmatprep.subr.mxu0 0.0
    %1767 = vmatpush1.msra.mxu0 0.0
    %1768 = vmatprep.subr.mxu0 0.0
    %1769 = vmatpush1.msra.mxu0 0.0
    %1770 = vmatprep.subr.mxu0 0.0
    %1771 = vmatpush1.msra.mxu0 0.0
    %1772 = vmatprep.subr.mxu0 0.0
    %1773 = vmatpush1.msra.mxu0 0.0
    %1774 = vmatprep.subr.mxu0 0.0
    %1775 = vmatpush1.msra.mxu0 0.0
    %1776 = vmatprep.subr.mxu0 0.0
    %1777 = vmatpush1.msra.mxu0 0.0
    %1778 = vmatprep.subr.mxu0 0.0
    %1779 = vmatpush1.msra.mxu0 0.0
    %1780 = vmatprep.subr.mxu0 0.0
    %1781 = vmatpush1.msra.mxu0 0.0
    %1782 = vmatprep.subr.mxu0 0.0
    %1783 = vmatpush1.msra.mxu0 0.0
    %1784 = vmatprep.mubr.f32.mxu0 0.0
    %1785 = vmatmul.mubr.f32.gmra.mrb[0].mxu0 %v1718
    %v1786 = vpop.f32.mrb[0].mxu0
    %v1787 = vadd.f32 %v314, %v1786
    %v1788 = vpop.f32.mrb[0].mxu0
    %v1789 = vadd.f32 %v318, %v1788
    %1790 = vdwg.mxu0
    %1791 = vmatprep.subr.mxu0 0.0
    %1792 = vmatpush1.msra.mxu0 %v264
    %1793 = vmatprep.subr.mxu0 0.0
    %1794 = vmatpush1.msra.mxu0 %v267
    %1795 = vmatprep.subr.mxu0 0.0
    %1796 = vmatpush1.msra.mxu0 %v270
    %1797 = vmatprep.subr.mxu0 0.0
    %1798 = vmatpush1.msra.mxu0 %v273
    %1799 = vmatprep.subr.mxu0 0.0
    %1800 = vmatpush1.msra.mxu0 %v276
    %1801 = vmatprep.subr.mxu0 0.0
    %1802 = vmatpush1.msra.mxu0 %v279
    %1803 = vmatprep.subr.mxu0 0.0
    %1804 = vmatpush1.msra.mxu0 %v282
    %1805 = vmatprep.subr.mxu0 0.0
    %1806 = vmatpush1.msra.mxu0 %v285
    %1807 = vmatprep.subr.mxu0 0.0
    %1808 = vmatpush1.msra.mxu0 %v288
    %1809 = vmatprep.subr.mxu0 0.0
    %1810 = vmatpush1.msra.mxu0 %v291
    %1811 = vmatprep.subr.mxu0 0.0
    %1812 = vmatpush1.msra.mxu0 %v294
    %1813 = vmatprep.subr.mxu0 0.0
    %1814 = vmatpush1.msra.mxu0 %v297
    %1815 = vmatprep.subr.mxu0 0.0
    %1816 = vmatpush1.msra.mxu0 %v300
    %1817 = vmatprep.subr.mxu0 0.0
    %1818 = vmatpush1.msra.mxu0 %v303
    %1819 = vmatprep.subr.mxu0 0.0
    %1820 = vmatpush1.msra.mxu0 %v306
    %1821 = vmatprep.subr.mxu0 0.0
    %1822 = vmatpush1.msra.mxu0 %v309
    %1823 = vmatprep.subr.mxu0 0.0
    %1824 = vmatpush1.msra.mxu0 0.0
    %1825 = vmatprep.subr.mxu0 0.0
    %1826 = vmatpush1.msra.mxu0 0.0
    %1827 = vmatprep.subr.mxu0 0.0
    %1828 = vmatpush1.msra.mxu0 0.0
    %1829 = vmatprep.subr.mxu0 0.0
    %1830 = vmatpush1.msra.mxu0 0.0
    %1831 = vmatprep.subr.mxu0 0.0
    %1832 = vmatpush1.msra.mxu0 0.0
    %1833 = vmatprep.subr.mxu0 0.0
    %1834 = vmatpush1.msra.mxu0 0.0
    %1835 = vmatprep.subr.mxu0 0.0
    %1836 = vmatpush1.msra.mxu0 0.0
    %1837 = vmatprep.subr.mxu0 0.0
    %1838 = vmatpush1.msra.mxu0 0.0
    %1839 = vmatprep.subr.mxu0 0.0
    %1840 = vmatpush1.msra.mxu0 0.0
    %1841 = vmatprep.subr.mxu0 0.0
    %1842 = vmatpush1.msra.mxu0 0.0
    %1843 = vmatprep.subr.mxu0 0.0
    %1844 = vmatpush1.msra.mxu0 0.0
    %1845 = vmatprep.subr.mxu0 0.0
    %1846 = vmatpush1.msra.mxu0 0.0
    %1847 = vmatprep.subr.mxu0 0.0
    %1848 = vmatpush1.msra.mxu0 0.0
    %1849 = vmatprep.subr.mxu0 0.0
    %1850 = vmatpush1.msra.mxu0 0.0
    %1851 = vmatprep.subr.mxu0 0.0
    %1852 = vmatpush1.msra.mxu0 0.0
    %1853 = vmatprep.subr.mxu0 0.0
    %1854 = vmatpush1.msra.mxu0 0.0
    %1855 = vmatprep.mubr.f32.mxu0 0.0
    %1856 = vmatmul.mubr.f32.gmra.mrb[0].mxu0 %v1718
    %v1857 = vpop.f32.mrb[0].mxu0
    %v1858 = vadd.f32 %v322, %v1857
    %v1859 = vpop.f32.mrb[0].mxu0
    %1860 = vdwg.mxu0
    %1861 = vmatprep.subr.mxu0 %v852
    %1862 = vmatpush1.msra.mxu0 %v851
    %1863 = vmatprep.subr.mxu0 %v855
    %1864 = vmatpush1.msra.mxu0 %v854
    %1865 = vmatprep.subr.mxu0 %v858
    %1866 = vmatpush1.msra.mxu0 %v857
    %1867 = vmatprep.subr.mxu0 %v861
    %1868 = vmatpush1.msra.mxu0 %v860
    %1869 = vmatprep.subr.mxu0 %v864
    %1870 = vmatpush1.msra.mxu0 %v863
    %1871 = vmatprep.subr.mxu0 %v867
    %1872 = vmatpush1.msra.mxu0 %v866
    %1873 = vmatprep.subr.mxu0 %v870
    %1874 = vmatpush1.msra.mxu0 %v869
    %1875 = vmatprep.subr.mxu0 %v873
    %1876 = vmatpush1.msra.mxu0 %v872
    %1877 = vmatprep.subr.mxu0 %v876
    %1878 = vmatpush1.msra.mxu0 %v875
    %1879 = vmatprep.subr.mxu0 %v879
    %1880 = vmatpush1.msra.mxu0 %v878
    %1881 = vmatprep.subr.mxu0 %v882
    %1882 = vmatpush1.msra.mxu0 %v881
    %1883 = vmatprep.subr.mxu0 %v885
    %1884 = vmatpush1.msra.mxu0 %v884
    %1885 = vmatprep.subr.mxu0 %v888
    %1886 = vmatpush1.msra.mxu0 %v887
    %1887 = vmatprep.subr.mxu0 %v891
    %1888 = vmatpush1.msra.mxu0 %v890
    %1889 = vmatprep.subr.mxu0 %v894
    %1890 = vmatpush1.msra.mxu0 %v893
    %1891 = vmatprep.subr.mxu0 %v897
    %1892 = vmatpush1.msra.mxu0 %v896
    %1893 = vmatprep.subr.mxu0 0.0
    %1894 = vmatpush1.msra.mxu0 0.0
    %1895 = vmatprep.subr.mxu0 0.0
    %1896 = vmatpush1.msra.mxu0 0.0
    %1897 = vmatprep.subr.mxu0 0.0
    %1898 = vmatpush1.msra.mxu0 0.0
    %1899 = vmatprep.subr.mxu0 0.0
    %1900 = vmatpush1.msra.mxu0 0.0
    %1901 = vmatprep.subr.mxu0 0.0
    %1902 = vmatpush1.msra.mxu0 0.0
    %1903 = vmatprep.subr.mxu0 0.0
    %1904 = vmatpush1.msra.mxu0 0.0
    %1905 = vmatprep.subr.mxu0 0.0
    %1906 = vmatpush1.msra.mxu0 0.0
    %1907 = vmatprep.subr.mxu0 0.0
    %1908 = vmatpush1.msra.mxu0 0.0
    %1909 = vmatprep.subr.mxu0 0.0
    %1910 = vmatpush1.msra.mxu0 0.0
    %1911 = vmatprep.subr.mxu0 0.0
    %1912 = vmatpush1.msra.mxu0 0.0
    %1913 = vmatprep.subr.mxu0 0.0
    %1914 = vmatpush1.msra.mxu0 0.0
    %1915 = vmatprep.subr.mxu0 0.0
    %1916 = vmatpush1.msra.mxu0 0.0
    %1917 = vmatprep.subr.mxu0 0.0
    %1918 = vmatpush1.msra.mxu0 0.0
    %1919 = vmatprep.subr.mxu0 0.0
    %1920 = vmatpush1.msra.mxu0 0.0
    %1921 = vmatprep.subr.mxu0 0.0
    %1922 = vmatpush1.msra.mxu0 0.0
    %1923 = vmatprep.subr.mxu0 0.0
    %1924 = vmatpush1.msra.mxu0 0.0
    %1925 = vmatprep.mubr.f32.mxu0 0.0
    %1926 = vmatmul.mubr.f32.gmra.mrb[0].mxu0 %v1542
    %v1927 = vpop.f32.mrb[0].mxu0
    %v1928 = vadd.f32 0.0, %v1927
    %v1929 = vpop.f32.mrb[0].mxu0
    %v1930 = vadd.f32 0.0, %v1929
    %1931 = vdwg.mxu0
    %1932 = vmatprep.subr.mxu0 0.0
    %1933 = vmatpush1.msra.mxu0 %v853
    %1934 = vmatprep.subr.mxu0 0.0
    %1935 = vmatpush1.msra.mxu0 %v856
    %1936 = vmatprep.subr.mxu0 0.0
    %1937 = vmatpush1.msra.mxu0 %v859
    %1938 = vmatprep.subr.mxu0 0.0
    %1939 = vmatpush1.msra.mxu0 %v862
    %1940 = vmatprep.subr.mxu0 0.0
    %1941 = vmatpush1.msra.mxu0 %v865
    %1942 = vmatprep.subr.mxu0 0.0
    %1943 = vmatpush1.msra.mxu0 %v868
    %1944 = vmatprep.subr.mxu0 0.0
    %1945 = vmatpush1.msra.mxu0 %v871
    %1946 = vmatprep.subr.mxu0 0.0
    %1947 = vmatpush1.msra.mxu0 %v874
    %1948 = vmatprep.subr.mxu0 0.0
    %1949 = vmatpush1.msra.mxu0 %v877
    %1950 = vmatprep.subr.mxu0 0.0
    %1951 = vmatpush1.msra.mxu0 %v880
    %1952 = vmatprep.subr.mxu0 0.0
    %1953 = vmatpush1.msra.mxu0 %v883
    %1954 = vmatprep.subr.mxu0 0.0
    %1955 = vmatpush1.msra.mxu0 %v886
    %1956 = vmatprep.subr.mxu0 0.0
    %1957 = vmatpush1.msra.mxu0 %v889
    %1958 = vmatprep.subr.mxu0 0.0
    %1959 = vmatpush1.msra.mxu0 %v892
    %1960 = vmatprep.subr.mxu0 0.0
    %1961 = vmatpush1.msra.mxu0 %v895
    %1962 = vmatprep.subr.mxu0 0.0
    %1963 = vmatpush1.msra.mxu0 %v898
    %1964 = vmatprep.subr.mxu0 0.0
    %1965 = vmatpush1.msra.mxu0 0.0
    %1966 = vmatprep.subr.mxu0 0.0
    %1967 = vmatpush1.msra.mxu0 0.0
    %1968 = vmatprep.subr.mxu0 0.0
    %1969 = vmatpush1.msra.mxu0 0.0
    %1970 = vmatprep.subr.mxu0 0.0
    %1971 = vmatpush1.msra.mxu0 0.0
    %1972 = vmatprep.subr.mxu0 0.0
    %1973 = vmatpush1.msra.mxu0 0.0
    %1974 = vmatprep.subr.mxu0 0.0
    %1975 = vmatpush1.msra.mxu0 0.0
    %1976 = vmatprep.subr.mxu0 0.0
    %1977 = vmatpush1.msra.mxu0 0.0
    %1978 = vmatprep.subr.mxu0 0.0
    %1979 = vmatpush1.msra.mxu0 0.0
    %1980 = vmatprep.subr.mxu0 0.0
    %1981 = vmatpush1.msra.mxu0 0.0
    %1982 = vmatprep.subr.mxu0 0.0
    %1983 = vmatpush1.msra.mxu0 0.0
    %1984 = vmatprep.subr.mxu0 0.0
    %1985 = vmatpush1.msra.mxu0 0.0
    %1986 = vmatprep.subr.mxu0 0.0
    %1987 = vmatpush1.msra.mxu0 0.0
    %1988 = vmatprep.subr.mxu0 0.0
    %1989 = vmatpush1.msra.mxu0 0.0
    %1990 = vmatprep.subr.mxu0 0.0
    %1991 = vmatpush1.msra.mxu0 0.0
    %1992 = vmatprep.subr.mxu0 0.0
    %1993 = vmatpush1.msra.mxu0 0.0
    %1994 = vmatprep.subr.mxu0 0.0
    %1995 = vmatpush1.msra.mxu0 0.0
    %1996 = vmatprep.mubr.f32.mxu0 0.0
    %1997 = vmatmul.mubr.f32.gmra.mrb[0].mxu0 %v1542
    %v1998 = vpop.f32.mrb[0].mxu0
    %v1999 = vadd.f32 0.0, %v1998
    %v2000 = vpop.f32.mrb[0].mxu0
    %2001 = vdwg.mxu0
    %v2002 = vadd.f32 %v1787, %v1928
    %v2003 = vadd.f32 %v1789, %v1930
    %v2004 = vxor.u32 %v2002, 2147483648
    %v2005 = vxor.u32 %v2003, 2147483648
    %v2006 = vmul.f32 %v2004, 1.442695
    %v2007 = vpow.pop %v2006
    %v2008 = vmul.f32 %v2005, 1.442695
    %v2009 = vpow.pop %v2008
    %v2010 = vadd.f32 %v2007, 1.0
    %v2011 = vadd.f32 %v2009, 1.0
    %v2012 = vrcp.pop %v2010
    %v2013 = vmul.f32 1.0, %v2012
    %v2014 = vrcp.pop %v2011
    %v2015 = vmul.f32 1.0, %v2014
    %v2016 = vadd.f32 %v1999, %v244
    %v2017 = vmul.f32 %v2013, %v2016
    %v2018 = vadd.f32 %v1858, %v2017
    %v2019 = vtanh.pop %v2018
    %v2020 = vsub.f32 1.0, %v2015
    %v2021 = vmul.f32 %v2020, %v2019
    %v2022 = vmul.f32 %v2015, %v1542
    %v2023 = vadd.f32 %v2021, %v2022
    %2024 = vmatprep.subr.mxu0 %v485
    %2025 = vmatpush1.msra.mxu0 %v484
    %2026 = vmatprep.subr.mxu0 %v488
    %2027 = vmatpush1.msra.mxu0 %v487
    %2028 = vmatprep.subr.mxu0 %v491
    %2029 = vmatpush1.msra.mxu0 %v490
    %2030 = vmatprep.subr.mxu0 %v494
    %2031 = vmatpush1.msra.mxu0 %v493
    %2032 = vmatprep.subr.mxu0 %v497
    %2033 = vmatpush1.msra.mxu0 %v496
    %2034 = vmatprep.subr.mxu0 %v500
    %2035 = vmatpush1.msra.mxu0 %v499
    %2036 = vmatprep.subr.mxu0 %v503
    %2037 = vmatpush1.msra.mxu0 %v502
    %2038 = vmatprep.subr.mxu0 %v506
    %2039 = vmatpush1.msra.mxu0 %v505
    %2040 = vmatprep.subr.mxu0 %v509
    %2041 = vmatpush1.msra.mxu0 %v508
    %2042 = vmatprep.subr.mxu0 %v512
    %2043 = vmatpush1.msra.mxu0 %v511
    %2044 = vmatprep.subr.mxu0 %v515
    %2045 = vmatpush1.msra.mxu0 %v514
    %2046 = vmatprep.subr.mxu0 %v518
    %2047 = vmatpush1.msra.mxu0 %v517
    %2048 = vmatprep.subr.mxu0 %v521
    %2049 = vmatpush1.msra.mxu0 %v520
    %2050 = vmatprep.subr.mxu0 %v524
    %2051 = vmatpush1.msra.mxu0 %v523
    %2052 = vmatprep.subr.mxu0 %v527
    %2053 = vmatpush1.msra.mxu0 %v526
    %2054 = vmatprep.subr.mxu0 %v530
    %2055 = vmatpush1.msra.mxu0 %v529
    %2056 = vmatprep.subr.mxu0 0.0
    %2057 = vmatpush1.msra.mxu0 0.0
    %2058 = vmatprep.subr.mxu0 0.0
    %2059 = vmatpush1.msra.mxu0 0.0
    %2060 = vmatprep.subr.mxu0 0.0
    %2061 = vmatpush1.msra.mxu0 0.0
    %2062 = vmatprep.subr.mxu0 0.0
    %2063 = vmatpush1.msra.mxu0 0.0
    %2064 = vmatprep.subr.mxu0 0.0
    %2065 = vmatpush1.msra.mxu0 0.0
    %2066 = vmatprep.subr.mxu0 0.0
    %2067 = vmatpush1.msra.mxu0 0.0
    %2068 = vmatprep.subr.mxu0 0.0
    %2069 = vmatpush1.msra.mxu0 0.0
    %2070 = vmatprep.subr.mxu0 0.0
    %2071 = vmatpush1.msra.mxu0 0.0
    %2072 = vmatprep.subr.mxu0 0.0
    %2073 = vmatpush1.msra.mxu0 0.0
    %2074 = vmatprep.subr.mxu0 0.0
    %2075 = vmatpush1.msra.mxu0 0.0
    %2076 = vmatprep.subr.mxu0 0.0
    %2077 = vmatpush1.msra.mxu0 0.0
    %2078 = vmatprep.subr.mxu0 0.0
    %2079 = vmatpush1.msra.mxu0 0.0
    %2080 = vmatprep.subr.mxu0 0.0
    %2081 = vmatpush1.msra.mxu0 0.0
    %2082 = vmatprep.subr.mxu0 0.0
    %2083 = vmatpush1.msra.mxu0 0.0
    %2084 = vmatprep.subr.mxu0 0.0
    %2085 = vmatpush1.msra.mxu0 0.0
    %2086 = vmatprep.subr.mxu0 0.0
    %2087 = vmatpush1.msra.mxu0 0.0
    %2088 = vmatprep.mubr.f32.mxu0 0.0
    %2089 = vmatmul.mubr.f32.gmra.mrb[0].mxu0 %v1718
    %v2090 = vpop.f32.mrb[0].mxu0
    %v2091 = vadd.f32 0.0, %v2090
    %v2092 = vpop.f32.mrb[0].mxu0
    %v2093 = vadd.f32 0.0, %v2092
    %2094 = vdwg.mxu0
    %2095 = vmatprep.subr.mxu0 0.0
    %2096 = vmatpush1.msra.mxu0 %v486
    %2097 = vmatprep.subr.mxu0 0.0
    %2098 = vmatpush1.msra.mxu0 %v489
    %2099 = vmatprep.subr.mxu0 0.0
    %2100 = vmatpush1.msra.mxu0 %v492
    %2101 = vmatprep.subr.mxu0 0.0
    %2102 = vmatpush1.msra.mxu0 %v495
    %2103 = vmatprep.subr.mxu0 0.0
    %2104 = vmatpush1.msra.mxu0 %v498
    %2105 = vmatprep.subr.mxu0 0.0
    %2106 = vmatpush1.msra.mxu0 %v501
    %2107 = vmatprep.subr.mxu0 0.0
    %2108 = vmatpush1.msra.mxu0 %v504
    %2109 = vmatprep.subr.mxu0 0.0
    %2110 = vmatpush1.msra.mxu0 %v507
    %2111 = vmatprep.subr.mxu0 0.0
    %2112 = vmatpush1.msra.mxu0 %v510
    %2113 = vmatprep.subr.mxu0 0.0
    %2114 = vmatpush1.msra.mxu0 %v513
    %2115 = vmatprep.subr.mxu0 0.0
    %2116 = vmatpush1.msra.mxu0 %v516
    %2117 = vmatprep.subr.mxu0 0.0
    %2118 = vmatpush1.msra.mxu0 %v519
    %2119 = vmatprep.subr.mxu0 0.0
    %2120 = vmatpush1.msra.mxu0 %v522
    %2121 = vmatprep.subr.mxu0 0.0
    %2122 = vmatpush1.msra.mxu0 %v525
    %2123 = vmatprep.subr.mxu0 0.0
    %2124 = vmatpush1.msra.mxu0 %v528
    %2125 = vmatprep.subr.mxu0 0.0
    %2126 = vmatpush1.msra.mxu0 %v531
    %2127 = vmatprep.subr.mxu0 0.0
    %2128 = vmatpush1.msra.mxu0 0.0
    %2129 = vmatprep.subr.mxu0 0.0
    %2130 = vmatpush1.msra.mxu0 0.0
    %2131 = vmatprep.subr.mxu0 0.0
    %2132 = vmatpush1.msra.mxu0 0.0
    %2133 = vmatprep.subr.mxu0 0.0
    %2134 = vmatpush1.msra.mxu0 0.0
    %2135 = vmatprep.subr.mxu0 0.0
    %2136 = vmatpush1.msra.mxu0 0.0
    %2137 = vmatprep.subr.mxu0 0.0
    %2138 = vmatpush1.msra.mxu0 0.0
    %2139 = vmatprep.subr.mxu0 0.0
    %2140 = vmatpush1.msra.mxu0 0.0
    %2141 = vmatprep.subr.mxu0 0.0
    %2142 = vmatpush1.msra.mxu0 0.0
    %2143 = vmatprep.subr.mxu0 0.0
    %2144 = vmatpush1.msra.mxu0 0.0
    %2145 = vmatprep.subr.mxu0 0.0
    %2146 = vmatpush1.msra.mxu0 0.0
    %2147 = vmatprep.subr.mxu0 0.0
    %2148 = vmatpush1.msra.mxu0 0.0
    %2149 = vmatprep.subr.mxu0 0.0
    %2150 = vmatpush1.msra.mxu0 0.0
    %2151 = vmatprep.subr.mxu0 0.0
    %2152 = vmatpush1.msra.mxu0 0.0
    %2153 = vmatprep.subr.mxu0 0.0
    %2154 = vmatpush1.msra.mxu0 0.0
    %2155 = vmatprep.subr.mxu0 0.0
    %2156 = vmatpush1.msra.mxu0 0.0
    %2157 = vmatprep.subr.mxu0 0.0
    %2158 = vmatpush1.msra.mxu0 0.0
    %2159 = vmatprep.mubr.f32.mxu0 0.0
    %2160 = vmatmul.mubr.f32.gmra.mrb[0].mxu0 %v1718
    %v2161 = vpop.f32.mrb[0].mxu0
    %v2162 = vadd.f32 0.0, %v2161
    %v2163 = vpop.f32.mrb[0].mxu0
    %2164 = vdwg.mxu0
    %v2165 = vadd.f32 %v162, %v2091
    %v2166 = vadd.f32 %v164, %v2093
    %v2167 = vxor.u32 %v2165, 2147483648
    %v2168 = vxor.u32 %v2166, 2147483648
    %v2169 = vmul.f32 %v2167, 1.442695
    %v2170 = vpow.pop %v2169
    %v2171 = vmul.f32 %v2168, 1.442695
    %v2172 = vpow.pop %v2171
    %v2173 = vadd.f32 %v2170, 1.0
    %v2174 = vadd.f32 %v2172, 1.0
    %v2175 = vrcp.pop %v2173
    %v2176 = vmul.f32 1.0, %v2175
    %v2177 = vrcp.pop %v2174
    %v2178 = vmul.f32 1.0, %v2177
    %v2179 = vadd.f32 %v2162, %v243
    %v2180 = vmul.f32 %v2176, %v2179
    %v2181 = vadd.f32 %v238, %v2180
    %v2182 = vtanh.pop %v2181
    %v2183 = vsub.f32 1.0, %v2178
    %v2184 = vmul.f32 %v2183, %v2182
    %v2185 = vmul.f32 %v2178, %v1718
    %v2186 = vadd.f32 %v2184, %v2185
    %2187 = vmatprep.subr.mxu0 %v263
    %2188 = vmatpush1.msra.mxu0 %v262
    %2189 = vmatprep.subr.mxu0 %v266
    %2190 = vmatpush1.msra.mxu0 %v265
    %2191 = vmatprep.subr.mxu0 %v269
    %2192 = vmatpush1.msra.mxu0 %v268
    %2193 = vmatprep.subr.mxu0 %v272
    %2194 = vmatpush1.msra.mxu0 %v271
    %2195 = vmatprep.subr.mxu0 %v275
    %2196 = vmatpush1.msra.mxu0 %v274
    %2197 = vmatprep.subr.mxu0 %v278
    %2198 = vmatpush1.msra.mxu0 %v277
    %2199 = vmatprep.subr.mxu0 %v281
    %2200 = vmatpush1.msra.mxu0 %v280
    %2201 = vmatprep.subr.mxu0 %v284
    %2202 = vmatpush1.msra.mxu0 %v283
    %2203 = vmatprep.subr.mxu0 %v287
    %2204 = vmatpush1.msra.mxu0 %v286
    %2205 = vmatprep.subr.mxu0 %v290
    %2206 = vmatpush1.msra.mxu0 %v289
    %2207 = vmatprep.subr.mxu0 %v293
    %2208 = vmatpush1.msra.mxu0 %v292
    %2209 = vmatprep.subr.mxu0 %v296
    %2210 = vmatpush1.msra.mxu0 %v295
    %2211 = vmatprep.subr.mxu0 %v299
    %2212 = vmatpush1.msra.mxu0 %v298
    %2213 = vmatprep.subr.mxu0 %v302
    %2214 = vmatpush1.msra.mxu0 %v301
    %2215 = vmatprep.subr.mxu0 %v305
    %2216 = vmatpush1.msra.mxu0 %v304
    %2217 = vmatprep.subr.mxu0 %v308
    %2218 = vmatpush1.msra.mxu0 %v307
    %2219 = vmatprep.subr.mxu0 0.0
    %2220 = vmatpush1.msra.mxu0 0.0
    %2221 = vmatprep.subr.mxu0 0.0
    %2222 = vmatpush1.msra.mxu0 0.0
    %2223 = vmatprep.subr.mxu0 0.0
    %2224 = vmatpush1.msra.mxu0 0.0
    %2225 = vmatprep.subr.mxu0 0.0
    %2226 = vmatpush1.msra.mxu0 0.0
    %2227 = vmatprep.subr.mxu0 0.0
    %2228 = vmatpush1.msra.mxu0 0.0
    %2229 = vmatprep.subr.mxu0 0.0
    %2230 = vmatpush1.msra.mxu0 0.0
    %2231 = vmatprep.subr.mxu0 0.0
    %2232 = vmatpush1.msra.mxu0 0.0
    %2233 = vmatprep.subr.mxu0 0.0
    %2234 = vmatpush1.msra.mxu0 0.0
    %2235 = vmatprep.subr.mxu0 0.0
    %2236 = vmatpush1.msra.mxu0 0.0
    %2237 = vmatprep.subr.mxu0 0.0
    %2238 = vmatpush1.msra.mxu0 0.0
    %2239 = vmatprep.subr.mxu0 0.0
    %2240 = vmatpush1.msra.mxu0 0.0
    %2241 = vmatprep.subr.mxu0 0.0
    %2242 = vmatpush1.msra.mxu0 0.0
    %2243 = vmatprep.subr.mxu0 0.0
    %2244 = vmatpush1.msra.mxu0 0.0
    %2245 = vmatprep.subr.mxu0 0.0
    %2246 = vmatpush1.msra.mxu0 0.0
    %2247 = vmatprep.subr.mxu0 0.0
    %2248 = vmatpush1.msra.mxu0 0.0
    %2249 = vmatprep.subr.mxu0 0.0
    %2250 = vmatpush1.msra.mxu0 0.0
    %2251 = vmatprep.mubr.f32.mxu0 0.0
    %2252 = vmatmul.mubr.f32.gmra.mrb[0].mxu0 %v2186
    %v2253 = vpop.f32.mrb[0].mxu0
    %v2254 = vadd.f32 %v314, %v2253
    %v2255 = vpop.f32.mrb[0].mxu0
    %v2256 = vadd.f32 %v318, %v2255
    %2257 = vdwg.mxu0
    %2258 = vmatprep.subr.mxu0 0.0
    %2259 = vmatpush1.msra.mxu0 %v264
    %2260 = vmatprep.subr.mxu0 0.0
    %2261 = vmatpush1.msra.mxu0 %v267
    %2262 = vmatprep.subr.mxu0 0.0
    %2263 = vmatpush1.msra.mxu0 %v270
    %2264 = vmatprep.subr.mxu0 0.0
    %2265 = vmatpush1.msra.mxu0 %v273
    %2266 = vmatprep.subr.mxu0 0.0
    %2267 = vmatpush1.msra.mxu0 %v276
    %2268 = vmatprep.subr.mxu0 0.0
    %2269 = vmatpush1.msra.mxu0 %v279
    %2270 = vmatprep.subr.mxu0 0.0
    %2271 = vmatpush1.msra.mxu0 %v282
    %2272 = vmatprep.subr.mxu0 0.0
    %2273 = vmatpush1.msra.mxu0 %v285
    %2274 = vmatprep.subr.mxu0 0.0
    %2275 = vmatpush1.msra.mxu0 %v288
    %2276 = vmatprep.subr.mxu0 0.0
    %2277 = vmatpush1.msra.mxu0 %v291
    %2278 = vmatprep.subr.mxu0 0.0
    %2279 = vmatpush1.msra.mxu0 %v294
    %2280 = vmatprep.subr.mxu0 0.0
    %2281 = vmatpush1.msra.mxu0 %v297
    %2282 = vmatprep.subr.mxu0 0.0
    %2283 = vmatpush1.msra.mxu0 %v300
    %2284 = vmatprep.subr.mxu0 0.0
    %2285 = vmatpush1.msra.mxu0 %v303
    %2286 = vmatprep.subr.mxu0 0.0
    %2287 = vmatpush1.msra.mxu0 %v306
    %2288 = vmatprep.subr.mxu0 0.0
    %2289 = vmatpush1.msra.mxu0 %v309
    %2290 = vmatprep.subr.mxu0 0.0
    %2291 = vmatpush1.msra.mxu0 0.0
    %2292 = vmatprep.subr.mxu0 0.0
    %2293 = vmatpush1.msra.mxu0 0.0
    %2294 = vmatprep.subr.mxu0 0.0
    %2295 = vmatpush1.msra.mxu0 0.0
    %2296 = vmatprep.subr.mxu0 0.0
    %2297 = vmatpush1.msra.mxu0 0.0
    %2298 = vmatprep.subr.mxu0 0.0
    %2299 = vmatpush1.msra.mxu0 0.0
    %2300 = vmatprep.subr.mxu0 0.0
    %2301 = vmatpush1.msra.mxu0 0.0
    %2302 = vmatprep.subr.mxu0 0.0
    %2303 = vmatpush1.msra.mxu0 0.0
    %2304 = vmatprep.subr.mxu0 0.0
    %2305 = vmatpush1.msra.mxu0 0.0
    %2306 = vmatprep.subr.mxu0 0.0
    %2307 = vmatpush1.msra.mxu0 0.0
    %2308 = vmatprep.subr.mxu0 0.0
    %2309 = vmatpush1.msra.mxu0 0.0
    %2310 = vmatprep.subr.mxu0 0.0
    %2311 = vmatpush1.msra.mxu0 0.0
    %2312 = vmatprep.subr.mxu0 0.0
    %2313 = vmatpush1.msra.mxu0 0.0
    %2314 = vmatprep.subr.mxu0 0.0
    %2315 = vmatpush1.msra.mxu0 0.0
    %2316 = vmatprep.subr.mxu0 0.0
    %2317 = vmatpush1.msra.mxu0 0.0
    %2318 = vmatprep.subr.mxu0 0.0
    %2319 = vmatpush1.msra.mxu0 0.0
    %2320 = vmatprep.subr.mxu0 0.0
    %2321 = vmatpush1.msra.mxu0 0.0
    %2322 = vmatprep.mubr.f32.mxu0 0.0
    %2323 = vmatmul.mubr.f32.gmra.mrb[0].mxu0 %v2186
    %v2324 = vpop.f32.mrb[0].mxu0
    %v2325 = vadd.f32 %v322, %v2324
    %v2326 = vpop.f32.mrb[0].mxu0
    %2327 = vdwg.mxu0
    %2328 = vmatprep.subr.mxu0 %v852
    %2329 = vmatpush1.msra.mxu0 %v851
    %2330 = vmatprep.subr.mxu0 %v855
    %2331 = vmatpush1.msra.mxu0 %v854
    %2332 = vmatprep.subr.mxu0 %v858
    %2333 = vmatpush1.msra.mxu0 %v857
    %2334 = vmatprep.subr.mxu0 %v861
    %2335 = vmatpush1.msra.mxu0 %v860
    %2336 = vmatprep.subr.mxu0 %v864
    %2337 = vmatpush1.msra.mxu0 %v863
    %2338 = vmatprep.subr.mxu0 %v867
    %2339 = vmatpush1.msra.mxu0 %v866
    %2340 = vmatprep.subr.mxu0 %v870
    %2341 = vmatpush1.msra.mxu0 %v869
    %2342 = vmatprep.subr.mxu0 %v873
    %2343 = vmatpush1.msra.mxu0 %v872
    %2344 = vmatprep.subr.mxu0 %v876
    %2345 = vmatpush1.msra.mxu0 %v875
    %2346 = vmatprep.subr.mxu0 %v879
    %2347 = vmatpush1.msra.mxu0 %v878
    %2348 = vmatprep.subr.mxu0 %v882
    %2349 = vmatpush1.msra.mxu0 %v881
    %2350 = vmatprep.subr.mxu0 %v885
    %2351 = vmatpush1.msra.mxu0 %v884
    %2352 = vmatprep.subr.mxu0 %v888
    %2353 = vmatpush1.msra.mxu0 %v887
    %2354 = vmatprep.subr.mxu0 %v891
    %2355 = vmatpush1.msra.mxu0 %v890
    %2356 = vmatprep.subr.mxu0 %v894
    %2357 = vmatpush1.msra.mxu0 %v893
    %2358 = vmatprep.subr.mxu0 %v897
    %2359 = vmatpush1.msra.mxu0 %v896
    %2360 = vmatprep.subr.mxu0 0.0
    %2361 = vmatpush1.msra.mxu0 0.0
    %2362 = vmatprep.subr.mxu0 0.0
    %2363 = vmatpush1.msra.mxu0 0.0
    %2364 = vmatprep.subr.mxu0 0.0
    %2365 = vmatpush1.msra.mxu0 0.0
    %2366 = vmatprep.subr.mxu0 0.0
    %2367 = vmatpush1.msra.mxu0 0.0
    %2368 = vmatprep.subr.mxu0 0.0
    %2369 = vmatpush1.msra.mxu0 0.0
    %2370 = vmatprep.subr.mxu0 0.0
    %2371 = vmatpush1.msra.mxu0 0.0
    %2372 = vmatprep.subr.mxu0 0.0
    %2373 = vmatpush1.msra.mxu0 0.0
    %2374 = vmatprep.subr.mxu0 0.0
    %2375 = vmatpush1.msra.mxu0 0.0
    %2376 = vmatprep.subr.mxu0 0.0
    %2377 = vmatpush1.msra.mxu0 0.0
    %2378 = vmatprep.subr.mxu0 0.0
    %2379 = vmatpush1.msra.mxu0 0.0
    %2380 = vmatprep.subr.mxu0 0.0
    %2381 = vmatpush1.msra.mxu0 0.0
    %2382 = vmatprep.subr.mxu0 0.0
    %2383 = vmatpush1.msra.mxu0 0.0
    %2384 = vmatprep.subr.mxu0 0.0
    %2385 = vmatpush1.msra.mxu0 0.0
    %2386 = vmatprep.subr.mxu0 0.0
    %2387 = vmatpush1.msra.mxu0 0.0
    %2388 = vmatprep.subr.mxu0 0.0
    %2389 = vmatpush1.msra.mxu0 0.0
    %2390 = vmatprep.subr.mxu0 0.0
    %2391 = vmatpush1.msra.mxu0 0.0
    %2392 = vmatprep.mubr.f32.mxu0 0.0
    %2393 = vmatmul.mubr.f32.gmra.mrb[0].mxu0 %v2023
    %v2394 = vpop.f32.mrb[0].mxu0
    %v2395 = vadd.f32 0.0, %v2394
    %v2396 = vpop.f32.mrb[0].mxu0
    %v2397 = vadd.f32 0.0, %v2396
    %2398 = vdwg.mxu0
    %2399 = vmatprep.subr.mxu0 0.0
    %2400 = vmatpush1.msra.mxu0 %v853
    %2401 = vmatprep.subr.mxu0 0.0
    %2402 = vmatpush1.msra.mxu0 %v856
    %2403 = vmatprep.subr.mxu0 0.0
    %2404 = vmatpush1.msra.mxu0 %v859
    %2405 = vmatprep.subr.mxu0 0.0
    %2406 = vmatpush1.msra.mxu0 %v862
    %2407 = vmatprep.subr.mxu0 0.0
    %2408 = vmatpush1.msra.mxu0 %v865
    %2409 = vmatprep.subr.mxu0 0.0
    %2410 = vmatpush1.msra.mxu0 %v868
    %2411 = vmatprep.subr.mxu0 0.0
    %2412 = vmatpush1.msra.mxu0 %v871
    %2413 = vmatprep.subr.mxu0 0.0
    %2414 = vmatpush1.msra.mxu0 %v874
    %2415 = vmatprep.subr.mxu0 0.0
    %2416 = vmatpush1.msra.mxu0 %v877
    %2417 = vmatprep.subr.mxu0 0.0
    %2418 = vmatpush1.msra.mxu0 %v880
    %2419 = vmatprep.subr.mxu0 0.0
    %2420 = vmatpush1.msra.mxu0 %v883
    %2421 = vmatprep.subr.mxu0 0.0
    %2422 = vmatpush1.msra.mxu0 %v886
    %2423 = vmatprep.subr.mxu0 0.0
    %2424 = vmatpush1.msra.mxu0 %v889
    %2425 = vmatprep.subr.mxu0 0.0
    %2426 = vmatpush1.msra.mxu0 %v892
    %2427 = vmatprep.subr.mxu0 0.0
    %2428 = vmatpush1.msra.mxu0 %v895
    %2429 = vmatprep.subr.mxu0 0.0
    %2430 = vmatpush1.msra.mxu0 %v898
    %2431 = vmatprep.subr.mxu0 0.0
    %2432 = vmatpush1.msra.mxu0 0.0
    %2433 = vmatprep.subr.mxu0 0.0
    %2434 = vmatpush1.msra.mxu0 0.0
    %2435 = vmatprep.subr.mxu0 0.0
    %2436 = vmatpush1.msra.mxu0 0.0
    %2437 = vmatprep.subr.mxu0 0.0
    %2438 = vmatpush1.msra.mxu0 0.0
    %2439 = vmatprep.subr.mxu0 0.0
    %2440 = vmatpush1.msra.mxu0 0.0
    %2441 = vmatprep.subr.mxu0 0.0
    %2442 = vmatpush1.msra.mxu0 0.0
    %2443 = vmatprep.subr.mxu0 0.0
    %2444 = vmatpush1.msra.mxu0 0.0
    %2445 = vmatprep.subr.mxu0 0.0
    %2446 = vmatpush1.msra.mxu0 0.0
    %2447 = vmatprep.subr.mxu0 0.0
    %2448 = vmatpush1.msra.mxu0 0.0
    %2449 = vmatprep.subr.mxu0 0.0
    %2450 = vmatpush1.msra.mxu0 0.0
    %2451 = vmatprep.subr.mxu0 0.0
    %2452 = vmatpush1.msra.mxu0 0.0
    %2453 = vmatprep.subr.mxu0 0.0
    %2454 = vmatpush1.msra.mxu0 0.0
    %2455 = vmatprep.subr.mxu0 0.0
    %2456 = vmatpush1.msra.mxu0 0.0
    %2457 = vmatprep.subr.mxu0 0.0
    %2458 = vmatpush1.msra.mxu0 0.0
    %2459 = vmatprep.subr.mxu0 0.0
    %2460 = vmatpush1.msra.mxu0 0.0
    %2461 = vmatprep.subr.mxu0 0.0
    %2462 = vmatpush1.msra.mxu0 0.0
    %2463 = vmatprep.mubr.f32.mxu0 0.0
    %2464 = vmatmul.mubr.f32.gmra.mrb[0].mxu0 %v2023
    %v2465 = vpop.f32.mrb[0].mxu0
    %v2466 = vadd.f32 0.0, %v2465
    %v2467 = vpop.f32.mrb[0].mxu0
    %2468 = vdwg.mxu0
    %v2469 = vadd.f32 %v2254, %v2395
    %v2470 = vadd.f32 %v2256, %v2397
    %v2471 = vxor.u32 %v2469, 2147483648
    %v2472 = vxor.u32 %v2470, 2147483648
    %v2473 = vmul.f32 %v2471, 1.442695
    %v2474 = vpow.pop %v2473
    %v2475 = vmul.f32 %v2472, 1.442695
    %v2476 = vpow.pop %v2475
    %v2477 = vadd.f32 %v2474, 1.0
    %v2478 = vadd.f32 %v2476, 1.0
    %v2479 = vrcp.pop %v2477
    %v2480 = vmul.f32 1.0, %v2479
    %v2481 = vrcp.pop %v2478
    %v2482 = vmul.f32 1.0, %v2481
    %v2483 = vadd.f32 %v2466, %v244
    %v2484 = vmul.f32 %v2480, %v2483
    %v2485 = vadd.f32 %v2325, %v2484
    %v2486 = vtanh.pop %v2485
    %v2487 = vsub.f32 1.0, %v2482
    %v2488 = vmul.f32 %v2487, %v2486
    %v2489 = vmul.f32 %v2482, %v2023
    %v2490 = vadd.f32 %v2488, %v2489
    %2491 = vmatprep.subr.mxu0 %v485
    %2492 = vmatpush1.msra.mxu0 %v484
    %2493 = vmatprep.subr.mxu0 %v488
    %2494 = vmatpush1.msra.mxu0 %v487
    %2495 = vmatprep.subr.mxu0 %v491
    %2496 = vmatpush1.msra.mxu0 %v490
    %2497 = vmatprep.subr.mxu0 %v494
    %2498 = vmatpush1.msra.mxu0 %v493
    %2499 = vmatprep.subr.mxu0 %v497
    %2500 = vmatpush1.msra.mxu0 %v496
    %2501 = vmatprep.subr.mxu0 %v500
    %2502 = vmatpush1.msra.mxu0 %v499
    %2503 = vmatprep.subr.mxu0 %v503
    %2504 = vmatpush1.msra.mxu0 %v502
    %2505 = vmatprep.subr.mxu0 %v506
    %2506 = vmatpush1.msra.mxu0 %v505
    %2507 = vmatprep.subr.mxu0 %v509
    %2508 = vmatpush1.msra.mxu0 %v508
    %2509 = vmatprep.subr.mxu0 %v512
    %2510 = vmatpush1.msra.mxu0 %v511
    %2511 = vmatprep.subr.mxu0 %v515
    %2512 = vmatpush1.msra.mxu0 %v514
    %2513 = vmatprep.subr.mxu0 %v518
    %2514 = vmatpush1.msra.mxu0 %v517
    %2515 = vmatprep.subr.mxu0 %v521
    %2516 = vmatpush1.msra.mxu0 %v520
    %2517 = vmatprep.subr.mxu0 %v524
    %2518 = vmatpush1.msra.mxu0 %v523
    %2519 = vmatprep.subr.mxu0 %v527
    %2520 = vmatpush1.msra.mxu0 %v526
    %2521 = vmatprep.subr.mxu0 %v530
    %2522 = vmatpush1.msra.mxu0 %v529
    %2523 = vmatprep.subr.mxu0 0.0
    %2524 = vmatpush1.msra.mxu0 0.0
    %2525 = vmatprep.subr.mxu0 0.0
    %2526 = vmatpush1.msra.mxu0 0.0
    %2527 = vmatprep.subr.mxu0 0.0
    %2528 = vmatpush1.msra.mxu0 0.0
    %2529 = vmatprep.subr.mxu0 0.0
    %2530 = vmatpush1.msra.mxu0 0.0
    %2531 = vmatprep.subr.mxu0 0.0
    %2532 = vmatpush1.msra.mxu0 0.0
    %2533 = vmatprep.subr.mxu0 0.0
    %2534 = vmatpush1.msra.mxu0 0.0
    %2535 = vmatprep.subr.mxu0 0.0
    %2536 = vmatpush1.msra.mxu0 0.0
    %2537 = vmatprep.subr.mxu0 0.0
    %2538 = vmatpush1.msra.mxu0 0.0
    %2539 = vmatprep.subr.mxu0 0.0
    %2540 = vmatpush1.msra.mxu0 0.0
    %2541 = vmatprep.subr.mxu0 0.0
    %2542 = vmatpush1.msra.mxu0 0.0
    %2543 = vmatprep.subr.mxu0 0.0
    %2544 = vmatpush1.msra.mxu0 0.0
    %2545 = vmatprep.subr.mxu0 0.0
    %2546 = vmatpush1.msra.mxu0 0.0
    %2547 = vmatprep.subr.mxu0 0.0
    %2548 = vmatpush1.msra.mxu0 0.0
    %2549 = vmatprep.subr.mxu0 0.0
    %2550 = vmatpush1.msra.mxu0 0.0
    %2551 = vmatprep.subr.mxu0 0.0
    %2552 = vmatpush1.msra.mxu0 0.0
    %2553 = vmatprep.subr.mxu0 0.0
    %2554 = vmatpush1.msra.mxu0 0.0
    %2555 = vmatprep.mubr.f32.mxu0 0.0
    %2556 = vmatmul.mubr.f32.gmra.mrb[0].mxu0 %v2186
    %v2557 = vpop.f32.mrb[0].mxu0
    %v2558 = vadd.f32 0.0, %v2557
    %v2559 = vpop.f32.mrb[0].mxu0
    %v2560 = vadd.f32 0.0, %v2559
    %2561 = vdwg.mxu0
    %2562 = vmatprep.subr.mxu0 0.0
    %2563 = vmatpush1.msra.mxu0 %v486
    %2564 = vmatprep.subr.mxu0 0.0
    %2565 = vmatpush1.msra.mxu0 %v489
    %2566 = vmatprep.subr.mxu0 0.0
    %2567 = vmatpush1.msra.mxu0 %v492
    %2568 = vmatprep.subr.mxu0 0.0
    %2569 = vmatpush1.msra.mxu0 %v495
    %2570 = vmatprep.subr.mxu0 0.0
    %2571 = vmatpush1.msra.mxu0 %v498
    %2572 = vmatprep.subr.mxu0 0.0
    %2573 = vmatpush1.msra.mxu0 %v501
    %2574 = vmatprep.subr.mxu0 0.0
    %2575 = vmatpush1.msra.mxu0 %v504
    %2576 = vmatprep.subr.mxu0 0.0
    %2577 = vmatpush1.msra.mxu0 %v507
    %2578 = vmatprep.subr.mxu0 0.0
    %2579 = vmatpush1.msra.mxu0 %v510
    %2580 = vmatprep.subr.mxu0 0.0
    %2581 = vmatpush1.msra.mxu0 %v513
    %2582 = vmatprep.subr.mxu0 0.0
    %2583 = vmatpush1.msra.mxu0 %v516
    %2584 = vmatprep.subr.mxu0 0.0
    %2585 = vmatpush1.msra.mxu0 %v519
    %2586 = vmatprep.subr.mxu0 0.0
    %2587 = vmatpush1.msra.mxu0 %v522
    %2588 = vmatprep.subr.mxu0 0.0
    %2589 = vmatpush1.msra.mxu0 %v525
    %2590 = vmatprep.subr.mxu0 0.0
    %2591 = vmatpush1.msra.mxu0 %v528
    %2592 = vmatprep.subr.mxu0 0.0
    %2593 = vmatpush1.msra.mxu0 %v531
    %2594 = vmatprep.subr.mxu0 0.0
    %2595 = vmatpush1.msra.mxu0 0.0
    %2596 = vmatprep.subr.mxu0 0.0
    %2597 = vmatpush1.msra.mxu0 0.0
    %2598 = vmatprep.subr.mxu0 0.0
    %2599 = vmatpush1.msra.mxu0 0.0
    %2600 = vmatprep.subr.mxu0 0.0
    %2601 = vmatpush1.msra.mxu0 0.0
    %2602 = vmatprep.subr.mxu0 0.0
    %2603 = vmatpush1.msra.mxu0 0.0
    %2604 = vmatprep.subr.mxu0 0.0
    %2605 = vmatpush1.msra.mxu0 0.0
    %2606 = vmatprep.subr.mxu0 0.0
    %2607 = vmatpush1.msra.mxu0 0.0
    %2608 = vmatprep.subr.mxu0 0.0
    %2609 = vmatpush1.msra.mxu0 0.0
    %2610 = vmatprep.subr.mxu0 0.0
    %2611 = vmatpush1.msra.mxu0 0.0
    %2612 = vmatprep.subr.mxu0 0.0
    %2613 = vmatpush1.msra.mxu0 0.0
    %2614 = vmatprep.subr.mxu0 0.0
    %2615 = vmatpush1.msra.mxu0 0.0
    %2616 = vmatprep.subr.mxu0 0.0
    %2617 = vmatpush1.msra.mxu0 0.0
    %2618 = vmatprep.subr.mxu0 0.0
    %2619 = vmatpush1.msra.mxu0 0.0
    %2620 = vmatprep.subr.mxu0 0.0
    %2621 = vmatpush1.msra.mxu0 0.0
    %2622 = vmatprep.subr.mxu0 0.0
    %2623 = vmatpush1.msra.mxu0 0.0
    %2624 = vmatprep.subr.mxu0 0.0
    %2625 = vmatpush1.msra.mxu0 0.0
    %2626 = vmatprep.mubr.f32.mxu0 0.0
    %2627 = vmatmul.mubr.f32.gmra.mrb[0].mxu0 %v2186
    %v2628 = vpop.f32.mrb[0].mxu0
    %v2629 = vadd.f32 0.0, %v2628
    %v2630 = vpop.f32.mrb[0].mxu0
    %2631 = vdwg.mxu0
    %v2634 = vrot.slane %v2558, 6
    %v2635 = vrot.slane %v2560, 6
    %v2638 = vadd.f32 %v162, %v2634
    %v2639 = vadd.f32 %v164, %v2635
    %v2640 = vxor.u32 %v2638, 2147483648
    %v2641 = vxor.u32 %v2639, 2147483648
    %v2642 = vmul.f32 %v2640, 1.442695
    %v2643 = vpow.pop %v2642
    %v2644 = vmul.f32 %v2641, 1.442695
    %v2645 = vpow.pop %v2644
    %v2646 = vadd.f32 %v2643, 1.0
    %v2647 = vadd.f32 %v2645, 1.0
    %v2648 = vrcp.pop %v2646
    %v2649 = vmul.f32 1.0, %v2648
    %v2650 = vrcp.pop %v2647
    %v2651 = vmul.f32 1.0, %v2650
    %v2652 = vadd.f32 %v2629, %v243
    %v2654 = vrot.slane %v2652, 6
    %v2656 = vmul.f32 %v2649, %v2654
    %v2657 = vadd.f32 %v238, %v2656
    %v2658 = vtanh.pop %v2657
    %v2659 = vsub.f32 1.0, %v2651
    %v2660 = vmul.f32 %v2659, %v2658
    %v2662 = vrot.slane %v2186, 6
    %v2664 = vmul.f32 %v2651, %v2662
    %v2665 = vadd.f32 %v2660, %v2664
    %v2667 = vrot.slane %v2665, 2
    %2669 = vmatprep.subr.mxu0 %v263
    %2670 = vmatpush1.msra.mxu0 %v262
    %2671 = vmatprep.subr.mxu0 %v266
    %2672 = vmatpush1.msra.mxu0 %v265
    %2673 = vmatprep.subr.mxu0 %v269
    %2674 = vmatpush1.msra.mxu0 %v268
    %2675 = vmatprep.subr.mxu0 %v272
    %2676 = vmatpush1.msra.mxu0 %v271
    %2677 = vmatprep.subr.mxu0 %v275
    %2678 = vmatpush1.msra.mxu0 %v274
    %2679 = vmatprep.subr.mxu0 %v278
    %2680 = vmatpush1.msra.mxu0 %v277
    %2681 = vmatprep.subr.mxu0 %v281
    %2682 = vmatpush1.msra.mxu0 %v280
    %2683 = vmatprep.subr.mxu0 %v284
    %2684 = vmatpush1.msra.mxu0 %v283
    %2685 = vmatprep.subr.mxu0 %v287
    %2686 = vmatpush1.msra.mxu0 %v286
    %2687 = vmatprep.subr.mxu0 %v290
    %2688 = vmatpush1.msra.mxu0 %v289
    %2689 = vmatprep.subr.mxu0 %v293
    %2690 = vmatpush1.msra.mxu0 %v292
    %2691 = vmatprep.subr.mxu0 %v296
    %2692 = vmatpush1.msra.mxu0 %v295
    %2693 = vmatprep.subr.mxu0 %v299
    %2694 = vmatpush1.msra.mxu0 %v298
    %2695 = vmatprep.subr.mxu0 %v302
    %2696 = vmatpush1.msra.mxu0 %v301
    %2697 = vmatprep.subr.mxu0 %v305
    %2698 = vmatpush1.msra.mxu0 %v304
    %2699 = vmatprep.subr.mxu0 %v308
    %2700 = vmatpush1.msra.mxu0 %v307
    %2701 = vmatprep.subr.mxu0 0.0
    %2702 = vmatpush1.msra.mxu0 0.0
    %2703 = vmatprep.subr.mxu0 0.0
    %2704 = vmatpush1.msra.mxu0 0.0
    %2705 = vmatprep.subr.mxu0 0.0
    %2706 = vmatpush1.msra.mxu0 0.0
    %2707 = vmatprep.subr.mxu0 0.0
    %2708 = vmatpush1.msra.mxu0 0.0
    %2709 = vmatprep.subr.mxu0 0.0
    %2710 = vmatpush1.msra.mxu0 0.0
    %2711 = vmatprep.subr.mxu0 0.0
    %2712 = vmatpush1.msra.mxu0 0.0
    %2713 = vmatprep.subr.mxu0 0.0
    %2714 = vmatpush1.msra.mxu0 0.0
    %2715 = vmatprep.subr.mxu0 0.0
    %2716 = vmatpush1.msra.mxu0 0.0
    %2717 = vmatprep.subr.mxu0 0.0
    %2718 = vmatpush1.msra.mxu0 0.0
    %2719 = vmatprep.subr.mxu0 0.0
    %2720 = vmatpush1.msra.mxu0 0.0
    %2721 = vmatprep.subr.mxu0 0.0
    %2722 = vmatpush1.msra.mxu0 0.0
    %2723 = vmatprep.subr.mxu0 0.0
    %2724 = vmatpush1.msra.mxu0 0.0
    %2725 = vmatprep.subr.mxu0 0.0
    %2726 = vmatpush1.msra.mxu0 0.0
    %2727 = vmatprep.subr.mxu0 0.0
    %2728 = vmatpush1.msra.mxu0 0.0
    %2729 = vmatprep.subr.mxu0 0.0
    %2730 = vmatpush1.msra.mxu0 0.0
    %2731 = vmatprep.subr.mxu0 0.0
    %2732 = vmatpush1.msra.mxu0 0.0
    %2733 = vmatprep.mubr.f32.mxu0 0.0
    %2734 = vmatmul.mubr.f32.gmra.mrb[0].mxu0 %v2667
    %v2735 = vpop.f32.mrb[0].mxu0
    %v2736 = vadd.f32 %v314, %v2735
    %v2737 = vpop.f32.mrb[0].mxu0
    %v2738 = vadd.f32 %v318, %v2737
    %2739 = vdwg.mxu0
    %2740 = vmatprep.subr.mxu0 0.0
    %2741 = vmatpush1.msra.mxu0 %v264
    %2742 = vmatprep.subr.mxu0 0.0
    %2743 = vmatpush1.msra.mxu0 %v267
    %2744 = vmatprep.subr.mxu0 0.0
    %2745 = vmatpush1.msra.mxu0 %v270
    %2746 = vmatprep.subr.mxu0 0.0
    %2747 = vmatpush1.msra.mxu0 %v273
    %2748 = vmatprep.subr.mxu0 0.0
    %2749 = vmatpush1.msra.mxu0 %v276
    %2750 = vmatprep.subr.mxu0 0.0
    %2751 = vmatpush1.msra.mxu0 %v279
    %2752 = vmatprep.subr.mxu0 0.0
    %2753 = vmatpush1.msra.mxu0 %v282
    %2754 = vmatprep.subr.mxu0 0.0
    %2755 = vmatpush1.msra.mxu0 %v285
    %2756 = vmatprep.subr.mxu0 0.0
    %2757 = vmatpush1.msra.mxu0 %v288
    %2758 = vmatprep.subr.mxu0 0.0
    %2759 = vmatpush1.msra.mxu0 %v291
    %2760 = vmatprep.subr.mxu0 0.0
    %2761 = vmatpush1.msra.mxu0 %v294
    %2762 = vmatprep.subr.mxu0 0.0
    %2763 = vmatpush1.msra.mxu0 %v297
    %2764 = vmatprep.subr.mxu0 0.0
    %2765 = vmatpush1.msra.mxu0 %v300
    %2766 = vmatprep.subr.mxu0 0.0
    %2767 = vmatpush1.msra.mxu0 %v303
    %2768 = vmatprep.subr.mxu0 0.0
    %2769 = vmatpush1.msra.mxu0 %v306
    %2770 = vmatprep.subr.mxu0 0.0
    %2771 = vmatpush1.msra.mxu0 %v309
    %2772 = vmatprep.subr.mxu0 0.0
    %2773 = vmatpush1.msra.mxu0 0.0
    %2774 = vmatprep.subr.mxu0 0.0
    %2775 = vmatpush1.msra.mxu0 0.0
    %2776 = vmatprep.subr.mxu0 0.0
    %2777 = vmatpush1.msra.mxu0 0.0
    %2778 = vmatprep.subr.mxu0 0.0
    %2779 = vmatpush1.msra.mxu0 0.0
    %2780 = vmatprep.subr.mxu0 0.0
    %2781 = vmatpush1.msra.mxu0 0.0
    %2782 = vmatprep.subr.mxu0 0.0
    %2783 = vmatpush1.msra.mxu0 0.0
    %2784 = vmatprep.subr.mxu0 0.0
    %2785 = vmatpush1.msra.mxu0 0.0
    %2786 = vmatprep.subr.mxu0 0.0
    %2787 = vmatpush1.msra.mxu0 0.0
    %2788 = vmatprep.subr.mxu0 0.0
    %2789 = vmatpush1.msra.mxu0 0.0
    %2790 = vmatprep.subr.mxu0 0.0
    %2791 = vmatpush1.msra.mxu0 0.0
    %2792 = vmatprep.subr.mxu0 0.0
    %2793 = vmatpush1.msra.mxu0 0.0
    %2794 = vmatprep.subr.mxu0 0.0
    %2795 = vmatpush1.msra.mxu0 0.0
    %2796 = vmatprep.subr.mxu0 0.0
    %2797 = vmatpush1.msra.mxu0 0.0
    %2798 = vmatprep.subr.mxu0 0.0
    %2799 = vmatpush1.msra.mxu0 0.0
    %2800 = vmatprep.subr.mxu0 0.0
    %2801 = vmatpush1.msra.mxu0 0.0
    %2802 = vmatprep.subr.mxu0 0.0
    %2803 = vmatpush1.msra.mxu0 0.0
    %2804 = vmatprep.mubr.f32.mxu0 0.0
    %2805 = vmatmul.mubr.f32.gmra.mrb[0].mxu0 %v2667
    %v2806 = vpop.f32.mrb[0].mxu0
    %v2807 = vadd.f32 %v322, %v2806
    %v2808 = vpop.f32.mrb[0].mxu0
    %2809 = vdwg.mxu0
    %2810 = vmatprep.subr.mxu0 %v852
    %2811 = vmatpush1.msra.mxu0 %v851
    %2812 = vmatprep.subr.mxu0 %v855
    %2813 = vmatpush1.msra.mxu0 %v854
    %2814 = vmatprep.subr.mxu0 %v858
    %2815 = vmatpush1.msra.mxu0 %v857
    %2816 = vmatprep.subr.mxu0 %v861
    %2817 = vmatpush1.msra.mxu0 %v860
    %2818 = vmatprep.subr.mxu0 %v864
    %2819 = vmatpush1.msra.mxu0 %v863
    %2820 = vmatprep.subr.mxu0 %v867
    %2821 = vmatpush1.msra.mxu0 %v866
    %2822 = vmatprep.subr.mxu0 %v870
    %2823 = vmatpush1.msra.mxu0 %v869
    %2824 = vmatprep.subr.mxu0 %v873
    %2825 = vmatpush1.msra.mxu0 %v872
    %2826 = vmatprep.subr.mxu0 %v876
    %2827 = vmatpush1.msra.mxu0 %v875
    %2828 = vmatprep.subr.mxu0 %v879
    %2829 = vmatpush1.msra.mxu0 %v878
    %2830 = vmatprep.subr.mxu0 %v882
    %2831 = vmatpush1.msra.mxu0 %v881
    %2832 = vmatprep.subr.mxu0 %v885
    %2833 = vmatpush1.msra.mxu0 %v884
    %2834 = vmatprep.subr.mxu0 %v888
    %2835 = vmatpush1.msra.mxu0 %v887
    %2836 = vmatprep.subr.mxu0 %v891
    %2837 = vmatpush1.msra.mxu0 %v890
    %2838 = vmatprep.subr.mxu0 %v894
    %2839 = vmatpush1.msra.mxu0 %v893
    %2840 = vmatprep.subr.mxu0 %v897
    %2841 = vmatpush1.msra.mxu0 %v896
    %2842 = vmatprep.subr.mxu0 0.0
    %2843 = vmatpush1.msra.mxu0 0.0
    %2844 = vmatprep.subr.mxu0 0.0
    %2845 = vmatpush1.msra.mxu0 0.0
    %2846 = vmatprep.subr.mxu0 0.0
    %2847 = vmatpush1.msra.mxu0 0.0
    %2848 = vmatprep.subr.mxu0 0.0
    %2849 = vmatpush1.msra.mxu0 0.0
    %2850 = vmatprep.subr.mxu0 0.0
    %2851 = vmatpush1.msra.mxu0 0.0
    %2852 = vmatprep.subr.mxu0 0.0
    %2853 = vmatpush1.msra.mxu0 0.0
    %2854 = vmatprep.subr.mxu0 0.0
    %2855 = vmatpush1.msra.mxu0 0.0
    %2856 = vmatprep.subr.mxu0 0.0
    %2857 = vmatpush1.msra.mxu0 0.0
    %2858 = vmatprep.subr.mxu0 0.0
    %2859 = vmatpush1.msra.mxu0 0.0
    %2860 = vmatprep.subr.mxu0 0.0
    %2861 = vmatpush1.msra.mxu0 0.0
    %2862 = vmatprep.subr.mxu0 0.0
    %2863 = vmatpush1.msra.mxu0 0.0
    %2864 = vmatprep.subr.mxu0 0.0
    %2865 = vmatpush1.msra.mxu0 0.0
    %2866 = vmatprep.subr.mxu0 0.0
    %2867 = vmatpush1.msra.mxu0 0.0
    %2868 = vmatprep.subr.mxu0 0.0
    %2869 = vmatpush1.msra.mxu0 0.0
    %2870 = vmatprep.subr.mxu0 0.0
    %2871 = vmatpush1.msra.mxu0 0.0
    %2872 = vmatprep.subr.mxu0 0.0
    %2873 = vmatpush1.msra.mxu0 0.0
    %2874 = vmatprep.mubr.f32.mxu0 0.0
    %2875 = vmatmul.mubr.f32.gmra.mrb[0].mxu0 %v2490
    %v2876 = vpop.f32.mrb[0].mxu0
    %v2877 = vadd.f32 0.0, %v2876
    %v2878 = vpop.f32.mrb[0].mxu0
    %v2879 = vadd.f32 0.0, %v2878
    %2880 = vdwg.mxu0
    %2881 = vmatprep.subr.mxu0 0.0
    %2882 = vmatpush1.msra.mxu0 %v853
    %2883 = vmatprep.subr.mxu0 0.0
    %2884 = vmatpush1.msra.mxu0 %v856
    %2885 = vmatprep.subr.mxu0 0.0
    %2886 = vmatpush1.msra.mxu0 %v859
    %2887 = vmatprep.subr.mxu0 0.0
    %2888 = vmatpush1.msra.mxu0 %v862
    %2889 = vmatprep.subr.mxu0 0.0
    %2890 = vmatpush1.msra.mxu0 %v865
    %2891 = vmatprep.subr.mxu0 0.0
    %2892 = vmatpush1.msra.mxu0 %v868
    %2893 = vmatprep.subr.mxu0 0.0
    %2894 = vmatpush1.msra.mxu0 %v871
    %2895 = vmatprep.subr.mxu0 0.0
    %2896 = vmatpush1.msra.mxu0 %v874
    %2897 = vmatprep.subr.mxu0 0.0
    %2898 = vmatpush1.msra.mxu0 %v877
    %2899 = vmatprep.subr.mxu0 0.0
    %2900 = vmatpush1.msra.mxu0 %v880
    %2901 = vmatprep.subr.mxu0 0.0
    %2902 = vmatpush1.msra.mxu0 %v883
    %2903 = vmatprep.subr.mxu0 0.0
    %2904 = vmatpush1.msra.mxu0 %v886
    %2905 = vmatprep.subr.mxu0 0.0
    %2906 = vmatpush1.msra.mxu0 %v889
    %2907 = vmatprep.subr.mxu0 0.0
    %2908 = vmatpush1.msra.mxu0 %v892
    %2909 = vmatprep.subr.mxu0 0.0
    %2910 = vmatpush1.msra.mxu0 %v895
    %2911 = vmatprep.subr.mxu0 0.0
    %2912 = vmatpush1.msra.mxu0 %v898
    %2913 = vmatprep.subr.mxu0 0.0
    %2914 = vmatpush1.msra.mxu0 0.0
    %2915 = vmatprep.subr.mxu0 0.0
    %2916 = vmatpush1.msra.mxu0 0.0
    %2917 = vmatprep.subr.mxu0 0.0
    %2918 = vmatpush1.msra.mxu0 0.0
    %2919 = vmatprep.subr.mxu0 0.0
    %2920 = vmatpush1.msra.mxu0 0.0
    %2921 = vmatprep.subr.mxu0 0.0
    %2922 = vmatpush1.msra.mxu0 0.0
    %2923 = vmatprep.subr.mxu0 0.0
    %2924 = vmatpush1.msra.mxu0 0.0
    %2925 = vmatprep.subr.mxu0 0.0
    %2926 = vmatpush1.msra.mxu0 0.0
    %2927 = vmatprep.subr.mxu0 0.0
    %2928 = vmatpush1.msra.mxu0 0.0
    %2929 = vmatprep.subr.mxu0 0.0
    %2930 = vmatpush1.msra.mxu0 0.0
    %2931 = vmatprep.subr.mxu0 0.0
    %2932 = vmatpush1.msra.mxu0 0.0
    %2933 = vmatprep.subr.mxu0 0.0
    %2934 = vmatpush1.msra.mxu0 0.0
    %2935 = vmatprep.subr.mxu0 0.0
    %2936 = vmatpush1.msra.mxu0 0.0
    %2937 = vmatprep.subr.mxu0 0.0
    %2938 = vmatpush1.msra.mxu0 0.0
    %2939 = vmatprep.subr.mxu0 0.0
    %2940 = vmatpush1.msra.mxu0 0.0
    %2941 = vmatprep.subr.mxu0 0.0
    %2942 = vmatpush1.msra.mxu0 0.0
    %2943 = vmatprep.subr.mxu0 0.0
    %2944 = vmatpush1.msra.mxu0 0.0
    %2945 = vmatprep.mubr.f32.mxu0 0.0
    %2946 = vmatmul.mubr.f32.gmra.mrb[0].mxu0 %v2490
    %v2947 = vpop.f32.mrb[0].mxu0
    %v2948 = vadd.f32 0.0, %v2947
    %v2949 = vpop.f32.mrb[0].mxu0
    %2950 = vdwg.mxu0
    %v2951 = vadd.f32 %v2736, %v2877
    %v2952 = vadd.f32 %v2738, %v2879
    %v2953 = vxor.u32 %v2951, 2147483648
    %v2954 = vxor.u32 %v2952, 2147483648
    %v2955 = vmul.f32 %v2953, 1.442695
    %v2956 = vpow.pop %v2955
    %v2957 = vmul.f32 %v2954, 1.442695
    %v2958 = vpow.pop %v2957
    %v2959 = vadd.f32 %v2956, 1.0
    %v2960 = vadd.f32 %v2958, 1.0
    %v2961 = vrcp.pop %v2959
    %v2962 = vmul.f32 1.0, %v2961
    %v2963 = vrcp.pop %v2960
    %v2964 = vmul.f32 1.0, %v2963
    %v2965 = vadd.f32 %v2948, %v244
    %v2966 = vmul.f32 %v2962, %v2965
    %v2967 = vadd.f32 %v2807, %v2966
    %v2968 = vtanh.pop %v2967
    %v2969 = vsub.f32 1.0, %v2964
    %v2970 = vmul.f32 %v2969, %v2968
    %v2971 = vmul.f32 %v2964, %v2490
    %v2972 = vadd.f32 %v2970, %v2971
    %2973 = vmatprep.subr.mxu0 %v485
    %2974 = vmatpush1.msra.mxu0 %v484
    %2975 = vmatprep.subr.mxu0 %v488
    %2976 = vmatpush1.msra.mxu0 %v487
    %2977 = vmatprep.subr.mxu0 %v491
    %2978 = vmatpush1.msra.mxu0 %v490
    %2979 = vmatprep.subr.mxu0 %v494
    %2980 = vmatpush1.msra.mxu0 %v493
    %2981 = vmatprep.subr.mxu0 %v497
    %2982 = vmatpush1.msra.mxu0 %v496
    %2983 = vmatprep.subr.mxu0 %v500
    %2984 = vmatpush1.msra.mxu0 %v499
    %2985 = vmatprep.subr.mxu0 %v503
    %2986 = vmatpush1.msra.mxu0 %v502
    %2987 = vmatprep.subr.mxu0 %v506
    %2988 = vmatpush1.msra.mxu0 %v505
    %2989 = vmatprep.subr.mxu0 %v509
    %2990 = vmatpush1.msra.mxu0 %v508
    %2991 = vmatprep.subr.mxu0 %v512
    %2992 = vmatpush1.msra.mxu0 %v511
    %2993 = vmatprep.subr.mxu0 %v515
    %2994 = vmatpush1.msra.mxu0 %v514
    %2995 = vmatprep.subr.mxu0 %v518
    %2996 = vmatpush1.msra.mxu0 %v517
    %2997 = vmatprep.subr.mxu0 %v521
    %2998 = vmatpush1.msra.mxu0 %v520
    %2999 = vmatprep.subr.mxu0 %v524
    %3000 = vmatpush1.msra.mxu0 %v523
    %3001 = vmatprep.subr.mxu0 %v527
    %3002 = vmatpush1.msra.mxu0 %v526
    %3003 = vmatprep.subr.mxu0 %v530
    %3004 = vmatpush1.msra.mxu0 %v529
    %3005 = vmatprep.subr.mxu0 0.0
    %3006 = vmatpush1.msra.mxu0 0.0
    %3007 = vmatprep.subr.mxu0 0.0
    %3008 = vmatpush1.msra.mxu0 0.0
    %3009 = vmatprep.subr.mxu0 0.0
    %3010 = vmatpush1.msra.mxu0 0.0
    %3011 = vmatprep.subr.mxu0 0.0
    %3012 = vmatpush1.msra.mxu0 0.0
    %3013 = vmatprep.subr.mxu0 0.0
    %3014 = vmatpush1.msra.mxu0 0.0
    %3015 = vmatprep.subr.mxu0 0.0
    %3016 = vmatpush1.msra.mxu0 0.0
    %3017 = vmatprep.subr.mxu0 0.0
    %3018 = vmatpush1.msra.mxu0 0.0
    %3019 = vmatprep.subr.mxu0 0.0
    %3020 = vmatpush1.msra.mxu0 0.0
    %3021 = vmatprep.subr.mxu0 0.0
    %3022 = vmatpush1.msra.mxu0 0.0
    %3023 = vmatprep.subr.mxu0 0.0
    %3024 = vmatpush1.msra.mxu0 0.0
    %3025 = vmatprep.subr.mxu0 0.0
    %3026 = vmatpush1.msra.mxu0 0.0
    %3027 = vmatprep.subr.mxu0 0.0
    %3028 = vmatpush1.msra.mxu0 0.0
    %3029 = vmatprep.subr.mxu0 0.0
    %3030 = vmatpush1.msra.mxu0 0.0
    %3031 = vmatprep.subr.mxu0 0.0
    %3032 = vmatpush1.msra.mxu0 0.0
    %3033 = vmatprep.subr.mxu0 0.0
    %3034 = vmatpush1.msra.mxu0 0.0
    %3035 = vmatprep.subr.mxu0 0.0
    %3036 = vmatpush1.msra.mxu0 0.0
    %3037 = vmatprep.mubr.f32.mxu0 0.0
    %3038 = vmatmul.mubr.f32.gmra.mrb[0].mxu0 %v2667
    %v3039 = vpop.f32.mrb[0].mxu0
    %v3040 = vadd.f32 0.0, %v3039
    %v3041 = vpop.f32.mrb[0].mxu0
    %v3042 = vadd.f32 0.0, %v3041
    %3043 = vdwg.mxu0
    %3044 = vmatprep.subr.mxu0 0.0
    %3045 = vmatpush1.msra.mxu0 %v486
    %3046 = vmatprep.subr.mxu0 0.0
    %3047 = vmatpush1.msra.mxu0 %v489
    %3048 = vmatprep.subr.mxu0 0.0
    %3049 = vmatpush1.msra.mxu0 %v492
    %3050 = vmatprep.subr.mxu0 0.0
    %3051 = vmatpush1.msra.mxu0 %v495
    %3052 = vmatprep.subr.mxu0 0.0
    %3053 = vmatpush1.msra.mxu0 %v498
    %3054 = vmatprep.subr.mxu0 0.0
    %3055 = vmatpush1.msra.mxu0 %v501
    %3056 = vmatprep.subr.mxu0 0.0
    %3057 = vmatpush1.msra.mxu0 %v504
    %3058 = vmatprep.subr.mxu0 0.0
    %3059 = vmatpush1.msra.mxu0 %v507
    %3060 = vmatprep.subr.mxu0 0.0
    %3061 = vmatpush1.msra.mxu0 %v510
    %3062 = vmatprep.subr.mxu0 0.0
    %3063 = vmatpush1.msra.mxu0 %v513
    %3064 = vmatprep.subr.mxu0 0.0
    %3065 = vmatpush1.msra.mxu0 %v516
    %3066 = vmatprep.subr.mxu0 0.0
    %3067 = vmatpush1.msra.mxu0 %v519
    %3068 = vmatprep.subr.mxu0 0.0
    %3069 = vmatpush1.msra.mxu0 %v522
    %3070 = vmatprep.subr.mxu0 0.0
    %3071 = vmatpush1.msra.mxu0 %v525
    %3072 = vmatprep.subr.mxu0 0.0
    %3073 = vmatpush1.msra.mxu0 %v528
    %3074 = vmatprep.subr.mxu0 0.0
    %3075 = vmatpush1.msra.mxu0 %v531
    %3076 = vmatprep.subr.mxu0 0.0
    %3077 = vmatpush1.msra.mxu0 0.0
    %3078 = vmatprep.subr.mxu0 0.0
    %3079 = vmatpush1.msra.mxu0 0.0
    %3080 = vmatprep.subr.mxu0 0.0
    %3081 = vmatpush1.msra.mxu0 0.0
    %3082 = vmatprep.subr.mxu0 0.0
    %3083 = vmatpush1.msra.mxu0 0.0
    %3084 = vmatprep.subr.mxu0 0.0
    %3085 = vmatpush1.msra.mxu0 0.0
    %3086 = vmatprep.subr.mxu0 0.0
    %3087 = vmatpush1.msra.mxu0 0.0
    %3088 = vmatprep.subr.mxu0 0.0
    %3089 = vmatpush1.msra.mxu0 0.0
    %3090 = vmatprep.subr.mxu0 0.0
    %3091 = vmatpush1.msra.mxu0 0.0
    %3092 = vmatprep.subr.mxu0 0.0
    %3093 = vmatpush1.msra.mxu0 0.0
    %3094 = vmatprep.subr.mxu0 0.0
    %3095 = vmatpush1.msra.mxu0 0.0
    %3096 = vmatprep.subr.mxu0 0.0
    %3097 = vmatpush1.msra.mxu0 0.0
    %3098 = vmatprep.subr.mxu0 0.0
    %3099 = vmatpush1.msra.mxu0 0.0
    %3100 = vmatprep.subr.mxu0 0.0
    %3101 = vmatpush1.msra.mxu0 0.0
    %3102 = vmatprep.subr.mxu0 0.0
    %3103 = vmatpush1.msra.mxu0 0.0
    %3104 = vmatprep.subr.mxu0 0.0
    %3105 = vmatpush1.msra.mxu0 0.0
    %3106 = vmatprep.subr.mxu0 0.0
    %3107 = vmatpush1.msra.mxu0 0.0
    %3108 = vmatprep.mubr.f32.mxu0 0.0
    %3109 = vmatmul.mubr.f32.gmra.mrb[0].mxu0 %v2667
    %v3110 = vpop.f32.mrb[0].mxu0
    %v3111 = vadd.f32 0.0, %v3110
    %v3112 = vpop.f32.mrb[0].mxu0
    %3113 = vdwg.mxu0
    %v3116 = vrot.slane %v3040, 4
    %v3117 = vrot.slane %v3042, 4
    %v3120 = vadd.f32 %v162, %v3116
    %v3121 = vadd.f32 %v164, %v3117
    %v3122 = vxor.u32 %v3120, 2147483648
    %v3123 = vxor.u32 %v3121, 2147483648
    %v3124 = vmul.f32 %v3122, 1.442695
    %v3125 = vpow.pop %v3124
    %v3126 = vmul.f32 %v3123, 1.442695
    %v3127 = vpow.pop %v3126
    %v3128 = vadd.f32 %v3125, 1.0
    %v3129 = vadd.f32 %v3127, 1.0
    %v3130 = vrcp.pop %v3128
    %v3131 = vmul.f32 1.0, %v3130
    %v3132 = vrcp.pop %v3129
    %v3133 = vmul.f32 1.0, %v3132
    %v3134 = vadd.f32 %v3111, %v243
    %v3136 = vrot.slane %v3134, 4
    %v3138 = vmul.f32 %v3131, %v3136
    %v3139 = vadd.f32 %v238, %v3138
    %v3140 = vtanh.pop %v3139
    %v3141 = vsub.f32 1.0, %v3133
    %v3142 = vmul.f32 %v3141, %v3140
    %v3143 = vrot.slane %v2665, 6
    %v3145 = vmul.f32 %v3133, %v3143
    %v3146 = vadd.f32 %v3142, %v3145
    %v3148 = vrot.slane %v3146, 4
    %3150 = vmatprep.subr.mxu0 %v263
    %3151 = vmatpush1.msra.mxu0 %v262
    %3152 = vmatprep.subr.mxu0 %v266
    %3153 = vmatpush1.msra.mxu0 %v265
    %3154 = vmatprep.subr.mxu0 %v269
    %3155 = vmatpush1.msra.mxu0 %v268
    %3156 = vmatprep.subr.mxu0 %v272
    %3157 = vmatpush1.msra.mxu0 %v271
    %3158 = vmatprep.subr.mxu0 %v275
    %3159 = vmatpush1.msra.mxu0 %v274
    %3160 = vmatprep.subr.mxu0 %v278
    %3161 = vmatpush1.msra.mxu0 %v277
    %3162 = vmatprep.subr.mxu0 %v281
    %3163 = vmatpush1.msra.mxu0 %v280
    %3164 = vmatprep.subr.mxu0 %v284
    %3165 = vmatpush1.msra.mxu0 %v283
    %3166 = vmatprep.subr.mxu0 %v287
    %3167 = vmatpush1.msra.mxu0 %v286
    %3168 = vmatprep.subr.mxu0 %v290
    %3169 = vmatpush1.msra.mxu0 %v289
    %3170 = vmatprep.subr.mxu0 %v293
    %3171 = vmatpush1.msra.mxu0 %v292
    %3172 = vmatprep.subr.mxu0 %v296
    %3173 = vmatpush1.msra.mxu0 %v295
    %3174 = vmatprep.subr.mxu0 %v299
    %3175 = vmatpush1.msra.mxu0 %v298
    %3176 = vmatprep.subr.mxu0 %v302
    %3177 = vmatpush1.msra.mxu0 %v301
    %3178 = vmatprep.subr.mxu0 %v305
    %3179 = vmatpush1.msra.mxu0 %v304
    %3180 = vmatprep.subr.mxu0 %v308
    %3181 = vmatpush1.msra.mxu0 %v307
    %3182 = vmatprep.subr.mxu0 0.0
    %3183 = vmatpush1.msra.mxu0 0.0
    %3184 = vmatprep.subr.mxu0 0.0
    %3185 = vmatpush1.msra.mxu0 0.0
    %3186 = vmatprep.subr.mxu0 0.0
    %3187 = vmatpush1.msra.mxu0 0.0
    %3188 = vmatprep.subr.mxu0 0.0
    %3189 = vmatpush1.msra.mxu0 0.0
    %3190 = vmatprep.subr.mxu0 0.0
    %3191 = vmatpush1.msra.mxu0 0.0
    %3192 = vmatprep.subr.mxu0 0.0
    %3193 = vmatpush1.msra.mxu0 0.0
    %3194 = vmatprep.subr.mxu0 0.0
    %3195 = vmatpush1.msra.mxu0 0.0
    %3196 = vmatprep.subr.mxu0 0.0
    %3197 = vmatpush1.msra.mxu0 0.0
    %3198 = vmatprep.subr.mxu0 0.0
    %3199 = vmatpush1.msra.mxu0 0.0
    %3200 = vmatprep.subr.mxu0 0.0
    %3201 = vmatpush1.msra.mxu0 0.0
    %3202 = vmatprep.subr.mxu0 0.0
    %3203 = vmatpush1.msra.mxu0 0.0
    %3204 = vmatprep.subr.mxu0 0.0
    %3205 = vmatpush1.msra.mxu0 0.0
    %3206 = vmatprep.subr.mxu0 0.0
    %3207 = vmatpush1.msra.mxu0 0.0
    %3208 = vmatprep.subr.mxu0 0.0
    %3209 = vmatpush1.msra.mxu0 0.0
    %3210 = vmatprep.subr.mxu0 0.0
    %3211 = vmatpush1.msra.mxu0 0.0
    %3212 = vmatprep.subr.mxu0 0.0
    %3213 = vmatpush1.msra.mxu0 0.0
    %3214 = vmatprep.mubr.f32.mxu0 0.0
    %3215 = vmatmul.mubr.f32.gmra.mrb[0].mxu0 %v3148
    %v3216 = vpop.f32.mrb[0].mxu0
    %v3217 = vadd.f32 %v314, %v3216
    %v3218 = vpop.f32.mrb[0].mxu0
    %v3219 = vadd.f32 %v318, %v3218
    %3220 = vdwg.mxu0
    %3221 = vmatprep.subr.mxu0 0.0
    %3222 = vmatpush1.msra.mxu0 %v264
    %3223 = vmatprep.subr.mxu0 0.0
    %3224 = vmatpush1.msra.mxu0 %v267
    %3225 = vmatprep.subr.mxu0 0.0
    %3226 = vmatpush1.msra.mxu0 %v270
    %3227 = vmatprep.subr.mxu0 0.0
    %3228 = vmatpush1.msra.mxu0 %v273
    %3229 = vmatprep.subr.mxu0 0.0
    %3230 = vmatpush1.msra.mxu0 %v276
    %3231 = vmatprep.subr.mxu0 0.0
    %3232 = vmatpush1.msra.mxu0 %v279
    %3233 = vmatprep.subr.mxu0 0.0
    %3234 = vmatpush1.msra.mxu0 %v282
    %3235 = vmatprep.subr.mxu0 0.0
    %3236 = vmatpush1.msra.mxu0 %v285
    %3237 = vmatprep.subr.mxu0 0.0
    %3238 = vmatpush1.msra.mxu0 %v288
    %3239 = vmatprep.subr.mxu0 0.0
    %3240 = vmatpush1.msra.mxu0 %v291
    %3241 = vmatprep.subr.mxu0 0.0
    %3242 = vmatpush1.msra.mxu0 %v294
    %3243 = vmatprep.subr.mxu0 0.0
    %3244 = vmatpush1.msra.mxu0 %v297
    %3245 = vmatprep.subr.mxu0 0.0
    %3246 = vmatpush1.msra.mxu0 %v300
    %3247 = vmatprep.subr.mxu0 0.0
    %3248 = vmatpush1.msra.mxu0 %v303
    %3249 = vmatprep.subr.mxu0 0.0
    %3250 = vmatpush1.msra.mxu0 %v306
    %3251 = vmatprep.subr.mxu0 0.0
    %3252 = vmatpush1.msra.mxu0 %v309
    %3253 = vmatprep.subr.mxu0 0.0
    %3254 = vmatpush1.msra.mxu0 0.0
    %3255 = vmatprep.subr.mxu0 0.0
    %3256 = vmatpush1.msra.mxu0 0.0
    %3257 = vmatprep.subr.mxu0 0.0
    %3258 = vmatpush1.msra.mxu0 0.0
    %3259 = vmatprep.subr.mxu0 0.0
    %3260 = vmatpush1.msra.mxu0 0.0
    %3261 = vmatprep.subr.mxu0 0.0
    %3262 = vmatpush1.msra.mxu0 0.0
    %3263 = vmatprep.subr.mxu0 0.0
    %3264 = vmatpush1.msra.mxu0 0.0
    %3265 = vmatprep.subr.mxu0 0.0
    %3266 = vmatpush1.msra.mxu0 0.0
    %3267 = vmatprep.subr.mxu0 0.0
    %3268 = vmatpush1.msra.mxu0 0.0
    %3269 = vmatprep.subr.mxu0 0.0
    %3270 = vmatpush1.msra.mxu0 0.0
    %3271 = vmatprep.subr.mxu0 0.0
    %3272 = vmatpush1.msra.mxu0 0.0
    %3273 = vmatprep.subr.mxu0 0.0
    %3274 = vmatpush1.msra.mxu0 0.0
    %3275 = vmatprep.subr.mxu0 0.0
    %3276 = vmatpush1.msra.mxu0 0.0
    %3277 = vmatprep.subr.mxu0 0.0
    %3278 = vmatpush1.msra.mxu0 0.0
    %3279 = vmatprep.subr.mxu0 0.0
    %3280 = vmatpush1.msra.mxu0 0.0
    %3281 = vmatprep.subr.mxu0 0.0
    %3282 = vmatpush1.msra.mxu0 0.0
    %3283 = vmatprep.subr.mxu0 0.0
    %3284 = vmatpush1.msra.mxu0 0.0
    %3285 = vmatprep.mubr.f32.mxu0 0.0
    %3286 = vmatmul.mubr.f32.gmra.mrb[0].mxu0 %v3148
    %v3287 = vpop.f32.mrb[0].mxu0
    %v3288 = vadd.f32 %v322, %v3287
    %v3289 = vpop.f32.mrb[0].mxu0
    %3290 = vdwg.mxu0
    %3291 = vmatprep.subr.mxu0 %v852
    %3292 = vmatpush1.msra.mxu0 %v851
    %3293 = vmatprep.subr.mxu0 %v855
    %3294 = vmatpush1.msra.mxu0 %v854
    %3295 = vmatprep.subr.mxu0 %v858
    %3296 = vmatpush1.msra.mxu0 %v857
    %3297 = vmatprep.subr.mxu0 %v861
    %3298 = vmatpush1.msra.mxu0 %v860
    %3299 = vmatprep.subr.mxu0 %v864
    %3300 = vmatpush1.msra.mxu0 %v863
    %3301 = vmatprep.subr.mxu0 %v867
    %3302 = vmatpush1.msra.mxu0 %v866
    %3303 = vmatprep.subr.mxu0 %v870
    %3304 = vmatpush1.msra.mxu0 %v869
    %3305 = vmatprep.subr.mxu0 %v873
    %3306 = vmatpush1.msra.mxu0 %v872
    %3307 = vmatprep.subr.mxu0 %v876
    %3308 = vmatpush1.msra.mxu0 %v875
    %3309 = vmatprep.subr.mxu0 %v879
    %3310 = vmatpush1.msra.mxu0 %v878
    %3311 = vmatprep.subr.mxu0 %v882
    %3312 = vmatpush1.msra.mxu0 %v881
    %3313 = vmatprep.subr.mxu0 %v885
    %3314 = vmatpush1.msra.mxu0 %v884
    %3315 = vmatprep.subr.mxu0 %v888
    %3316 = vmatpush1.msra.mxu0 %v887
    %3317 = vmatprep.subr.mxu0 %v891
    %3318 = vmatpush1.msra.mxu0 %v890
    %3319 = vmatprep.subr.mxu0 %v894
    %3320 = vmatpush1.msra.mxu0 %v893
    %3321 = vmatprep.subr.mxu0 %v897
    %3322 = vmatpush1.msra.mxu0 %v896
    %3323 = vmatprep.subr.mxu0 0.0
    %3324 = vmatpush1.msra.mxu0 0.0
    %3325 = vmatprep.subr.mxu0 0.0
    %3326 = vmatpush1.msra.mxu0 0.0
    %3327 = vmatprep.subr.mxu0 0.0
    %3328 = vmatpush1.msra.mxu0 0.0
    %3329 = vmatprep.subr.mxu0 0.0
    %3330 = vmatpush1.msra.mxu0 0.0
    %3331 = vmatprep.subr.mxu0 0.0
    %3332 = vmatpush1.msra.mxu0 0.0
    %3333 = vmatprep.subr.mxu0 0.0
    %3334 = vmatpush1.msra.mxu0 0.0
    %3335 = vmatprep.subr.mxu0 0.0
    %3336 = vmatpush1.msra.mxu0 0.0
    %3337 = vmatprep.subr.mxu0 0.0
    %3338 = vmatpush1.msra.mxu0 0.0
    %3339 = vmatprep.subr.mxu0 0.0
    %3340 = vmatpush1.msra.mxu0 0.0
    %3341 = vmatprep.subr.mxu0 0.0
    %3342 = vmatpush1.msra.mxu0 0.0
    %3343 = vmatprep.subr.mxu0 0.0
    %3344 = vmatpush1.msra.mxu0 0.0
    %3345 = vmatprep.subr.mxu0 0.0
    %3346 = vmatpush1.msra.mxu0 0.0
    %3347 = vmatprep.subr.mxu0 0.0
    %3348 = vmatpush1.msra.mxu0 0.0
    %3349 = vmatprep.subr.mxu0 0.0
    %3350 = vmatpush1.msra.mxu0 0.0
    %3351 = vmatprep.subr.mxu0 0.0
    %3352 = vmatpush1.msra.mxu0 0.0
    %3353 = vmatprep.subr.mxu0 0.0
    %3354 = vmatpush1.msra.mxu0 0.0
    %3355 = vmatprep.mubr.f32.mxu0 0.0
    %3356 = vmatmul.mubr.f32.gmra.mrb[0].mxu0 %v2972
    %v3357 = vpop.f32.mrb[0].mxu0
    %v3358 = vadd.f32 0.0, %v3357
    %v3359 = vpop.f32.mrb[0].mxu0
    %v3360 = vadd.f32 0.0, %v3359
    %3361 = vdwg.mxu0
    %3362 = vmatprep.subr.mxu0 0.0
    %3363 = vmatpush1.msra.mxu0 %v853
    %3364 = vmatprep.subr.mxu0 0.0
    %3365 = vmatpush1.msra.mxu0 %v856
    %3366 = vmatprep.subr.mxu0 0.0
    %3367 = vmatpush1.msra.mxu0 %v859
    %3368 = vmatprep.subr.mxu0 0.0
    %3369 = vmatpush1.msra.mxu0 %v862
    %3370 = vmatprep.subr.mxu0 0.0
    %3371 = vmatpush1.msra.mxu0 %v865
    %3372 = vmatprep.subr.mxu0 0.0
    %3373 = vmatpush1.msra.mxu0 %v868
    %3374 = vmatprep.subr.mxu0 0.0
    %3375 = vmatpush1.msra.mxu0 %v871
    %3376 = vmatprep.subr.mxu0 0.0
    %3377 = vmatpush1.msra.mxu0 %v874
    %3378 = vmatprep.subr.mxu0 0.0
    %3379 = vmatpush1.msra.mxu0 %v877
    %3380 = vmatprep.subr.mxu0 0.0
    %3381 = vmatpush1.msra.mxu0 %v880
    %3382 = vmatprep.subr.mxu0 0.0
    %3383 = vmatpush1.msra.mxu0 %v883
    %3384 = vmatprep.subr.mxu0 0.0
    %3385 = vmatpush1.msra.mxu0 %v886
    %3386 = vmatprep.subr.mxu0 0.0
    %3387 = vmatpush1.msra.mxu0 %v889
    %3388 = vmatprep.subr.mxu0 0.0
    %3389 = vmatpush1.msra.mxu0 %v892
    %3390 = vmatprep.subr.mxu0 0.0
    %3391 = vmatpush1.msra.mxu0 %v895
    %3392 = vmatprep.subr.mxu0 0.0
    %3393 = vmatpush1.msra.mxu0 %v898
    %3394 = vmatprep.subr.mxu0 0.0
    %3395 = vmatpush1.msra.mxu0 0.0
    %3396 = vmatprep.subr.mxu0 0.0
    %3397 = vmatpush1.msra.mxu0 0.0
    %3398 = vmatprep.subr.mxu0 0.0
    %3399 = vmatpush1.msra.mxu0 0.0
    %3400 = vmatprep.subr.mxu0 0.0
    %3401 = vmatpush1.msra.mxu0 0.0
    %3402 = vmatprep.subr.mxu0 0.0
    %3403 = vmatpush1.msra.mxu0 0.0
    %3404 = vmatprep.subr.mxu0 0.0
    %3405 = vmatpush1.msra.mxu0 0.0
    %3406 = vmatprep.subr.mxu0 0.0
    %3407 = vmatpush1.msra.mxu0 0.0
    %3408 = vmatprep.subr.mxu0 0.0
    %3409 = vmatpush1.msra.mxu0 0.0
    %3410 = vmatprep.subr.mxu0 0.0
    %3411 = vmatpush1.msra.mxu0 0.0
    %3412 = vmatprep.subr.mxu0 0.0
    %3413 = vmatpush1.msra.mxu0 0.0
    %3414 = vmatprep.subr.mxu0 0.0
    %3415 = vmatpush1.msra.mxu0 0.0
    %3416 = vmatprep.subr.mxu0 0.0
    %3417 = vmatpush1.msra.mxu0 0.0
    %3418 = vmatprep.subr.mxu0 0.0
    %3419 = vmatpush1.msra.mxu0 0.0
    %3420 = vmatprep.subr.mxu0 0.0
    %3421 = vmatpush1.msra.mxu0 0.0
    %3422 = vmatprep.subr.mxu0 0.0
    %3423 = vmatpush1.msra.mxu0 0.0
    %3424 = vmatprep.subr.mxu0 0.0
    %3425 = vmatpush1.msra.mxu0 0.0
    %3426 = vmatprep.mubr.f32.mxu0 0.0
    %3427 = vmatmul.mubr.f32.gmra.mrb[0].mxu0 %v2972
    %v3428 = vpop.f32.mrb[0].mxu0
    %v3429 = vadd.f32 0.0, %v3428
    %v3430 = vpop.f32.mrb[0].mxu0
    %3431 = vdwg.mxu0
    %v3432 = vadd.f32 %v3217, %v3358
    %v3433 = vadd.f32 %v3219, %v3360
    %v3434 = vxor.u32 %v3432, 2147483648
    %v3435 = vxor.u32 %v3433, 2147483648
    %v3436 = vmul.f32 %v3434, 1.442695
    %v3437 = vpow.pop %v3436
    %v3438 = vmul.f32 %v3435, 1.442695
    %v3439 = vpow.pop %v3438
    %v3440 = vadd.f32 %v3437, 1.0
    %v3441 = vadd.f32 %v3439, 1.0
    %v3442 = vrcp.pop %v3440
    %v3443 = vmul.f32 1.0, %v3442
    %v3444 = vrcp.pop %v3441
    %v3445 = vmul.f32 1.0, %v3444
    %v3446 = vadd.f32 %v3429, %v244
    %v3447 = vmul.f32 %v3443, %v3446
    %v3448 = vadd.f32 %v3288, %v3447
    %v3449 = vtanh.pop %v3448
    %v3450 = vsub.f32 1.0, %v3445
    %v3451 = vmul.f32 %v3450, %v3449
    %v3452 = vmul.f32 %v3445, %v2972
    %v3453 = vadd.f32 %v3451, %v3452
    %3454 = vmatprep.subr.mxu0 %v485
    %3455 = vmatpush1.msra.mxu0 %v484
    %3456 = vmatprep.subr.mxu0 %v488
    %3457 = vmatpush1.msra.mxu0 %v487
    %3458 = vmatprep.subr.mxu0 %v491
    %3459 = vmatpush1.msra.mxu0 %v490
    %3460 = vmatprep.subr.mxu0 %v494
    %3461 = vmatpush1.msra.mxu0 %v493
    %3462 = vmatprep.subr.mxu0 %v497
    %3463 = vmatpush1.msra.mxu0 %v496
    %3464 = vmatprep.subr.mxu0 %v500
    %3465 = vmatpush1.msra.mxu0 %v499
    %3466 = vmatprep.subr.mxu0 %v503
    %3467 = vmatpush1.msra.mxu0 %v502
    %3468 = vmatprep.subr.mxu0 %v506
    %3469 = vmatpush1.msra.mxu0 %v505
    %3470 = vmatprep.subr.mxu0 %v509
    %3471 = vmatpush1.msra.mxu0 %v508
    %3472 = vmatprep.subr.mxu0 %v512
    %3473 = vmatpush1.msra.mxu0 %v511
    %3474 = vmatprep.subr.mxu0 %v515
    %3475 = vmatpush1.msra.mxu0 %v514
    %3476 = vmatprep.subr.mxu0 %v518
    %3477 = vmatpush1.msra.mxu0 %v517
    %3478 = vmatprep.subr.mxu0 %v521
    %3479 = vmatpush1.msra.mxu0 %v520
    %3480 = vmatprep.subr.mxu0 %v524
    %3481 = vmatpush1.msra.mxu0 %v523
    %3482 = vmatprep.subr.mxu0 %v527
    %3483 = vmatpush1.msra.mxu0 %v526
    %3484 = vmatprep.subr.mxu0 %v530
    %3485 = vmatpush1.msra.mxu0 %v529
    %3486 = vmatprep.subr.mxu0 0.0
    %3487 = vmatpush1.msra.mxu0 0.0
    %3488 = vmatprep.subr.mxu0 0.0
    %3489 = vmatpush1.msra.mxu0 0.0
    %3490 = vmatprep.subr.mxu0 0.0
    %3491 = vmatpush1.msra.mxu0 0.0
    %3492 = vmatprep.subr.mxu0 0.0
    %3493 = vmatpush1.msra.mxu0 0.0
    %3494 = vmatprep.subr.mxu0 0.0
    %3495 = vmatpush1.msra.mxu0 0.0
    %3496 = vmatprep.subr.mxu0 0.0
    %3497 = vmatpush1.msra.mxu0 0.0
    %3498 = vmatprep.subr.mxu0 0.0
    %3499 = vmatpush1.msra.mxu0 0.0
    %3500 = vmatprep.subr.mxu0 0.0
    %3501 = vmatpush1.msra.mxu0 0.0
    %3502 = vmatprep.subr.mxu0 0.0
    %3503 = vmatpush1.msra.mxu0 0.0
    %3504 = vmatprep.subr.mxu0 0.0
    %3505 = vmatpush1.msra.mxu0 0.0
    %3506 = vmatprep.subr.mxu0 0.0
    %3507 = vmatpush1.msra.mxu0 0.0
    %3508 = vmatprep.subr.mxu0 0.0
    %3509 = vmatpush1.msra.mxu0 0.0
    %3510 = vmatprep.subr.mxu0 0.0
    %3511 = vmatpush1.msra.mxu0 0.0
    %3512 = vmatprep.subr.mxu0 0.0
    %3513 = vmatpush1.msra.mxu0 0.0
    %3514 = vmatprep.subr.mxu0 0.0
    %3515 = vmatpush1.msra.mxu0 0.0
    %3516 = vmatprep.subr.mxu0 0.0
    %3517 = vmatpush1.msra.mxu0 0.0
    %3518 = vmatprep.mubr.f32.mxu0 0.0
    %3519 = vmatmul.mubr.f32.gmra.mrb[0].mxu0 %v3148
    %v3520 = vpop.f32.mrb[0].mxu0
    %v3521 = vadd.f32 0.0, %v3520
    %v3522 = vpop.f32.mrb[0].mxu0
    %v3523 = vadd.f32 0.0, %v3522
    %3524 = vdwg.mxu0
    %3525 = vmatprep.subr.mxu0 0.0
    %3526 = vmatpush1.msra.mxu0 %v486
    %3527 = vmatprep.subr.mxu0 0.0
    %3528 = vmatpush1.msra.mxu0 %v489
    %3529 = vmatprep.subr.mxu0 0.0
    %3530 = vmatpush1.msra.mxu0 %v492
    %3531 = vmatprep.subr.mxu0 0.0
    %3532 = vmatpush1.msra.mxu0 %v495
    %3533 = vmatprep.subr.mxu0 0.0
    %3534 = vmatpush1.msra.mxu0 %v498
    %3535 = vmatprep.subr.mxu0 0.0
    %3536 = vmatpush1.msra.mxu0 %v501
    %3537 = vmatprep.subr.mxu0 0.0
    %3538 = vmatpush1.msra.mxu0 %v504
    %3539 = vmatprep.subr.mxu0 0.0
    %3540 = vmatpush1.msra.mxu0 %v507
    %3541 = vmatprep.subr.mxu0 0.0
    %3542 = vmatpush1.msra.mxu0 %v510
    %3543 = vmatprep.subr.mxu0 0.0
    %3544 = vmatpush1.msra.mxu0 %v513
    %3545 = vmatprep.subr.mxu0 0.0
    %3546 = vmatpush1.msra.mxu0 %v516
    %3547 = vmatprep.subr.mxu0 0.0
    %3548 = vmatpush1.msra.mxu0 %v519
    %3549 = vmatprep.subr.mxu0 0.0
    %3550 = vmatpush1.msra.mxu0 %v522
    %3551 = vmatprep.subr.mxu0 0.0
    %3552 = vmatpush1.msra.mxu0 %v525
    %3553 = vmatprep.subr.mxu0 0.0
    %3554 = vmatpush1.msra.mxu0 %v528
    %3555 = vmatprep.subr.mxu0 0.0
    %3556 = vmatpush1.msra.mxu0 %v531
    %3557 = vmatprep.subr.mxu0 0.0
    %3558 = vmatpush1.msra.mxu0 0.0
    %3559 = vmatprep.subr.mxu0 0.0
    %3560 = vmatpush1.msra.mxu0 0.0
    %3561 = vmatprep.subr.mxu0 0.0
    %3562 = vmatpush1.msra.mxu0 0.0
    %3563 = vmatprep.subr.mxu0 0.0
    %3564 = vmatpush1.msra.mxu0 0.0
    %3565 = vmatprep.subr.mxu0 0.0
    %3566 = vmatpush1.msra.mxu0 0.0
    %3567 = vmatprep.subr.mxu0 0.0
    %3568 = vmatpush1.msra.mxu0 0.0
    %3569 = vmatprep.subr.mxu0 0.0
    %3570 = vmatpush1.msra.mxu0 0.0
    %3571 = vmatprep.subr.mxu0 0.0
    %3572 = vmatpush1.msra.mxu0 0.0
    %3573 = vmatprep.subr.mxu0 0.0
    %3574 = vmatpush1.msra.mxu0 0.0
    %3575 = vmatprep.subr.mxu0 0.0
    %3576 = vmatpush1.msra.mxu0 0.0
    %3577 = vmatprep.subr.mxu0 0.0
    %3578 = vmatpush1.msra.mxu0 0.0
    %3579 = vmatprep.subr.mxu0 0.0
    %3580 = vmatpush1.msra.mxu0 0.0
    %3581 = vmatprep.subr.mxu0 0.0
    %3582 = vmatpush1.msra.mxu0 0.0
    %3583 = vmatprep.subr.mxu0 0.0
    %3584 = vmatpush1.msra.mxu0 0.0
    %3585 = vmatprep.subr.mxu0 0.0
    %3586 = vmatpush1.msra.mxu0 0.0
    %3587 = vmatprep.subr.mxu0 0.0
    %3588 = vmatpush1.msra.mxu0 0.0
    %3589 = vmatprep.mubr.f32.mxu0 0.0
    %3590 = vmatmul.mubr.f32.gmra.mrb[0].mxu0 %v3148
    %v3591 = vpop.f32.mrb[0].mxu0
    %v3592 = vadd.f32 0.0, %v3591
    %v3593 = vpop.f32.mrb[0].mxu0
    %3594 = vdwg.mxu0
    %v3597 = vrot.slane %v3521, 2
    %v3598 = vrot.slane %v3523, 2
    %v3601 = vadd.f32 %v162, %v3597
    %v3602 = vadd.f32 %v164, %v3598
    %v3603 = vxor.u32 %v3601, 2147483648
    %v3604 = vxor.u32 %v3602, 2147483648
    %v3605 = vmul.f32 %v3603, 1.442695
    %v3606 = vpow.pop %v3605
    %v3607 = vmul.f32 %v3604, 1.442695
    %v3608 = vpow.pop %v3607
    %v3609 = vadd.f32 %v3606, 1.0
    %v3610 = vadd.f32 %v3608, 1.0
    %v3611 = vrcp.pop %v3609
    %v3612 = vmul.f32 1.0, %v3611
    %v3613 = vrcp.pop %v3610
    %v3614 = vmul.f32 1.0, %v3613
    %v3615 = vadd.f32 %v3592, %v243
    %v3617 = vrot.slane %v3615, 2
    %v3619 = vmul.f32 %v3612, %v3617
    %v3620 = vadd.f32 %v238, %v3619
    %v3621 = vtanh.pop %v3620
    %v3622 = vsub.f32 1.0, %v3614
    %v3623 = vmul.f32 %v3622, %v3621
    %v3624 = vrot.slane %v3146, 6
    %v3626 = vmul.f32 %v3614, %v3624
    %v3627 = vadd.f32 %v3623, %v3626
    %v3629 = vrot.slane %v3627, 6
    %3631 = vmatprep.subr.mxu0 %v263
    %3632 = vmatpush1.msra.mxu0 %v262
    %3633 = vmatprep.subr.mxu0 %v266
    %3634 = vmatpush1.msra.mxu0 %v265
    %3635 = vmatprep.subr.mxu0 %v269
    %3636 = vmatpush1.msra.mxu0 %v268
    %3637 = vmatprep.subr.mxu0 %v272
    %3638 = vmatpush1.msra.mxu0 %v271
    %3639 = vmatprep.subr.mxu0 %v275
    %3640 = vmatpush1.msra.mxu0 %v274
    %3641 = vmatprep.subr.mxu0 %v278
    %3642 = vmatpush1.msra.mxu0 %v277
    %3643 = vmatprep.subr.mxu0 %v281
    %3644 = vmatpush1.msra.mxu0 %v280
    %3645 = vmatprep.subr.mxu0 %v284
    %3646 = vmatpush1.msra.mxu0 %v283
    %3647 = vmatprep.subr.mxu0 %v287
    %3648 = vmatpush1.msra.mxu0 %v286
    %3649 = vmatprep.subr.mxu0 %v290
    %3650 = vmatpush1.msra.mxu0 %v289
    %3651 = vmatprep.subr.mxu0 %v293
    %3652 = vmatpush1.msra.mxu0 %v292
    %3653 = vmatprep.subr.mxu0 %v296
    %3654 = vmatpush1.msra.mxu0 %v295
    %3655 = vmatprep.subr.mxu0 %v299
    %3656 = vmatpush1.msra.mxu0 %v298
    %3657 = vmatprep.subr.mxu0 %v302
    %3658 = vmatpush1.msra.mxu0 %v301
    %3659 = vmatprep.subr.mxu0 %v305
    %3660 = vmatpush1.msra.mxu0 %v304
    %3661 = vmatprep.subr.mxu0 %v308
    %3662 = vmatpush1.msra.mxu0 %v307
    %3663 = vmatprep.subr.mxu0 0.0
    %3664 = vmatpush1.msra.mxu0 0.0
    %3665 = vmatprep.subr.mxu0 0.0
    %3666 = vmatpush1.msra.mxu0 0.0
    %3667 = vmatprep.subr.mxu0 0.0
    %3668 = vmatpush1.msra.mxu0 0.0
    %3669 = vmatprep.subr.mxu0 0.0
    %3670 = vmatpush1.msra.mxu0 0.0
    %3671 = vmatprep.subr.mxu0 0.0
    %3672 = vmatpush1.msra.mxu0 0.0
    %3673 = vmatprep.subr.mxu0 0.0
    %3674 = vmatpush1.msra.mxu0 0.0
    %3675 = vmatprep.subr.mxu0 0.0
    %3676 = vmatpush1.msra.mxu0 0.0
    %3677 = vmatprep.subr.mxu0 0.0
    %3678 = vmatpush1.msra.mxu0 0.0
    %3679 = vmatprep.subr.mxu0 0.0
    %3680 = vmatpush1.msra.mxu0 0.0
    %3681 = vmatprep.subr.mxu0 0.0
    %3682 = vmatpush1.msra.mxu0 0.0
    %3683 = vmatprep.subr.mxu0 0.0
    %3684 = vmatpush1.msra.mxu0 0.0
    %3685 = vmatprep.subr.mxu0 0.0
    %3686 = vmatpush1.msra.mxu0 0.0
    %3687 = vmatprep.subr.mxu0 0.0
    %3688 = vmatpush1.msra.mxu0 0.0
    %3689 = vmatprep.subr.mxu0 0.0
    %3690 = vmatpush1.msra.mxu0 0.0
    %3691 = vmatprep.subr.mxu0 0.0
    %3692 = vmatpush1.msra.mxu0 0.0
    %3693 = vmatprep.subr.mxu0 0.0
    %3694 = vmatpush1.msra.mxu0 0.0
    %3695 = vmatprep.mubr.f32.mxu0 0.0
    %3696 = vmatmul.mubr.f32.gmra.mrb[0].mxu0 %v3629
    %v3697 = vpop.f32.mrb[0].mxu0
    %v3698 = vadd.f32 %v314, %v3697
    %v3699 = vpop.f32.mrb[0].mxu0
    %v3700 = vadd.f32 %v318, %v3699
    %3701 = vdwg.mxu0
    %3702 = vmatprep.subr.mxu0 0.0
    %3703 = vmatpush1.msra.mxu0 %v264
    %3704 = vmatprep.subr.mxu0 0.0
    %3705 = vmatpush1.msra.mxu0 %v267
    %3706 = vmatprep.subr.mxu0 0.0
    %3707 = vmatpush1.msra.mxu0 %v270
    %3708 = vmatprep.subr.mxu0 0.0
    %3709 = vmatpush1.msra.mxu0 %v273
    %3710 = vmatprep.subr.mxu0 0.0
    %3711 = vmatpush1.msra.mxu0 %v276
    %3712 = vmatprep.subr.mxu0 0.0
    %3713 = vmatpush1.msra.mxu0 %v279
    %3714 = vmatprep.subr.mxu0 0.0
    %3715 = vmatpush1.msra.mxu0 %v282
    %3716 = vmatprep.subr.mxu0 0.0
    %3717 = vmatpush1.msra.mxu0 %v285
    %3718 = vmatprep.subr.mxu0 0.0
    %3719 = vmatpush1.msra.mxu0 %v288
    %3720 = vmatprep.subr.mxu0 0.0
    %3721 = vmatpush1.msra.mxu0 %v291
    %3722 = vmatprep.subr.mxu0 0.0
    %3723 = vmatpush1.msra.mxu0 %v294
    %3724 = vmatprep.subr.mxu0 0.0
    %3725 = vmatpush1.msra.mxu0 %v297
    %3726 = vmatprep.subr.mxu0 0.0
    %3727 = vmatpush1.msra.mxu0 %v300
    %3728 = vmatprep.subr.mxu0 0.0
    %3729 = vmatpush1.msra.mxu0 %v303
    %3730 = vmatprep.subr.mxu0 0.0
    %3731 = vmatpush1.msra.mxu0 %v306
    %3732 = vmatprep.subr.mxu0 0.0
    %3733 = vmatpush1.msra.mxu0 %v309
    %3734 = vmatprep.subr.mxu0 0.0
    %3735 = vmatpush1.msra.mxu0 0.0
    %3736 = vmatprep.subr.mxu0 0.0
    %3737 = vmatpush1.msra.mxu0 0.0
    %3738 = vmatprep.subr.mxu0 0.0
    %3739 = vmatpush1.msra.mxu0 0.0
    %3740 = vmatprep.subr.mxu0 0.0
    %3741 = vmatpush1.msra.mxu0 0.0
    %3742 = vmatprep.subr.mxu0 0.0
    %3743 = vmatpush1.msra.mxu0 0.0
    %3744 = vmatprep.subr.mxu0 0.0
    %3745 = vmatpush1.msra.mxu0 0.0
    %3746 = vmatprep.subr.mxu0 0.0
    %3747 = vmatpush1.msra.mxu0 0.0
    %3748 = vmatprep.subr.mxu0 0.0
    %3749 = vmatpush1.msra.mxu0 0.0
    %3750 = vmatprep.subr.mxu0 0.0
    %3751 = vmatpush1.msra.mxu0 0.0
    %3752 = vmatprep.subr.mxu0 0.0
    %3753 = vmatpush1.msra.mxu0 0.0
    %3754 = vmatprep.subr.mxu0 0.0
    %3755 = vmatpush1.msra.mxu0 0.0
    %3756 = vmatprep.subr.mxu0 0.0
    %3757 = vmatpush1.msra.mxu0 0.0
    %3758 = vmatprep.subr.mxu0 0.0
    %3759 = vmatpush1.msra.mxu0 0.0
    %3760 = vmatprep.subr.mxu0 0.0
    %3761 = vmatpush1.msra.mxu0 0.0
    %3762 = vmatprep.subr.mxu0 0.0
    %3763 = vmatpush1.msra.mxu0 0.0
    %3764 = vmatprep.subr.mxu0 0.0
    %3765 = vmatpush1.msra.mxu0 0.0
    %3766 = vmatprep.mubr.f32.mxu0 0.0
    %3767 = vmatmul.mubr.f32.gmra.mrb[0].mxu0 %v3629
    %v3768 = vpop.f32.mrb[0].mxu0
    %v3769 = vadd.f32 %v322, %v3768
    %v3770 = vpop.f32.mrb[0].mxu0
    %3771 = vdwg.mxu0
    %3772 = vmatprep.subr.mxu0 %v852
    %3773 = vmatpush1.msra.mxu0 %v851
    %3774 = vmatprep.subr.mxu0 %v855
    %3775 = vmatpush1.msra.mxu0 %v854
    %3776 = vmatprep.subr.mxu0 %v858
    %3777 = vmatpush1.msra.mxu0 %v857
    %3778 = vmatprep.subr.mxu0 %v861
    %3779 = vmatpush1.msra.mxu0 %v860
    %3780 = vmatprep.subr.mxu0 %v864
    %3781 = vmatpush1.msra.mxu0 %v863
    %3782 = vmatprep.subr.mxu0 %v867
    %3783 = vmatpush1.msra.mxu0 %v866
    %3784 = vmatprep.subr.mxu0 %v870
    %3785 = vmatpush1.msra.mxu0 %v869
    %3786 = vmatprep.subr.mxu0 %v873
    %3787 = vmatpush1.msra.mxu0 %v872
    %3788 = vmatprep.subr.mxu0 %v876
    %3789 = vmatpush1.msra.mxu0 %v875
    %3790 = vmatprep.subr.mxu0 %v879
    %3791 = vmatpush1.msra.mxu0 %v878
    %3792 = vmatprep.subr.mxu0 %v882
    %3793 = vmatpush1.msra.mxu0 %v881
    %3794 = vmatprep.subr.mxu0 %v885
    %3795 = vmatpush1.msra.mxu0 %v884
    %3796 = vmatprep.subr.mxu0 %v888
    %3797 = vmatpush1.msra.mxu0 %v887
    %3798 = vmatprep.subr.mxu0 %v891
    %3799 = vmatpush1.msra.mxu0 %v890
    %3800 = vmatprep.subr.mxu0 %v894
    %3801 = vmatpush1.msra.mxu0 %v893
    %3802 = vmatprep.subr.mxu0 %v897
    %3803 = vmatpush1.msra.mxu0 %v896
    %3804 = vmatprep.subr.mxu0 0.0
    %3805 = vmatpush1.msra.mxu0 0.0
    %3806 = vmatprep.subr.mxu0 0.0
    %3807 = vmatpush1.msra.mxu0 0.0
    %3808 = vmatprep.subr.mxu0 0.0
    %3809 = vmatpush1.msra.mxu0 0.0
    %3810 = vmatprep.subr.mxu0 0.0
    %3811 = vmatpush1.msra.mxu0 0.0
    %3812 = vmatprep.subr.mxu0 0.0
    %3813 = vmatpush1.msra.mxu0 0.0
    %3814 = vmatprep.subr.mxu0 0.0
    %3815 = vmatpush1.msra.mxu0 0.0
    %3816 = vmatprep.subr.mxu0 0.0
    %3817 = vmatpush1.msra.mxu0 0.0
    %3818 = vmatprep.subr.mxu0 0.0
    %3819 = vmatpush1.msra.mxu0 0.0
    %3820 = vmatprep.subr.mxu0 0.0
    %3821 = vmatpush1.msra.mxu0 0.0
    %3822 = vmatprep.subr.mxu0 0.0
    %3823 = vmatpush1.msra.mxu0 0.0
    %3824 = vmatprep.subr.mxu0 0.0
    %3825 = vmatpush1.msra.mxu0 0.0
    %3826 = vmatprep.subr.mxu0 0.0
    %3827 = vmatpush1.msra.mxu0 0.0
    %3828 = vmatprep.subr.mxu0 0.0
    %3829 = vmatpush1.msra.mxu0 0.0
    %3830 = vmatprep.subr.mxu0 0.0
    %3831 = vmatpush1.msra.mxu0 0.0
    %3832 = vmatprep.subr.mxu0 0.0
    %3833 = vmatpush1.msra.mxu0 0.0
    %3834 = vmatprep.subr.mxu0 0.0
    %3835 = vmatpush1.msra.mxu0 0.0
    %3836 = vmatprep.mubr.f32.mxu0 0.0
    %3837 = vmatmul.mubr.f32.gmra.mrb[0].mxu0 %v3453
    %v3838 = vpop.f32.mrb[0].mxu0
    %v3839 = vadd.f32 0.0, %v3838
    %v3840 = vpop.f32.mrb[0].mxu0
    %v3841 = vadd.f32 0.0, %v3840
    %3842 = vdwg.mxu0
    %3843 = vmatprep.subr.mxu0 0.0
    %3844 = vmatpush1.msra.mxu0 %v853
    %3845 = vmatprep.subr.mxu0 0.0
    %3846 = vmatpush1.msra.mxu0 %v856
    %3847 = vmatprep.subr.mxu0 0.0
    %3848 = vmatpush1.msra.mxu0 %v859
    %3849 = vmatprep.subr.mxu0 0.0
    %3850 = vmatpush1.msra.mxu0 %v862
    %3851 = vmatprep.subr.mxu0 0.0
    %3852 = vmatpush1.msra.mxu0 %v865
    %3853 = vmatprep.subr.mxu0 0.0
    %3854 = vmatpush1.msra.mxu0 %v868
    %3855 = vmatprep.subr.mxu0 0.0
    %3856 = vmatpush1.msra.mxu0 %v871
    %3857 = vmatprep.subr.mxu0 0.0
    %3858 = vmatpush1.msra.mxu0 %v874
    %3859 = vmatprep.subr.mxu0 0.0
    %3860 = vmatpush1.msra.mxu0 %v877
    %3861 = vmatprep.subr.mxu0 0.0
    %3862 = vmatpush1.msra.mxu0 %v880
    %3863 = vmatprep.subr.mxu0 0.0
    %3864 = vmatpush1.msra.mxu0 %v883
    %3865 = vmatprep.subr.mxu0 0.0
    %3866 = vmatpush1.msra.mxu0 %v886
    %3867 = vmatprep.subr.mxu0 0.0
    %3868 = vmatpush1.msra.mxu0 %v889
    %3869 = vmatprep.subr.mxu0 0.0
    %3870 = vmatpush1.msra.mxu0 %v892
    %3871 = vmatprep.subr.mxu0 0.0
    %3872 = vmatpush1.msra.mxu0 %v895
    %3873 = vmatprep.subr.mxu0 0.0
    %3874 = vmatpush1.msra.mxu0 %v898
    %3875 = vmatprep.subr.mxu0 0.0
    %3876 = vmatpush1.msra.mxu0 0.0
    %3877 = vmatprep.subr.mxu0 0.0
    %3878 = vmatpush1.msra.mxu0 0.0
    %3879 = vmatprep.subr.mxu0 0.0
    %3880 = vmatpush1.msra.mxu0 0.0
    %3881 = vmatprep.subr.mxu0 0.0
    %3882 = vmatpush1.msra.mxu0 0.0
    %3883 = vmatprep.subr.mxu0 0.0
    %3884 = vmatpush1.msra.mxu0 0.0
    %3885 = vmatprep.subr.mxu0 0.0
    %3886 = vmatpush1.msra.mxu0 0.0
    %3887 = vmatprep.subr.mxu0 0.0
    %3888 = vmatpush1.msra.mxu0 0.0
    %3889 = vmatprep.subr.mxu0 0.0
    %3890 = vmatpush1.msra.mxu0 0.0
    %3891 = vmatprep.subr.mxu0 0.0
    %3892 = vmatpush1.msra.mxu0 0.0
    %3893 = vmatprep.subr.mxu0 0.0
    %3894 = vmatpush1.msra.mxu0 0.0
    %3895 = vmatprep.subr.mxu0 0.0
    %3896 = vmatpush1.msra.mxu0 0.0
    %3897 = vmatprep.subr.mxu0 0.0
    %3898 = vmatpush1.msra.mxu0 0.0
    %3899 = vmatprep.subr.mxu0 0.0
    %3900 = vmatpush1.msra.mxu0 0.0
    %3901 = vmatprep.subr.mxu0 0.0
    %3902 = vmatpush1.msra.mxu0 0.0
    %3903 = vmatprep.subr.mxu0 0.0
    %3904 = vmatpush1.msra.mxu0 0.0
    %3905 = vmatprep.subr.mxu0 0.0
    %3906 = vmatpush1.msra.mxu0 0.0
    %3907 = vmatprep.mubr.f32.mxu0 0.0
    %3908 = vmatmul.mubr.f32.gmra.mrb[0].mxu0 %v3453
    %v3909 = vpop.f32.mrb[0].mxu0
    %v3910 = vadd.f32 0.0, %v3909
    %v3911 = vpop.f32.mrb[0].mxu0
    %3912 = vdwg.mxu0
    %v3913 = vadd.f32 %v3698, %v3839
    %v3914 = vadd.f32 %v3700, %v3841
    %v3915 = vxor.u32 %v3913, 2147483648
    %v3916 = vxor.u32 %v3914, 2147483648
    %v3917 = vmul.f32 %v3915, 1.442695
    %v3918 = vpow.pop %v3917
    %v3919 = vmul.f32 %v3916, 1.442695
    %v3920 = vpow.pop %v3919
    %v3921 = vadd.f32 %v3918, 1.0
    %v3922 = vadd.f32 %v3920, 1.0
    %v3923 = vrcp.pop %v3921
    %v3924 = vmul.f32 1.0, %v3923
    %v3925 = vrcp.pop %v3922
    %v3926 = vmul.f32 1.0, %v3925
    %v3927 = vadd.f32 %v3910, %v244
    %v3928 = vmul.f32 %v3924, %v3927
    %v3929 = vadd.f32 %v3769, %v3928
    %v3930 = vtanh.pop %v3929
    %v3931 = vsub.f32 1.0, %v3926
    %v3932 = vmul.f32 %v3931, %v3930
    %v3933 = vmul.f32 %v3926, %v3453
    %v3934 = vadd.f32 %v3932, %v3933
    %3935 = vst [vmem:[%s2 - $0x6] sm:$0xc0] %v3627
    %3936 = vst [vmem:[%s2 + $0x2] sm:$0x3] %v3934
    // Predicated region
    $region14: #{encoder_forward.1} parent=1 // pred_check
      _
    $region15: #{encoder_forward.1} parent=1 // pred_check_branch
      %3938 = sbr.rel (0) target = $region17
    $region16: #{encoder_forward.1} parent=1 // pred_region
      _
    $region17: #{encoder_forward.1} parent=1 // pred_fallthru
      _
    // Predicated region
    $region18: #{encoder_forward.1} parent=1 // pred_check
      _
    $region19: #{encoder_forward.1} parent=1 // pred_check_branch
      %3940 = sbr.rel (0) target = $region21
    $region20: #{encoder_forward.1} parent=1 // pred_region
      _
    $region21: #{encoder_forward.1} parent=1 // pred_fallthru
      _
    %3941 = vsyncpa [#allocation3], 1

</llo_original>
